<compile_context>
chip_gen: v7x
topology: tpu7x:2x2x1
jax: 0.10.0
libtpu: 0.0.40
codegen_flags: <defaults>
</compile_context>

<pallas_src>
import jax
import jax.numpy as jnp
from jax import lax
from jax.experimental import pallas as pl
from jax.experimental.pallas import tpu as pltpu

H, W = 8, 90          # spatial size implied by fc1 = Linear(8 * 90, 60)
WP = 128              # lane-padded width
KP = 3 * WP           # packed K for the per-layer conv matmul ([dn | h | up])
NCONV = 10
HIDDEN = 60
HIDDEN_P = 64         # lane-padded hidden size
BIAS_LANE = WP - 1    # lane 127 carries a constant 1.0 -> bias via the MXU


def net10_kernel(tmat_ref, x_ref, fc1w_ref, fc1b_ref, fc2w_ref, fc2b_ref,
                 out_ref):
    # tmat_ref : VMEM cdt[NCONV, 384, 128]  packed banded mats + bias row
    # x_ref    : VMEM f32[B_TILE*8, 128]    activations, pad cols 0, lane127=1
    # fc1w_ref : VMEM cdt[8, 128, 64]
    # fc1b_ref : VMEM f32[1, 64]
    # fc2w_ref : VMEM f32[1, 64]
    # fc2b_ref : VMEM f32[1, 1]
    # out_ref  : VMEM f32[B_TILE, 1]
    cdt = tmat_ref.dtype
    h = x_ref[...]
    bh = h.shape[0]
    b = bh // H

    # Sample-boundary masks for the +-1 vertical (sublane) shifts, hoisted out
    # of the 10-layer loop (H == 8 aligns with the sublane group).
    ridx = lax.broadcasted_iota(jnp.int32, (bh, 1), 0) % H
    not_top = ridx != 0          # row i has a valid row above it (h[i-1])
    not_bot = ridx != (H - 1)    # row i has a valid row below it (h[i+1])

    for k in range(NCONV):
        if k > 0:
            h = jnp.maximum(h, 0.0)            # ReLU keeps the bias lane at 1
        # +-1 vertical shifts: XLU roll + boundary mask (no concatenate pads).
        dn = jnp.where(not_top, pltpu.roll(h, shift=1, axis=0), 0.0)       # h[i-1]
        up = jnp.where(not_bot, pltpu.roll(h, shift=bh - 1, axis=0), 0.0)  # h[i+1]
        # One K=384 matmul per layer: horizontal taps are banded 128x128
        # blocks stacked along K, bias rides on the constant-1 lane.
        packed = jnp.concatenate([dn, h, up], axis=-1).astype(cdt)         # [bh,384]
        h = jnp.dot(packed, tmat_ref[k], preferred_element_type=jnp.float32)

    # fc1 (720 -> 60, padded to 8x128 -> 64): 8 row-position matmuls on the MXU.
    h3 = h.reshape(b, H, WP)                    # sublane-group split
    z = jnp.zeros((b, HIDDEN_P), jnp.float32)
    for i in range(H):
        z = z + jnp.dot(h3[:, i, :].astype(fc1w_ref.dtype), fc1w_ref[i],
                        preferred_element_type=jnp.float32)
    z = jnp.maximum(z + fc1b_ref[...], 0.0)     # pad hidden cols stay exactly 0

    # fc2 (60 -> 1) as a VPU lane reduction instead of an N=1 matmul.
    y = jnp.sum(z * fc2w_ref[...], axis=-1, keepdims=True) + fc2b_ref[...]
    out_ref[...] = y.astype(out_ref.dtype)


def _round_up(n, m):
    return -(-n // m) * m


def _auto_b_tile(batch):
    bp8 = _round_up(max(batch, 1), 8)
    if bp8 <= 8:
        return 8
    # Target big MXU-filling tiles (cap 128 -> M = 1024 rows) while keeping at
    # least 2 grid steps so v7x's second TensorCore gets work.
    return int(min(128, _round_up(bp8 // 2, 8)))


def net10_forward(x_nchw, params, *, b_tile=None, compute_dtype=jnp.bfloat16):
    convw, convb, fc1w, fc1b, fc2w, fc2b = params
    B = x_nchw.shape[0]
    if b_tile is None:
        b_tile = _auto_b_tile(B)
    assert b_tile % 8 == 0, "b_tile must be a multiple of 8 (sublane tile)"
    bp = pl.cdiv(B, b_tile) * b_tile

    # ---- activations: [B,1,8,90] -> zero-padded lane-dense [Bp*8, 128];
    #      lane 127 pinned to 1.0 (bias lane) ----
    x = x_nchw.reshape(B, H, W).astype(jnp.float32)
    x = jnp.pad(x, ((0, bp - B), (0, 0), (0, WP - W)))
    x = x.at[:, :, BIAS_LANE].set(1.0)
    x2 = x.reshape(bp * H, WP)

    # ---- per-layer packed banded matrices tmat[k] (384 x 128):
    #      rows [0:128)=h[i-1] taps, [128:256)=h[i] taps, [256:384)=h[i+1] taps.
    #      Pad output columns (>=90) zeroed; row 255 = bias row + keep-lane 1 ----
    w3 = convw.reshape(NCONV, 3, 3)
    m = jnp.arange(WP)[:, None]
    j = jnp.arange(WP)[None, :]
    valid = j < W
    basis = jnp.stack([
        ((m == j - 1) & valid),   # dj = 0 -> in[j-1]
        ((m == j) & valid),       # dj = 1 -> in[j]
        ((m == j + 1) & valid),   # dj = 2 -> in[j+1]
    ], axis=0).astype(jnp.float32)                      # [3(dj), 128, 128]
    tmat = jnp.einsum('kde,emj->kdmj', w3, basis)       # [NCONV, 3(di), 128, 128]
    tmat = tmat.reshape(NCONV, KP, WP)
    col = jnp.arange(WP)
    bias_row = (convb[:, None] * (col < W)[None, :].astype(jnp.float32)
                + (col == BIAS_LANE)[None, :].astype(jnp.float32))  # [NCONV,128]
    tmat = tmat.at[:, WP + BIAS_LANE, :].set(bias_row)  # center-block row 127
    tmat = tmat.astype(compute_dtype)                   # bf16 in HBM

    # ---- fc weights, padded to lane-friendly sizes ----
    fc1w_p = jnp.zeros((H, WP, HIDDEN_P), jnp.float32)
    fc1w_p = fc1w_p.at[:, :W, :HIDDEN].set(fc1w.reshape(H, W, HIDDEN))
    fc1w_p = fc1w_p.astype(compute_dtype)               # bias lane row stays 0
    fc1b_p = jnp.zeros((1, HIDDEN_P), jnp.float32).at[0, :HIDDEN].set(fc1b)
    fc2w_p = jnp.zeros((1, HIDDEN_P), jnp.float32).at[0, :HIDDEN].set(fc2w[:, 0])
    fc2b_p = fc2b.reshape(1, 1)

    out = pl.pallas_call(
        net10_kernel,
        out_shape=jax.ShapeDtypeStruct((bp, 1), jnp.float32),
        grid=(bp // b_tile,),
        in_specs=[
            pl.BlockSpec((NCONV, KP, WP), lambda i: (0, 0, 0)),       # packed mats
            pl.BlockSpec((b_tile * H, WP), lambda i: (i, 0)),         # activations
            pl.BlockSpec((H, WP, HIDDEN_P), lambda i: (0, 0, 0)),     # fc1 W
            pl.BlockSpec((1, HIDDEN_P), lambda i: (0, 0)),            # fc1 b
            pl.BlockSpec((1, HIDDEN_P), lambda i: (0, 0)),            # fc2 W (row)
            pl.BlockSpec((1, 1), lambda i: (0, 0)),                   # fc2 b
        ],
        out_specs=pl.BlockSpec((b_tile, 1), lambda i: (i, 0)),
        compiler_params=pltpu.CompilerParams(
            dimension_semantics=("parallel",),
            vmem_limit_bytes=32 * 1024 * 1024),
    )(tmat, x2, fc1w_p, fc1b_p, fc2w_p, fc2b_p)
    return out[:B]


def ref_forward(x_nchw, params, *, emulate_bf16_operands=False):
    """Pure-JAX reference matching the PyTorch forward semantics.

    With emulate_bf16_operands=True, conv/matmul operands (and the conv bias,
    which the kernel folds through the bf16 banded matrix) are rounded to bf16
    while all accumulation stays f32 -- mirroring the kernel's bf16 MXU path.
    """
    convw, convb, fc1w, fc1b, fc2w, fc2b = params
    hi = lax.Precision.HIGHEST
    if emulate_bf16_operands:
        rnd = lambda a: a.astype(jnp.bfloat16).astype(jnp.float32)
    else:
        rnd = lambda a: a
    cb = rnd(convb)
    h = x_nchw.astype(jnp.float32)
    for k in range(NCONV):
        if k > 0:
            h = jnp.maximum(h, 0.0)
        wk = rnd(convw[k * 9:(k + 1) * 9]).reshape(1, 1, 3, 3)
        h = lax.conv_general_dilated(
            rnd(h), wk, window_strides=(1, 1), padding=((1, 1), (1, 1)),
            dimension_numbers=('NCHW', 'OIHW', 'NCHW'), precision=hi) + cb[k]
    z = h.reshape(h.shape[0], -1)                      # [B, 720]
    z = jnp.maximum(jnp.dot(rnd(z), rnd(fc1w), precision=hi) + fc1b, 0.0)
    return jnp.dot(z, fc2w, precision=hi) + fc2b


def init_params(key):
    ks = jax.random.split(key, 6)
    cw_bound = 1.0 / 3.0            # fan_in = 1*3*3 = 9
    fc1_bound = 1.0 / (720.0 ** 0.5)
    fc2_bound = 1.0 / (60.0 ** 0.5)
    convw = jax.random.uniform(ks[0], (NCONV * 9,), jnp.float32,
                               -cw_bound, cw_bound)
    convb = jax.random.uniform(ks[1], (NCONV,), jnp.float32,
                               -cw_bound, cw_bound)
    fc1w = jax.random.uniform(ks[2], (H * W, HIDDEN), jnp.float32,
                              -fc1_bound, fc1_bound)
    fc1b = jax.random.uniform(ks[3], (HIDDEN,), jnp.float32,
                              -fc1_bound, fc1_bound)
    fc2w = jax.random.uniform(ks[4], (HIDDEN, 1), jnp.float32,
                              -fc2_bound, fc2_bound)
    fc2b = jax.random.uniform(ks[5], (1,), jnp.float32,
                              -fc2_bound, fc2_bound)
    return convw, convb, fc1w, fc1b, fc2w, fc2b


if __name__ == "__main__":
    key = jax.random.PRNGKey(0)
    pkey, xkey = jax.random.split(key)
    params = init_params(pkey)

    # (B=16, b_tile=8): small tiles, 2 grid steps.  (B=5): batch padding.
    # (B=300, auto): production-sized tile (b_tile=128 -> M=1024 conv matmuls),
    # multiple grid steps plus tail padding.
    cases = [(16, 8), (5, None), (300, None)]
    for B, bt in cases:
        x = jax.random.normal(jax.random.fold_in(xkey, B),
                              (B, 1, H, W), jnp.float32)   # NCHW input
        out = jax.block_until_ready(net10_forward(x, params, b_tile=bt))
        ref = jax.block_until_ready(
            ref_forward(x, params, emulate_bf16_operands=True))
        assert out.shape == (B, 1)
        assert jnp.allclose(out, ref, atol=5e-3, rtol=5e-3), (
            B, float(jnp.max(jnp.abs(out - ref))))

    print("KERNEL_OK")
</pallas_src>

<mosaic_0001>
module attributes {stable_mosaic.version = 11 : i64} {
  func.func @net10_kernel(%arg0: i32, %arg1: memref<10x384x128xbf16, #tpu.memory_space<vmem>>, %arg2: memref<64x128xf32, #tpu.memory_space<vmem>>, %arg3: memref<8x128x64xbf16, #tpu.memory_space<vmem>>, %arg4: memref<1x64xf32, #tpu.memory_space<vmem>>, %arg5: memref<1x64xf32, #tpu.memory_space<vmem>>, %arg6: memref<1x1xf32, #tpu.memory_space<vmem>>, %arg7: memref<8x1xf32, #tpu.memory_space<vmem>>) attributes {dimension_semantics = [#tpu.dimension_semantics<parallel>], iteration_bounds = array<i64: 2>, scalar_prefetch = 0 : i64, scratch_operands = 0 : i64, tpu.core_type = #tpu.core_type<tc>, window_params = [{pipeline_mode = #tpu.pipeline_mode<synchronous>, transform_indices = @transform_0, window_bounds = array<i64: 10, 384, 128>}, {transform_indices = @transform_1, window_bounds = array<i64: 64, 128>}, {pipeline_mode = #tpu.pipeline_mode<synchronous>, transform_indices = @transform_2, window_bounds = array<i64: 8, 128, 64>}, {pipeline_mode = #tpu.pipeline_mode<synchronous>, transform_indices = @transform_3, window_bounds = array<i64: 1, 64>}, {pipeline_mode = #tpu.pipeline_mode<synchronous>, transform_indices = @transform_4, window_bounds = array<i64: 1, 64>}, {pipeline_mode = #tpu.pipeline_mode<synchronous>, transform_indices = @transform_5, window_bounds = array<i64: 1, 1>}, {transform_indices = @transform_6, window_bounds = array<i64: 8, 1>}]} {
    %c0 = arith.constant 0 : index
    %c0_0 = arith.constant 0 : index
    %0 = vector.load %arg2[%c0, %c0_0] : memref<64x128xf32, #tpu.memory_space<vmem>>, vector<64x128xf32>
    %1 = tpu.iota {dimensions = array<i32: 0>} : vector<64x1xi32>
    %c8_i32 = arith.constant 8 : i32
    %c0_i32 = arith.constant 0 : i32
    %2 = arith.cmpi eq, %c8_i32, %c0_i32 : i32
    %c1_i32 = arith.constant 1 : i32
    %3 = arith.select %2, %c1_i32, %c8_i32 : i32
    %4 = vector.broadcast %3 : i32 to vector<64x1xi32>
    %5 = arith.remsi %1, %4 : vector<64x1xi32>
    %c0_i32_1 = arith.constant 0 : i32
    %6 = vector.broadcast %c0_i32_1 : i32 to vector<64x1xi32>
    %7 = arith.cmpi ne, %5, %6 : vector<64x1xi32>
    %c0_i32_2 = arith.constant 0 : i32
    %8 = vector.broadcast %c0_i32_2 : i32 to vector<64x1xi32>
    %9 = arith.cmpi slt, %5, %8 : vector<64x1xi32>
    %c0_i32_3 = arith.constant 0 : i32
    %10 = arith.cmpi slt, %3, %c0_i32_3 : i32
    %11 = vector.broadcast %10 : i1 to vector<64x1xi1>
    %12 = vector.broadcast %11 : vector<64x1xi1> to vector<64x1xi1>
    %13 = arith.xori %9, %12 : vector<64x1xi1>
    %14 = arith.andi %13, %7 : vector<64x1xi1>
    %15 = vector.broadcast %3 : i32 to vector<64x1xi32>
    %16 = arith.addi %5, %15 : vector<64x1xi32>
    %17 = arith.select %14, %16, %5 : vector<64x1xi1>, vector<64x1xi32>
    %c0_i32_4 = arith.constant 0 : i32
    %18 = vector.broadcast %c0_i32_4 : i32 to vector<64x1xi32>
    %19 = arith.cmpi ne, %17, %18 : vector<64x1xi32>
    %c7_i32 = arith.constant 7 : i32
    %20 = vector.broadcast %c7_i32 : i32 to vector<64x1xi32>
    %21 = arith.cmpi ne, %17, %20 : vector<64x1xi32>
    %c1_i32_5 = arith.constant 1 : i32
    %22 = tpu.dynamic_rotate %0 by %c1_i32_5 dim 0 : vector<64x128xf32>, i32 -> vector<64x128xf32>
    %cst = arith.constant 0.000000e+00 : f32
    %23 = vector.shape_cast %19 : vector<64x1xi1> to vector<64x1xi1>
    %24 = vector.broadcast %23 : vector<64x1xi1> to vector<64x128xi1>
    %25 = vector.broadcast %cst : f32 to vector<64x128xf32>
    %26 = arith.select %24, %22, %25 : vector<64x128xi1>, vector<64x128xf32>
    %c63_i32 = arith.constant 63 : i32
    %27 = tpu.dynamic_rotate %0 by %c63_i32 dim 0 : vector<64x128xf32>, i32 -> vector<64x128xf32>
    %cst_6 = arith.constant 0.000000e+00 : f32
    %28 = vector.shape_cast %21 : vector<64x1xi1> to vector<64x1xi1>
    %29 = vector.broadcast %28 : vector<64x1xi1> to vector<64x128xi1>
    %30 = vector.broadcast %cst_6 : f32 to vector<64x128xf32>
    %31 = arith.select %29, %27, %30 : vector<64x128xi1>, vector<64x128xf32>
    %32 = tpu.concatenate %26, %0, %31 in 1 : vector<64x128xf32>, vector<64x128xf32>, vector<64x128xf32> -> vector<64x384xf32>
    %33 = arith.truncf %32 : vector<64x384xf32> to vector<64x384xbf16>
    %c0_7 = arith.constant 0 : index
    %c0_8 = arith.constant 0 : index
    %c0_9 = arith.constant 0 : index
    %34 = vector.load %arg1[%c0_7, %c0_8, %c0_9] : memref<10x384x128xbf16, #tpu.memory_space<vmem>>, vector<1x384x128xbf16>
    %35 = vector.shape_cast %34 : vector<1x384x128xbf16> to vector<384x128xbf16>
    %cst_10 = arith.constant dense<0.000000e+00> : vector<64x128xf32>
    %36 = tpu.matmul %33, %35, %cst_10 {dimension_numbers = #tpu.dot_dimension_numbers<[1], [0], [0], [1], [0, 0, 1, 1], [], []>} : vector<64x384xbf16>, vector<384x128xbf16>, vector<64x128xf32> -> vector<64x128xf32>
    %cst_11 = arith.constant 0.000000e+00 : f32
    %37 = vector.broadcast %cst_11 : f32 to vector<64x128xf32>
    %38 = arith.maximumf %36, %37 : vector<64x128xf32>
    %c1_i32_12 = arith.constant 1 : i32
    %39 = tpu.dynamic_rotate %38 by %c1_i32_12 dim 0 : vector<64x128xf32>, i32 -> vector<64x128xf32>
    %cst_13 = arith.constant 0.000000e+00 : f32
    %40 = vector.shape_cast %19 : vector<64x1xi1> to vector<64x1xi1>
    %41 = vector.broadcast %40 : vector<64x1xi1> to vector<64x128xi1>
    %42 = vector.broadcast %cst_13 : f32 to vector<64x128xf32>
    %43 = arith.select %41, %39, %42 : vector<64x128xi1>, vector<64x128xf32>
    %c63_i32_14 = arith.constant 63 : i32
    %44 = tpu.dynamic_rotate %38 by %c63_i32_14 dim 0 : vector<64x128xf32>, i32 -> vector<64x128xf32>
    %cst_15 = arith.constant 0.000000e+00 : f32
    %45 = vector.shape_cast %21 : vector<64x1xi1> to vector<64x1xi1>
    %46 = vector.broadcast %45 : vector<64x1xi1> to vector<64x128xi1>
    %47 = vector.broadcast %cst_15 : f32 to vector<64x128xf32>
    %48 = arith.select %46, %44, %47 : vector<64x128xi1>, vector<64x128xf32>
    %49 = tpu.concatenate %43, %38, %48 in 1 : vector<64x128xf32>, vector<64x128xf32>, vector<64x128xf32> -> vector<64x384xf32>
    %50 = arith.truncf %49 : vector<64x384xf32> to vector<64x384xbf16>
    %c1 = arith.constant 1 : index
    %c0_16 = arith.constant 0 : index
    %c0_17 = arith.constant 0 : index
    %51 = vector.load %arg1[%c1, %c0_16, %c0_17] : memref<10x384x128xbf16, #tpu.memory_space<vmem>>, vector<1x384x128xbf16>
    %52 = vector.shape_cast %51 : vector<1x384x128xbf16> to vector<384x128xbf16>
    %cst_18 = arith.constant dense<0.000000e+00> : vector<64x128xf32>
    %53 = tpu.matmul %50, %52, %cst_18 {dimension_numbers = #tpu.dot_dimension_numbers<[1], [0], [0], [1], [0, 0, 1, 1], [], []>} : vector<64x384xbf16>, vector<384x128xbf16>, vector<64x128xf32> -> vector<64x128xf32>
    %cst_19 = arith.constant 0.000000e+00 : f32
    %54 = vector.broadcast %cst_19 : f32 to vector<64x128xf32>
    %55 = arith.maximumf %53, %54 : vector<64x128xf32>
    %c1_i32_20 = arith.constant 1 : i32
    %56 = tpu.dynamic_rotate %55 by %c1_i32_20 dim 0 : vector<64x128xf32>, i32 -> vector<64x128xf32>
    %cst_21 = arith.constant 0.000000e+00 : f32
    %57 = vector.shape_cast %19 : vector<64x1xi1> to vector<64x1xi1>
    %58 = vector.broadcast %57 : vector<64x1xi1> to vector<64x128xi1>
    %59 = vector.broadcast %cst_21 : f32 to vector<64x128xf32>
    %60 = arith.select %58, %56, %59 : vector<64x128xi1>, vector<64x128xf32>
    %c63_i32_22 = arith.constant 63 : i32
    %61 = tpu.dynamic_rotate %55 by %c63_i32_22 dim 0 : vector<64x128xf32>, i32 -> vector<64x128xf32>
    %cst_23 = arith.constant 0.000000e+00 : f32
    %62 = vector.shape_cast %21 : vector<64x1xi1> to vector<64x1xi1>
    %63 = vector.broadcast %62 : vector<64x1xi1> to vector<64x128xi1>
    %64 = vector.broadcast %cst_23 : f32 to vector<64x128xf32>
    %65 = arith.select %63, %61, %64 : vector<64x128xi1>, vector<64x128xf32>
    %66 = tpu.concatenate %60, %55, %65 in 1 : vector<64x128xf32>, vector<64x128xf32>, vector<64x128xf32> -> vector<64x384xf32>
    %67 = arith.truncf %66 : vector<64x384xf32> to vector<64x384xbf16>
    %c2 = arith.constant 2 : index
    %c0_24 = arith.constant 0 : index
    %c0_25 = arith.constant 0 : index
    %68 = vector.load %arg1[%c2, %c0_24, %c0_25] : memref<10x384x128xbf16, #tpu.memory_space<vmem>>, vector<1x384x128xbf16>
    %69 = vector.shape_cast %68 : vector<1x384x128xbf16> to vector<384x128xbf16>
    %cst_26 = arith.constant dense<0.000000e+00> : vector<64x128xf32>
    %70 = tpu.matmul %67, %69, %cst_26 {dimension_numbers = #tpu.dot_dimension_numbers<[1], [0], [0], [1], [0, 0, 1, 1], [], []>} : vector<64x384xbf16>, vector<384x128xbf16>, vector<64x128xf32> -> vector<64x128xf32>
    %cst_27 = arith.constant 0.000000e+00 : f32
    %71 = vector.broadcast %cst_27 : f32 to vector<64x128xf32>
    %72 = arith.maximumf %70, %71 : vector<64x128xf32>
    %c1_i32_28 = arith.constant 1 : i32
    %73 = tpu.dynamic_rotate %72 by %c1_i32_28 dim 0 : vector<64x128xf32>, i32 -> vector<64x128xf32>
    %cst_29 = arith.constant 0.000000e+00 : f32
    %74 = vector.shape_cast %19 : vector<64x1xi1> to vector<64x1xi1>
    %75 = vector.broadcast %74 : vector<64x1xi1> to vector<64x128xi1>
    %76 = vector.broadcast %cst_29 : f32 to vector<64x128xf32>
    %77 = arith.select %75, %73, %76 : vector<64x128xi1>, vector<64x128xf32>
    %c63_i32_30 = arith.constant 63 : i32
    %78 = tpu.dynamic_rotate %72 by %c63_i32_30 dim 0 : vector<64x128xf32>, i32 -> vector<64x128xf32>
    %cst_31 = arith.constant 0.000000e+00 : f32
    %79 = vector.shape_cast %21 : vector<64x1xi1> to vector<64x1xi1>
    %80 = vector.broadcast %79 : vector<64x1xi1> to vector<64x128xi1>
    %81 = vector.broadcast %cst_31 : f32 to vector<64x128xf32>
    %82 = arith.select %80, %78, %81 : vector<64x128xi1>, vector<64x128xf32>
    %83 = tpu.concatenate %77, %72, %82 in 1 : vector<64x128xf32>, vector<64x128xf32>, vector<64x128xf32> -> vector<64x384xf32>
    %84 = arith.truncf %83 : vector<64x384xf32> to vector<64x384xbf16>
    %c3 = arith.constant 3 : index
    %c0_32 = arith.constant 0 : index
    %c0_33 = arith.constant 0 : index
    %85 = vector.load %arg1[%c3, %c0_32, %c0_33] : memref<10x384x128xbf16, #tpu.memory_space<vmem>>, vector<1x384x128xbf16>
    %86 = vector.shape_cast %85 : vector<1x384x128xbf16> to vector<384x128xbf16>
    %cst_34 = arith.constant dense<0.000000e+00> : vector<64x128xf32>
    %87 = tpu.matmul %84, %86, %cst_34 {dimension_numbers = #tpu.dot_dimension_numbers<[1], [0], [0], [1], [0, 0, 1, 1], [], []>} : vector<64x384xbf16>, vector<384x128xbf16>, vector<64x128xf32> -> vector<64x128xf32>
    %cst_35 = arith.constant 0.000000e+00 : f32
    %88 = vector.broadcast %cst_35 : f32 to vector<64x128xf32>
    %89 = arith.maximumf %87, %88 : vector<64x128xf32>
    %c1_i32_36 = arith.constant 1 : i32
    %90 = tpu.dynamic_rotate %89 by %c1_i32_36 dim 0 : vector<64x128xf32>, i32 -> vector<64x128xf32>
    %cst_37 = arith.constant 0.000000e+00 : f32
    %91 = vector.shape_cast %19 : vector<64x1xi1> to vector<64x1xi1>
    %92 = vector.broadcast %91 : vector<64x1xi1> to vector<64x128xi1>
    %93 = vector.broadcast %cst_37 : f32 to vector<64x128xf32>
    %94 = arith.select %92, %90, %93 : vector<64x128xi1>, vector<64x128xf32>
    %c63_i32_38 = arith.constant 63 : i32
    %95 = tpu.dynamic_rotate %89 by %c63_i32_38 dim 0 : vector<64x128xf32>, i32 -> vector<64x128xf32>
    %cst_39 = arith.constant 0.000000e+00 : f32
    %96 = vector.shape_cast %21 : vector<64x1xi1> to vector<64x1xi1>
    %97 = vector.broadcast %96 : vector<64x1xi1> to vector<64x128xi1>
    %98 = vector.broadcast %cst_39 : f32 to vector<64x128xf32>
    %99 = arith.select %97, %95, %98 : vector<64x128xi1>, vector<64x128xf32>
    %100 = tpu.concatenate %94, %89, %99 in 1 : vector<64x128xf32>, vector<64x128xf32>, vector<64x128xf32> -> vector<64x384xf32>
    %101 = arith.truncf %100 : vector<64x384xf32> to vector<64x384xbf16>
    %c4 = arith.constant 4 : index
    %c0_40 = arith.constant 0 : index
    %c0_41 = arith.constant 0 : index
    %102 = vector.load %arg1[%c4, %c0_40, %c0_41] : memref<10x384x128xbf16, #tpu.memory_space<vmem>>, vector<1x384x128xbf16>
    %103 = vector.shape_cast %102 : vector<1x384x128xbf16> to vector<384x128xbf16>
    %cst_42 = arith.constant dense<0.000000e+00> : vector<64x128xf32>
    %104 = tpu.matmul %101, %103, %cst_42 {dimension_numbers = #tpu.dot_dimension_numbers<[1], [0], [0], [1], [0, 0, 1, 1], [], []>} : vector<64x384xbf16>, vector<384x128xbf16>, vector<64x128xf32> -> vector<64x128xf32>
    %cst_43 = arith.constant 0.000000e+00 : f32
    %105 = vector.broadcast %cst_43 : f32 to vector<64x128xf32>
    %106 = arith.maximumf %104, %105 : vector<64x128xf32>
    %c1_i32_44 = arith.constant 1 : i32
    %107 = tpu.dynamic_rotate %106 by %c1_i32_44 dim 0 : vector<64x128xf32>, i32 -> vector<64x128xf32>
    %cst_45 = arith.constant 0.000000e+00 : f32
    %108 = vector.shape_cast %19 : vector<64x1xi1> to vector<64x1xi1>
    %109 = vector.broadcast %108 : vector<64x1xi1> to vector<64x128xi1>
    %110 = vector.broadcast %cst_45 : f32 to vector<64x128xf32>
    %111 = arith.select %109, %107, %110 : vector<64x128xi1>, vector<64x128xf32>
    %c63_i32_46 = arith.constant 63 : i32
    %112 = tpu.dynamic_rotate %106 by %c63_i32_46 dim 0 : vector<64x128xf32>, i32 -> vector<64x128xf32>
    %cst_47 = arith.constant 0.000000e+00 : f32
    %113 = vector.shape_cast %21 : vector<64x1xi1> to vector<64x1xi1>
    %114 = vector.broadcast %113 : vector<64x1xi1> to vector<64x128xi1>
    %115 = vector.broadcast %cst_47 : f32 to vector<64x128xf32>
    %116 = arith.select %114, %112, %115 : vector<64x128xi1>, vector<64x128xf32>
    %117 = tpu.concatenate %111, %106, %116 in 1 : vector<64x128xf32>, vector<64x128xf32>, vector<64x128xf32> -> vector<64x384xf32>
    %118 = arith.truncf %117 : vector<64x384xf32> to vector<64x384xbf16>
    %c5 = arith.constant 5 : index
    %c0_48 = arith.constant 0 : index
    %c0_49 = arith.constant 0 : index
    %119 = vector.load %arg1[%c5, %c0_48, %c0_49] : memref<10x384x128xbf16, #tpu.memory_space<vmem>>, vector<1x384x128xbf16>
    %120 = vector.shape_cast %119 : vector<1x384x128xbf16> to vector<384x128xbf16>
    %cst_50 = arith.constant dense<0.000000e+00> : vector<64x128xf32>
    %121 = tpu.matmul %118, %120, %cst_50 {dimension_numbers = #tpu.dot_dimension_numbers<[1], [0], [0], [1], [0, 0, 1, 1], [], []>} : vector<64x384xbf16>, vector<384x128xbf16>, vector<64x128xf32> -> vector<64x128xf32>
    %cst_51 = arith.constant 0.000000e+00 : f32
    %122 = vector.broadcast %cst_51 : f32 to vector<64x128xf32>
    %123 = arith.maximumf %121, %122 : vector<64x128xf32>
    %c1_i32_52 = arith.constant 1 : i32
    %124 = tpu.dynamic_rotate %123 by %c1_i32_52 dim 0 : vector<64x128xf32>, i32 -> vector<64x128xf32>
    %cst_53 = arith.constant 0.000000e+00 : f32
    %125 = vector.shape_cast %19 : vector<64x1xi1> to vector<64x1xi1>
    %126 = vector.broadcast %125 : vector<64x1xi1> to vector<64x128xi1>
    %127 = vector.broadcast %cst_53 : f32 to vector<64x128xf32>
    %128 = arith.select %126, %124, %127 : vector<64x128xi1>, vector<64x128xf32>
    %c63_i32_54 = arith.constant 63 : i32
    %129 = tpu.dynamic_rotate %123 by %c63_i32_54 dim 0 : vector<64x128xf32>, i32 -> vector<64x128xf32>
    %cst_55 = arith.constant 0.000000e+00 : f32
    %130 = vector.shape_cast %21 : vector<64x1xi1> to vector<64x1xi1>
    %131 = vector.broadcast %130 : vector<64x1xi1> to vector<64x128xi1>
    %132 = vector.broadcast %cst_55 : f32 to vector<64x128xf32>
    %133 = arith.select %131, %129, %132 : vector<64x128xi1>, vector<64x128xf32>
    %134 = tpu.concatenate %128, %123, %133 in 1 : vector<64x128xf32>, vector<64x128xf32>, vector<64x128xf32> -> vector<64x384xf32>
    %135 = arith.truncf %134 : vector<64x384xf32> to vector<64x384xbf16>
    %c6 = arith.constant 6 : index
    %c0_56 = arith.constant 0 : index
    %c0_57 = arith.constant 0 : index
    %136 = vector.load %arg1[%c6, %c0_56, %c0_57] : memref<10x384x128xbf16, #tpu.memory_space<vmem>>, vector<1x384x128xbf16>
    %137 = vector.shape_cast %136 : vector<1x384x128xbf16> to vector<384x128xbf16>
    %cst_58 = arith.constant dense<0.000000e+00> : vector<64x128xf32>
    %138 = tpu.matmul %135, %137, %cst_58 {dimension_numbers = #tpu.dot_dimension_numbers<[1], [0], [0], [1], [0, 0, 1, 1], [], []>} : vector<64x384xbf16>, vector<384x128xbf16>, vector<64x128xf32> -> vector<64x128xf32>
    %cst_59 = arith.constant 0.000000e+00 : f32
    %139 = vector.broadcast %cst_59 : f32 to vector<64x128xf32>
    %140 = arith.maximumf %138, %139 : vector<64x128xf32>
    %c1_i32_60 = arith.constant 1 : i32
    %141 = tpu.dynamic_rotate %140 by %c1_i32_60 dim 0 : vector<64x128xf32>, i32 -> vector<64x128xf32>
    %cst_61 = arith.constant 0.000000e+00 : f32
    %142 = vector.shape_cast %19 : vector<64x1xi1> to vector<64x1xi1>
    %143 = vector.broadcast %142 : vector<64x1xi1> to vector<64x128xi1>
    %144 = vector.broadcast %cst_61 : f32 to vector<64x128xf32>
    %145 = arith.select %143, %141, %144 : vector<64x128xi1>, vector<64x128xf32>
    %c63_i32_62 = arith.constant 63 : i32
    %146 = tpu.dynamic_rotate %140 by %c63_i32_62 dim 0 : vector<64x128xf32>, i32 -> vector<64x128xf32>
    %cst_63 = arith.constant 0.000000e+00 : f32
    %147 = vector.shape_cast %21 : vector<64x1xi1> to vector<64x1xi1>
    %148 = vector.broadcast %147 : vector<64x1xi1> to vector<64x128xi1>
    %149 = vector.broadcast %cst_63 : f32 to vector<64x128xf32>
    %150 = arith.select %148, %146, %149 : vector<64x128xi1>, vector<64x128xf32>
    %151 = tpu.concatenate %145, %140, %150 in 1 : vector<64x128xf32>, vector<64x128xf32>, vector<64x128xf32> -> vector<64x384xf32>
    %152 = arith.truncf %151 : vector<64x384xf32> to vector<64x384xbf16>
    %c7 = arith.constant 7 : index
    %c0_64 = arith.constant 0 : index
    %c0_65 = arith.constant 0 : index
    %153 = vector.load %arg1[%c7, %c0_64, %c0_65] : memref<10x384x128xbf16, #tpu.memory_space<vmem>>, vector<1x384x128xbf16>
    %154 = vector.shape_cast %153 : vector<1x384x128xbf16> to vector<384x128xbf16>
    %cst_66 = arith.constant dense<0.000000e+00> : vector<64x128xf32>
    %155 = tpu.matmul %152, %154, %cst_66 {dimension_numbers = #tpu.dot_dimension_numbers<[1], [0], [0], [1], [0, 0, 1, 1], [], []>} : vector<64x384xbf16>, vector<384x128xbf16>, vector<64x128xf32> -> vector<64x128xf32>
    %cst_67 = arith.constant 0.000000e+00 : f32
    %156 = vector.broadcast %cst_67 : f32 to vector<64x128xf32>
    %157 = arith.maximumf %155, %156 : vector<64x128xf32>
    %c1_i32_68 = arith.constant 1 : i32
    %158 = tpu.dynamic_rotate %157 by %c1_i32_68 dim 0 : vector<64x128xf32>, i32 -> vector<64x128xf32>
    %cst_69 = arith.constant 0.000000e+00 : f32
    %159 = vector.shape_cast %19 : vector<64x1xi1> to vector<64x1xi1>
    %160 = vector.broadcast %159 : vector<64x1xi1> to vector<64x128xi1>
    %161 = vector.broadcast %cst_69 : f32 to vector<64x128xf32>
    %162 = arith.select %160, %158, %161 : vector<64x128xi1>, vector<64x128xf32>
    %c63_i32_70 = arith.constant 63 : i32
    %163 = tpu.dynamic_rotate %157 by %c63_i32_70 dim 0 : vector<64x128xf32>, i32 -> vector<64x128xf32>
    %cst_71 = arith.constant 0.000000e+00 : f32
    %164 = vector.shape_cast %21 : vector<64x1xi1> to vector<64x1xi1>
    %165 = vector.broadcast %164 : vector<64x1xi1> to vector<64x128xi1>
    %166 = vector.broadcast %cst_71 : f32 to vector<64x128xf32>
    %167 = arith.select %165, %163, %166 : vector<64x128xi1>, vector<64x128xf32>
    %168 = tpu.concatenate %162, %157, %167 in 1 : vector<64x128xf32>, vector<64x128xf32>, vector<64x128xf32> -> vector<64x384xf32>
    %169 = arith.truncf %168 : vector<64x384xf32> to vector<64x384xbf16>
    %c8 = arith.constant 8 : index
    %c0_72 = arith.constant 0 : index
    %c0_73 = arith.constant 0 : index
    %170 = vector.load %arg1[%c8, %c0_72, %c0_73] : memref<10x384x128xbf16, #tpu.memory_space<vmem>>, vector<1x384x128xbf16>
    %171 = vector.shape_cast %170 : vector<1x384x128xbf16> to vector<384x128xbf16>
    %cst_74 = arith.constant dense<0.000000e+00> : vector<64x128xf32>
    %172 = tpu.matmul %169, %171, %cst_74 {dimension_numbers = #tpu.dot_dimension_numbers<[1], [0], [0], [1], [0, 0, 1, 1], [], []>} : vector<64x384xbf16>, vector<384x128xbf16>, vector<64x128xf32> -> vector<64x128xf32>
    %cst_75 = arith.constant 0.000000e+00 : f32
    %173 = vector.broadcast %cst_75 : f32 to vector<64x128xf32>
    %174 = arith.maximumf %172, %173 : vector<64x128xf32>
    %c1_i32_76 = arith.constant 1 : i32
    %175 = tpu.dynamic_rotate %174 by %c1_i32_76 dim 0 : vector<64x128xf32>, i32 -> vector<64x128xf32>
    %cst_77 = arith.constant 0.000000e+00 : f32
    %176 = vector.shape_cast %19 : vector<64x1xi1> to vector<64x1xi1>
    %177 = vector.broadcast %176 : vector<64x1xi1> to vector<64x128xi1>
    %178 = vector.broadcast %cst_77 : f32 to vector<64x128xf32>
    %179 = arith.select %177, %175, %178 : vector<64x128xi1>, vector<64x128xf32>
    %c63_i32_78 = arith.constant 63 : i32
    %180 = tpu.dynamic_rotate %174 by %c63_i32_78 dim 0 : vector<64x128xf32>, i32 -> vector<64x128xf32>
    %cst_79 = arith.constant 0.000000e+00 : f32
    %181 = vector.shape_cast %21 : vector<64x1xi1> to vector<64x1xi1>
    %182 = vector.broadcast %181 : vector<64x1xi1> to vector<64x128xi1>
    %183 = vector.broadcast %cst_79 : f32 to vector<64x128xf32>
    %184 = arith.select %182, %180, %183 : vector<64x128xi1>, vector<64x128xf32>
    %185 = tpu.concatenate %179, %174, %184 in 1 : vector<64x128xf32>, vector<64x128xf32>, vector<64x128xf32> -> vector<64x384xf32>
    %186 = arith.truncf %185 : vector<64x384xf32> to vector<64x384xbf16>
    %c9 = arith.constant 9 : index
    %c0_80 = arith.constant 0 : index
    %c0_81 = arith.constant 0 : index
    %187 = vector.load %arg1[%c9, %c0_80, %c0_81] : memref<10x384x128xbf16, #tpu.memory_space<vmem>>, vector<1x384x128xbf16>
    %188 = vector.shape_cast %187 : vector<1x384x128xbf16> to vector<384x128xbf16>
    %cst_82 = arith.constant dense<0.000000e+00> : vector<64x128xf32>
    %189 = tpu.matmul %186, %188, %cst_82 {dimension_numbers = #tpu.dot_dimension_numbers<[1], [0], [0], [1], [0, 0, 1, 1], [], []>} : vector<64x384xbf16>, vector<384x128xbf16>, vector<64x128xf32> -> vector<64x128xf32>
    %190 = vector.shape_cast %189 : vector<64x128xf32> to vector<8x8x128xf32>
    %cst_83 = arith.constant 0.000000e+00 : f32
    %191 = vector.broadcast %cst_83 : f32 to vector<8x64xf32>
    %192 = vector.extract_strided_slice %190 {offsets = [0, 0, 0], sizes = [8, 1, 128], strides = [1, 1, 1]} : vector<8x8x128xf32> to vector<8x1x128xf32>
    %193 = vector.shape_cast %192 : vector<8x1x128xf32> to vector<8x128xf32>
    %194 = arith.truncf %193 : vector<8x128xf32> to vector<8x128xbf16>
    %c0_84 = arith.constant 0 : index
    %c0_85 = arith.constant 0 : index
    %c0_86 = arith.constant 0 : index
    %195 = vector.load %arg3[%c0_84, %c0_85, %c0_86] : memref<8x128x64xbf16, #tpu.memory_space<vmem>>, vector<1x128x64xbf16>
    %196 = vector.shape_cast %195 : vector<1x128x64xbf16> to vector<128x64xbf16>
    %cst_87 = arith.constant dense<0.000000e+00> : vector<8x64xf32>
    %197 = tpu.matmul %194, %196, %cst_87 {dimension_numbers = #tpu.dot_dimension_numbers<[1], [0], [0], [1], [0, 0, 1, 1], [], []>} : vector<8x128xbf16>, vector<128x64xbf16>, vector<8x64xf32> -> vector<8x64xf32>
    %198 = arith.addf %191, %197 : vector<8x64xf32>
    %199 = vector.extract_strided_slice %190 {offsets = [0, 1, 0], sizes = [8, 1, 128], strides = [1, 1, 1]} : vector<8x8x128xf32> to vector<8x1x128xf32>
    %200 = vector.shape_cast %199 : vector<8x1x128xf32> to vector<8x128xf32>
    %201 = arith.truncf %200 : vector<8x128xf32> to vector<8x128xbf16>
    %c1_88 = arith.constant 1 : index
    %c0_89 = arith.constant 0 : index
    %c0_90 = arith.constant 0 : index
    %202 = vector.load %arg3[%c1_88, %c0_89, %c0_90] : memref<8x128x64xbf16, #tpu.memory_space<vmem>>, vector<1x128x64xbf16>
    %203 = vector.shape_cast %202 : vector<1x128x64xbf16> to vector<128x64xbf16>
    %cst_91 = arith.constant dense<0.000000e+00> : vector<8x64xf32>
    %204 = tpu.matmul %201, %203, %cst_91 {dimension_numbers = #tpu.dot_dimension_numbers<[1], [0], [0], [1], [0, 0, 1, 1], [], []>} : vector<8x128xbf16>, vector<128x64xbf16>, vector<8x64xf32> -> vector<8x64xf32>
    %205 = arith.addf %198, %204 : vector<8x64xf32>
    %206 = vector.extract_strided_slice %190 {offsets = [0, 2, 0], sizes = [8, 1, 128], strides = [1, 1, 1]} : vector<8x8x128xf32> to vector<8x1x128xf32>
    %207 = vector.shape_cast %206 : vector<8x1x128xf32> to vector<8x128xf32>
    %208 = arith.truncf %207 : vector<8x128xf32> to vector<8x128xbf16>
    %c2_92 = arith.constant 2 : index
    %c0_93 = arith.constant 0 : index
    %c0_94 = arith.constant 0 : index
    %209 = vector.load %arg3[%c2_92, %c0_93, %c0_94] : memref<8x128x64xbf16, #tpu.memory_space<vmem>>, vector<1x128x64xbf16>
    %210 = vector.shape_cast %209 : vector<1x128x64xbf16> to vector<128x64xbf16>
    %cst_95 = arith.constant dense<0.000000e+00> : vector<8x64xf32>
    %211 = tpu.matmul %208, %210, %cst_95 {dimension_numbers = #tpu.dot_dimension_numbers<[1], [0], [0], [1], [0, 0, 1, 1], [], []>} : vector<8x128xbf16>, vector<128x64xbf16>, vector<8x64xf32> -> vector<8x64xf32>
    %212 = arith.addf %205, %211 : vector<8x64xf32>
    %213 = vector.extract_strided_slice %190 {offsets = [0, 3, 0], sizes = [8, 1, 128], strides = [1, 1, 1]} : vector<8x8x128xf32> to vector<8x1x128xf32>
    %214 = vector.shape_cast %213 : vector<8x1x128xf32> to vector<8x128xf32>
    %215 = arith.truncf %214 : vector<8x128xf32> to vector<8x128xbf16>
    %c3_96 = arith.constant 3 : index
    %c0_97 = arith.constant 0 : index
    %c0_98 = arith.constant 0 : index
    %216 = vector.load %arg3[%c3_96, %c0_97, %c0_98] : memref<8x128x64xbf16, #tpu.memory_space<vmem>>, vector<1x128x64xbf16>
    %217 = vector.shape_cast %216 : vector<1x128x64xbf16> to vector<128x64xbf16>
    %cst_99 = arith.constant dense<0.000000e+00> : vector<8x64xf32>
    %218 = tpu.matmul %215, %217, %cst_99 {dimension_numbers = #tpu.dot_dimension_numbers<[1], [0], [0], [1], [0, 0, 1, 1], [], []>} : vector<8x128xbf16>, vector<128x64xbf16>, vector<8x64xf32> -> vector<8x64xf32>
    %219 = arith.addf %212, %218 : vector<8x64xf32>
    %220 = vector.extract_strided_slice %190 {offsets = [0, 4, 0], sizes = [8, 1, 128], strides = [1, 1, 1]} : vector<8x8x128xf32> to vector<8x1x128xf32>
    %221 = vector.shape_cast %220 : vector<8x1x128xf32> to vector<8x128xf32>
    %222 = arith.truncf %221 : vector<8x128xf32> to vector<8x128xbf16>
    %c4_100 = arith.constant 4 : index
    %c0_101 = arith.constant 0 : index
    %c0_102 = arith.constant 0 : index
    %223 = vector.load %arg3[%c4_100, %c0_101, %c0_102] : memref<8x128x64xbf16, #tpu.memory_space<vmem>>, vector<1x128x64xbf16>
    %224 = vector.shape_cast %223 : vector<1x128x64xbf16> to vector<128x64xbf16>
    %cst_103 = arith.constant dense<0.000000e+00> : vector<8x64xf32>
    %225 = tpu.matmul %222, %224, %cst_103 {dimension_numbers = #tpu.dot_dimension_numbers<[1], [0], [0], [1], [0, 0, 1, 1], [], []>} : vector<8x128xbf16>, vector<128x64xbf16>, vector<8x64xf32> -> vector<8x64xf32>
    %226 = arith.addf %219, %225 : vector<8x64xf32>
    %227 = vector.extract_strided_slice %190 {offsets = [0, 5, 0], sizes = [8, 1, 128], strides = [1, 1, 1]} : vector<8x8x128xf32> to vector<8x1x128xf32>
    %228 = vector.shape_cast %227 : vector<8x1x128xf32> to vector<8x128xf32>
    %229 = arith.truncf %228 : vector<8x128xf32> to vector<8x128xbf16>
    %c5_104 = arith.constant 5 : index
    %c0_105 = arith.constant 0 : index
    %c0_106 = arith.constant 0 : index
    %230 = vector.load %arg3[%c5_104, %c0_105, %c0_106] : memref<8x128x64xbf16, #tpu.memory_space<vmem>>, vector<1x128x64xbf16>
    %231 = vector.shape_cast %230 : vector<1x128x64xbf16> to vector<128x64xbf16>
    %cst_107 = arith.constant dense<0.000000e+00> : vector<8x64xf32>
    %232 = tpu.matmul %229, %231, %cst_107 {dimension_numbers = #tpu.dot_dimension_numbers<[1], [0], [0], [1], [0, 0, 1, 1], [], []>} : vector<8x128xbf16>, vector<128x64xbf16>, vector<8x64xf32> -> vector<8x64xf32>
    %233 = arith.addf %226, %232 : vector<8x64xf32>
    %234 = vector.extract_strided_slice %190 {offsets = [0, 6, 0], sizes = [8, 1, 128], strides = [1, 1, 1]} : vector<8x8x128xf32> to vector<8x1x128xf32>
    %235 = vector.shape_cast %234 : vector<8x1x128xf32> to vector<8x128xf32>
    %236 = arith.truncf %235 : vector<8x128xf32> to vector<8x128xbf16>
    %c6_108 = arith.constant 6 : index
    %c0_109 = arith.constant 0 : index
    %c0_110 = arith.constant 0 : index
    %237 = vector.load %arg3[%c6_108, %c0_109, %c0_110] : memref<8x128x64xbf16, #tpu.memory_space<vmem>>, vector<1x128x64xbf16>
    %238 = vector.shape_cast %237 : vector<1x128x64xbf16> to vector<128x64xbf16>
    %cst_111 = arith.constant dense<0.000000e+00> : vector<8x64xf32>
    %239 = tpu.matmul %236, %238, %cst_111 {dimension_numbers = #tpu.dot_dimension_numbers<[1], [0], [0], [1], [0, 0, 1, 1], [], []>} : vector<8x128xbf16>, vector<128x64xbf16>, vector<8x64xf32> -> vector<8x64xf32>
    %240 = arith.addf %233, %239 : vector<8x64xf32>
    %241 = vector.extract_strided_slice %190 {offsets = [0, 7, 0], sizes = [8, 1, 128], strides = [1, 1, 1]} : vector<8x8x128xf32> to vector<8x1x128xf32>
    %242 = vector.shape_cast %241 : vector<8x1x128xf32> to vector<8x128xf32>
    %243 = arith.truncf %242 : vector<8x128xf32> to vector<8x128xbf16>
    %c7_112 = arith.constant 7 : index
    %c0_113 = arith.constant 0 : index
    %c0_114 = arith.constant 0 : index
    %244 = vector.load %arg3[%c7_112, %c0_113, %c0_114] : memref<8x128x64xbf16, #tpu.memory_space<vmem>>, vector<1x128x64xbf16>
    %245 = vector.shape_cast %244 : vector<1x128x64xbf16> to vector<128x64xbf16>
    %cst_115 = arith.constant dense<0.000000e+00> : vector<8x64xf32>
    %246 = tpu.matmul %243, %245, %cst_115 {dimension_numbers = #tpu.dot_dimension_numbers<[1], [0], [0], [1], [0, 0, 1, 1], [], []>} : vector<8x128xbf16>, vector<128x64xbf16>, vector<8x64xf32> -> vector<8x64xf32>
    %247 = arith.addf %240, %246 : vector<8x64xf32>
    %c0_116 = arith.constant 0 : index
    %c0_117 = arith.constant 0 : index
    %248 = vector.load %arg4[%c0_116, %c0_117] : memref<1x64xf32, #tpu.memory_space<vmem>>, vector<1x64xf32>
    %249 = vector.broadcast %248 : vector<1x64xf32> to vector<8x64xf32>
    %250 = arith.addf %247, %249 : vector<8x64xf32>
    %cst_118 = arith.constant 0.000000e+00 : f32
    %251 = vector.broadcast %cst_118 : f32 to vector<8x64xf32>
    %252 = arith.maximumf %250, %251 : vector<8x64xf32>
    %c0_119 = arith.constant 0 : index
    %c0_120 = arith.constant 0 : index
    %253 = vector.load %arg5[%c0_119, %c0_120] : memref<1x64xf32, #tpu.memory_space<vmem>>, vector<1x64xf32>
    %254 = vector.broadcast %253 : vector<1x64xf32> to vector<8x64xf32>
    %255 = arith.mulf %252, %254 : vector<8x64xf32>
    %cst_121 = arith.constant dense<0.000000e+00> : vector<8xf32>
    %256 = vector.multi_reduction <add>, %255, %cst_121 [1] : vector<8x64xf32> to vector<8xf32>
    %257 = vector.shape_cast %256 : vector<8xf32> to vector<8x1xf32>
    %c0_122 = arith.constant 0 : index
    %c0_123 = arith.constant 0 : index
    %258 = vector.load %arg6[%c0_122, %c0_123] : memref<1x1xf32, #tpu.memory_space<vmem>>, vector<1x1xf32>
    %259 = vector.broadcast %258 : vector<1x1xf32> to vector<8x1xf32>
    %260 = arith.addf %257, %259 : vector<8x1xf32>
    %c0_124 = arith.constant 0 : index
    %c0_125 = arith.constant 0 : index
    %261 = vector.load %arg7[%c0_124, %c0_125] : memref<8x1xf32, #tpu.memory_space<vmem>>, vector<8x1xf32>
    tpu.vector_store %arg7[%c0_124, %c0_125], %260 {strides = array<i32>} : memref<8x1xf32, #tpu.memory_space<vmem>>, vector<8x1xf32>,
    return
  }
  func.func @transform_0(%arg0: i32) -> (i32, i32, i32) {
    %c0_i32 = arith.constant 0 : i32
    %c0_i32_0 = arith.constant 0 : i32
    %c0_i32_1 = arith.constant 0 : i32
    %c0_i32_2 = arith.constant 0 : i32
    return %c0_i32, %c0_i32_0, %c0_i32_1 : i32, i32, i32
  }
  func.func @transform_1(%arg0: i32) -> (i32, i32) {
    %c0_i32 = arith.constant 0 : i32
    %c0_i32_0 = arith.constant 0 : i32
    return %arg0, %c0_i32 : i32, i32
  }
  func.func @transform_2(%arg0: i32) -> (i32, i32, i32) {
    %c0_i32 = arith.constant 0 : i32
    %c0_i32_0 = arith.constant 0 : i32
    %c0_i32_1 = arith.constant 0 : i32
    %c0_i32_2 = arith.constant 0 : i32
    return %c0_i32, %c0_i32_0, %c0_i32_1 : i32, i32, i32
  }
  func.func @transform_3(%arg0: i32) -> (i32, i32) {
    %c0_i32 = arith.constant 0 : i32
    %c0_i32_0 = arith.constant 0 : i32
    %c0_i32_1 = arith.constant 0 : i32
    return %c0_i32, %c0_i32_0 : i32, i32
  }
  func.func @transform_4(%arg0: i32) -> (i32, i32) {
    %c0_i32 = arith.constant 0 : i32
    %c0_i32_0 = arith.constant 0 : i32
    %c0_i32_1 = arith.constant 0 : i32
    return %c0_i32, %c0_i32_0 : i32, i32
  }
  func.func @transform_5(%arg0: i32) -> (i32, i32) {
    %c0_i32 = arith.constant 0 : i32
    %c0_i32_0 = arith.constant 0 : i32
    %c0_i32_1 = arith.constant 0 : i32
    return %c0_i32, %c0_i32_0 : i32, i32
  }
  func.func @transform_6(%arg0: i32) -> (i32, i32) {
    %c0_i32 = arith.constant 0 : i32
    %c0_i32_0 = arith.constant 0 : i32
    return %arg0, %c0_i32 : i32, i32
  }
}

</mosaic_0001>

<llo_original>
// kernel: tpu_custom_call.1
$region0: #{tpu_custom_call.1}
  #allocation0 [shape = 'u32[]', space=smem, size = 0x4, offset = 0x4, fixed_abs, tag = 'smem constant byte address 0x4 - core index']
  #allocation1 [shape = 'u32[144,128]{1,0:T(1,128)}', space=vmem, size = 0x12000, scoped, tag = 'internal scratch']
  #allocation2 [shape = 'f32[1,1]{1,0:T(1,128)S(1)}', space=vmem, size = 0x200, scoped, tag = 'scoped memory for tpu_custom_call.1']
  %s0 = inlined_call_operand.hbm [shape: bf16[10,384,128], index: 0, kind: input, shape index: {}]
  %s1 = inlined_call_operand.vmem [shape: f32[128,128], index: 1, kind: input, shape index: {}]
  %s2 = inlined_call_operand.vmem [shape: bf16[8,128,64], index: 2, kind: input, shape index: {}]
  %s3 = inlined_call_operand.vmem [shape: f32[1,64], index: 3, kind: input, shape index: {}]
  %s4 = inlined_call_operand.vmem [shape: f32[1,64], index: 4, kind: input, shape index: {}]
  %s5 = inlined_call_operand.<no memory space> [shape: f32[1,1], index: 5, kind: input, shape index: {}]
  %s6 = inlined_call_operand.vmem [shape: f32[16,1], index: 6, kind: output, shape index: {}]
  %s7 = sld [smem:[#allocation0]]
  $region61: #{tpu_custom_call.1} parent=0
    _
  %s9 = ssub.s32 1, %s7
  %s10 = scalar_select 0, %s9, %s7
  %v11 = vstv %s5
  %12 = vst [vmem:[#allocation2] sm:$0x1] %v11
  $region1: #{tpu_custom_call.1} parent=0
    #allocation3 [shape = 'u8[983040]{0}', space=vmem, size = 0xf0000, scoped, tag = 'input window, operand 0, single buffered']
    #allocation4 [shape = 's32[2]{0}', space=sflag, size = 0x8, scoped, tag = 'scoped memory for tpu_custom_call.1']
    %13 = vsyncpa [#allocation4], 0
    loop: start=0, step=1, limit=4
    $region2: #{tpu_custom_call.1} parent=1 // loop_pre_header
      _
    $region3: #{tpu_custom_call.1} parent=1 // loop_header
      %s15 = sphi 0, %s19
      %p16 = scmp.ge.s32.totalorder %s15, 4
      %s23 = sphi 0, %s23
      %s25 = sphi 0, %s23
      %s26 = sphi 0, %s25
      %s40 = sphi 0, %s26
      %s46 = sphi 0, %s48
      %s49 = sphi 0, %s46
      %s50 = sphi 0, %s49
      %s66 = sphi 0, %s50
      %s70 = sphi 0, %s70
      %s72 = sphi 0, %s70
      %s73 = sphi 0, %s72
      %s87 = sphi 0, %s73
      %s91 = sphi 0, %s91
      %s93 = sphi 0, %s91
      %s94 = sphi 0, %s93
      %s108 = sphi 0, %s94
      %s112 = sphi 0, %s112
      %s114 = sphi 0, %s112
      %s115 = sphi 0, %s114
      %s129 = sphi 0, %s115
      %s133 = sphi 0, %s133
      %s135 = sphi 0, %s133
      %s136 = sphi 0, %s135
      %s150 = sphi 0, %s136
      %s156 = sphi 0, %s158
      %s159 = sphi 0, %s156
      %s160 = sphi 0, %s159
      %s176 = sphi 0, %s160
    $region4: #{tpu_custom_call.1} parent=1 // loop_header_branch
      %18 = sbr.rel (%p16) target = $region8
    $region5: #{tpu_custom_call.1} parent=1 // loop_body
      %s20 = ssub.s32 %s15, 1
      %s21 = ssub.s32 %s15, 2
      %s22 = sadd.s32 %s15, 1
      %s24 = sadd.s32 %s23, 1
      %p27 = scmp.eq.s32.totalorder %s15, 1
      %p28 = scmp.ne.s32.totalorder %s23, %s25
      %p29 = scmp.eq.s32.totalorder %s15, 0
      %p30 = por %p28, %p29
      %p31 = scmp.ne.s32.totalorder %s23, %s25
      %p32 = scmp.eq.s32.totalorder %s20, 1
      %p33 = por %p31, %p32
      %p34 = scmp.ne.s32.totalorder %s25, %s26
      %p35 = scmp.eq.s32.totalorder %s20, 0
      %p36 = por %p34, %p35
      %p37 = scmp.ne.s32.totalorder %s25, %s26
      %p38 = scmp.eq.s32.totalorder %s21, 1
      %p39 = por %p37, %p38
      %p41 = scmp.ne.s32.totalorder %s26, %s40
      %p42 = scmp.eq.s32.totalorder %s21, 0
      %p43 = por %p41, %p42
      %s44 = ssub.s32 %s15, %s22
      %p45 = scmp.eq.s32.totalorder %s44, 0
      %s47 = sadd.s32 %s46, 1
      %s48 = scalar_select %p45, %s46, %s47
      %p51 = pneg %p45
      %p52 = scmp.eq.s32.totalorder %s15, 1
      %p53 = por %p51, %p52
      %p54 = scmp.ne.s32.totalorder %s46, %s49
      %p55 = scmp.eq.s32.totalorder %s15, 0
      %p56 = por %p54, %p55
      %p57 = scmp.ne.s32.totalorder %s46, %s49
      %p58 = scmp.eq.s32.totalorder %s20, 1
      %p59 = por %p57, %p58
      %p60 = scmp.ne.s32.totalorder %s49, %s50
      %p61 = scmp.eq.s32.totalorder %s20, 0
      %p62 = por %p60, %p61
      %p63 = scmp.ne.s32.totalorder %s49, %s50
      %p64 = scmp.eq.s32.totalorder %s21, 1
      %p65 = por %p63, %p64
      %p67 = scmp.ne.s32.totalorder %s50, %s66
      %p68 = scmp.eq.s32.totalorder %s21, 0
      %p69 = por %p67, %p68
      %s71 = sadd.s32 %s70, 1
      %p74 = scmp.eq.s32.totalorder %s15, 1
      %p75 = scmp.ne.s32.totalorder %s70, %s72
      %p76 = scmp.eq.s32.totalorder %s15, 0
      %p77 = por %p75, %p76
      %p78 = scmp.ne.s32.totalorder %s70, %s72
      %p79 = scmp.eq.s32.totalorder %s20, 1
      %p80 = por %p78, %p79
      %p81 = scmp.ne.s32.totalorder %s72, %s73
      %p82 = scmp.eq.s32.totalorder %s20, 0
      %p83 = por %p81, %p82
      %p84 = scmp.ne.s32.totalorder %s72, %s73
      %p85 = scmp.eq.s32.totalorder %s21, 1
      %p86 = por %p84, %p85
      %p88 = scmp.ne.s32.totalorder %s73, %s87
      %p89 = scmp.eq.s32.totalorder %s21, 0
      %p90 = por %p88, %p89
      %s92 = sadd.s32 %s91, 1
      %p95 = scmp.eq.s32.totalorder %s15, 1
      %p96 = scmp.ne.s32.totalorder %s91, %s93
      %p97 = scmp.eq.s32.totalorder %s15, 0
      %p98 = por %p96, %p97
      %p99 = scmp.ne.s32.totalorder %s91, %s93
      %p100 = scmp.eq.s32.totalorder %s20, 1
      %p101 = por %p99, %p100
      %p102 = scmp.ne.s32.totalorder %s93, %s94
      %p103 = scmp.eq.s32.totalorder %s20, 0
      %p104 = por %p102, %p103
      %p105 = scmp.ne.s32.totalorder %s93, %s94
      %p106 = scmp.eq.s32.totalorder %s21, 1
      %p107 = por %p105, %p106
      %p109 = scmp.ne.s32.totalorder %s94, %s108
      %p110 = scmp.eq.s32.totalorder %s21, 0
      %p111 = por %p109, %p110
      %s113 = sadd.s32 %s112, 1
      %p116 = scmp.eq.s32.totalorder %s15, 1
      %p117 = scmp.ne.s32.totalorder %s112, %s114
      %p118 = scmp.eq.s32.totalorder %s15, 0
      %p119 = por %p117, %p118
      %p120 = scmp.ne.s32.totalorder %s112, %s114
      %p121 = scmp.eq.s32.totalorder %s20, 1
      %p122 = por %p120, %p121
      %p123 = scmp.ne.s32.totalorder %s114, %s115
      %p124 = scmp.eq.s32.totalorder %s20, 0
      %p125 = por %p123, %p124
      %p126 = scmp.ne.s32.totalorder %s114, %s115
      %p127 = scmp.eq.s32.totalorder %s21, 1
      %p128 = por %p126, %p127
      %p130 = scmp.ne.s32.totalorder %s115, %s129
      %p131 = scmp.eq.s32.totalorder %s21, 0
      %p132 = por %p130, %p131
      %s134 = sadd.s32 %s133, 1
      %p137 = scmp.eq.s32.totalorder %s15, 1
      %p138 = scmp.ne.s32.totalorder %s133, %s135
      %p139 = scmp.eq.s32.totalorder %s15, 0
      %p140 = por %p138, %p139
      %p141 = scmp.ne.s32.totalorder %s133, %s135
      %p142 = scmp.eq.s32.totalorder %s20, 1
      %p143 = por %p141, %p142
      %p144 = scmp.ne.s32.totalorder %s135, %s136
      %p145 = scmp.eq.s32.totalorder %s20, 0
      %p146 = por %p144, %p145
      %p147 = scmp.ne.s32.totalorder %s135, %s136
      %p148 = scmp.eq.s32.totalorder %s21, 1
      %p149 = por %p147, %p148
      %p151 = scmp.ne.s32.totalorder %s136, %s150
      %p152 = scmp.eq.s32.totalorder %s21, 0
      %p153 = por %p151, %p152
      %s154 = ssub.s32 %s15, %s22
      %p155 = scmp.eq.s32.totalorder %s154, 0
      %s157 = sadd.s32 %s156, 1
      %s158 = scalar_select %p155, %s156, %s157
      %p161 = pneg %p155
      %p162 = scmp.eq.s32.totalorder %s15, 1
      %p163 = por %p161, %p162
      %p164 = scmp.ne.s32.totalorder %s156, %s159
      %p165 = scmp.eq.s32.totalorder %s15, 0
      %p166 = por %p164, %p165
      %p167 = scmp.ne.s32.totalorder %s156, %s159
      %p168 = scmp.eq.s32.totalorder %s20, 1
      %p169 = por %p167, %p168
      %p170 = scmp.ne.s32.totalorder %s159, %s160
      %p171 = scmp.eq.s32.totalorder %s20, 0
      %p172 = por %p170, %p171
      %p173 = scmp.ne.s32.totalorder %s159, %s160
      %p174 = scmp.eq.s32.totalorder %s21, 1
      %p175 = por %p173, %p174
      %p177 = scmp.ne.s32.totalorder %s160, %s176
      %p178 = scmp.eq.s32.totalorder %s21, 0
      %p179 = por %p177, %p178
      %p180 = scmp.le.s32.totalorder 1, %s15
      %p181 = scmp.lt.s32.totalorder %s15, 3
      %p182 = pnand %p180, %p181
      %p183 = pneg %p182
      // Predicated region
      $region9: #{tpu_custom_call.1} parent=5 // pred_check
        _
      $region10: #{tpu_custom_call.1} parent=5 // pred_check_branch
        %185 = sbr.rel (%p182) target = $region12
      $region11: #{tpu_custom_call.1} parent=5 // pred_region
        %s186 = ssub.s32 %s15, 1
        // Predicated region
        $region13: #{tpu_custom_call.1} parent=11 // pred_check
          %p187 = pneg %p36
        $region14: #{tpu_custom_call.1} parent=11 // pred_check_branch
          %189 = sbr.rel (%p187) target = $region16
        $region15: #{tpu_custom_call.1} parent=11 // pred_region
          %s191 = ssub.s32 30720, 30720
          %192 = vsyncadd [#allocation4], %s191
          %s193 = sshll.u32 [#allocation3], 4
          %s194 = int_to_ptr.vmem [resolvable:$true] %s193
          %199 = dma.hbm_to_vmem [thread:$0]  %s0, 30720, %s194, [#allocation4], 64, 64, 4
        $region16: #{tpu_custom_call.1} parent=11 // pred_fallthru
          _
        // Predicated region
        $region17: #{tpu_custom_call.1} parent=11 // pred_check
          %p200 = pneg %p83
        $region18: #{tpu_custom_call.1} parent=11 // pred_check_branch
          %202 = sbr.rel (%p200) target = $region20
        $region19: #{tpu_custom_call.1} parent=11 // pred_region
          _
        $region20: #{tpu_custom_call.1} parent=11 // pred_fallthru
          _
        // Predicated region
        $region21: #{tpu_custom_call.1} parent=11 // pred_check
          %p203 = pneg %p104
        $region22: #{tpu_custom_call.1} parent=11 // pred_check_branch
          %205 = sbr.rel (%p203) target = $region24
        $region23: #{tpu_custom_call.1} parent=11 // pred_region
          _
        $region24: #{tpu_custom_call.1} parent=11 // pred_fallthru
          _
        // Predicated region
        $region25: #{tpu_custom_call.1} parent=11 // pred_check
          %p206 = pneg %p125
        $region26: #{tpu_custom_call.1} parent=11 // pred_check_branch
          %208 = sbr.rel (%p206) target = $region28
        $region27: #{tpu_custom_call.1} parent=11 // pred_region
          _
        $region28: #{tpu_custom_call.1} parent=11 // pred_fallthru
          _
        // Predicated region
        $region29: #{tpu_custom_call.1} parent=11 // pred_check
          %p209 = pneg %p146
        $region30: #{tpu_custom_call.1} parent=11 // pred_check_branch
          %211 = sbr.rel (%p209) target = $region32
        $region31: #{tpu_custom_call.1} parent=11 // pred_region
          _
        $region32: #{tpu_custom_call.1} parent=11 // pred_fallthru
          _
      $region12: #{tpu_custom_call.1} parent=5 // pred_fallthru
        _
      %p212 = scmp.lt.s32.totalorder %s15, 2
      // Predicated region
      $region33: #{tpu_custom_call.1} parent=5 // pred_check
        %p213 = pneg %p212
      $region34: #{tpu_custom_call.1} parent=5 // pred_check_branch
        %215 = sbr.rel (%p213) target = $region36
      $region35: #{tpu_custom_call.1} parent=5 // pred_region
        // Predicated region
        $region37: #{tpu_custom_call.1} parent=35 // pred_check
          %p216 = pneg %p56
        $region38: #{tpu_custom_call.1} parent=35 // pred_check_branch
          %218 = sbr.rel (%p216) target = $region40
        $region39: #{tpu_custom_call.1} parent=35 // pred_region
          %s219 = smul.u32 8, %s15
          %p220 = scmp.lt.s32.totalorder %s219, 15
          %s221 = scalar_select %p220, %s219, 15
          %s222 = smul.addr %s221, 8
          %s223 = scalar_lea.vmem %s1, %s222
          %s224 = smul.u32 8, %s15
        $region40: #{tpu_custom_call.1} parent=35 // pred_fallthru
          _
      $region36: #{tpu_custom_call.1} parent=5 // pred_fallthru
        _
      %p225 = scmp.le.s32.totalorder 1, %s15
      %p226 = scmp.lt.s32.totalorder %s15, 3
      %p227 = pnand %p225, %p226
      %p228 = pneg %p227
      // Predicated region
      $region41: #{tpu_custom_call.1} parent=5 // pred_check
        _
      $region42: #{tpu_custom_call.1} parent=5 // pred_check_branch
        %230 = sbr.rel (%p227) target = $region44
      $region43: #{tpu_custom_call.1} parent=5 // pred_region
        %s231 = ssub.s32 %s15, 1
        // Predicated region
        $region45: #{tpu_custom_call.1} parent=43 // pred_check
          %p232 = pneg %p36
        $region46: #{tpu_custom_call.1} parent=43 // pred_check_branch
          %234 = sbr.rel (%p232) target = $region48
        $region47: #{tpu_custom_call.1} parent=43 // pred_region
          %235 = dma.done [#allocation4], 30720
        $region48: #{tpu_custom_call.1} parent=43 // pred_fallthru
          _
        %p236 = pneg %p36
        %p237 = pneg %p33
        %s238 = smul.u32 8, %s20
        %p239 = scmp.lt.s32.totalorder %s238, 15
        %s240 = scalar_select %p239, %s238, 15
        %s241 = smul.addr %s240, 8
        %s242 = scalar_lea.vmem %s1, %s241
        %p243 = pneg %p62
        %p244 = pneg %p59
        %p245 = pneg %p83
        %p246 = pneg %p80
        %p247 = pneg %p104
        %p248 = pneg %p101
        %p249 = pneg %p125
        %p250 = pneg %p122
        %p251 = pneg %p146
        %p252 = pneg %p143
        %p253 = pneg %p172
        %p254 = pneg %p169
        %p255 = scmp.lt.s32.totalorder %s20, 1
        %s256 = scalar_select %p255, %s20, 1
        %s257 = smul.addr %s256, 8
        %s258 = scalar_lea.vmem %s6, %s257
        %s259 = smul.u32 8, %s20
        %p260 = scmp.lt.s32.totalorder %s259, 15
        %s261 = scalar_select %p260, %s259, 15
        %s262 = smul.addr %s261, 8
        %s263 = scalar_lea.vmem %s1, %s262
        %s264 = smul.u32 8, %s20
        %p265 = scmp.lt.s32.totalorder %s20, 1
        %s266 = scalar_select %p265, %s20, 1
        %s267 = smul.addr %s266, 8
        %s268 = scalar_lea.vmem %s6, %s267
        %v270 = vld [vmem:[%s263] sm:$0xff]
        %v271 = vld [vmem:[%s263 + $0x8] sm:$0xff]
        %v272 = vld [vmem:[%s263 + $0x10] sm:$0xff]
        %v273 = vld [vmem:[%s263 + $0x18] sm:$0xff]
        %v274 = vld [vmem:[%s263 + $0x20] sm:$0xff]
        %v275 = vld [vmem:[%s263 + $0x28] sm:$0xff]
        %v276 = vld [vmem:[%s263 + $0x30] sm:$0xff]
        %v277 = vld [vmem:[%s263 + $0x38] sm:$0xff]
        %v278 = vlaneseq
        %v279 = vshrl.u32 %v278, 7
        %v280 = vadd.s32 %v279, 8
        %v281 = vadd.s32 %v279, 16
        %v282 = vadd.s32 %v279, 24
        %v283 = vadd.s32 %v279, 32
        %v284 = vadd.s32 %v279, 40
        %v285 = vadd.s32 %v279, 48
        %v286 = vadd.s32 %v279, 56
        %vm287 = vcmp.lt.s32.totalorder %v279, 0
        %v288 = vsub.s32 0, %v279
        %v289 = vsel %vm287, %v288, %v279
        %v290 = vshrl.u32 %v289, 3
        %v291 = vand.u32 %v289, 7
        %v292 = vsub.s32 0, %v291
        %v293 = vsel %vm287, %v292, %v291
        %vm294 = vcmp.lt.s32.totalorder %v280, 0
        %v295 = vsub.s32 0, %v280
        %v296 = vsel %vm294, %v295, %v280
        %v297 = vshrl.u32 %v296, 3
        %v298 = vand.u32 %v296, 7
        %v299 = vsub.s32 0, %v298
        %v300 = vsel %vm294, %v299, %v298
        %vm301 = vcmp.lt.s32.totalorder %v281, 0
        %v302 = vsub.s32 0, %v281
        %v303 = vsel %vm301, %v302, %v281
        %v304 = vshrl.u32 %v303, 3
        %v305 = vand.u32 %v303, 7
        %v306 = vsub.s32 0, %v305
        %v307 = vsel %vm301, %v306, %v305
        %vm308 = vcmp.lt.s32.totalorder %v282, 0
        %v309 = vsub.s32 0, %v282
        %v310 = vsel %vm308, %v309, %v282
        %v311 = vshrl.u32 %v310, 3
        %v312 = vand.u32 %v310, 7
        %v313 = vsub.s32 0, %v312
        %v314 = vsel %vm308, %v313, %v312
        %vm315 = vcmp.lt.s32.totalorder %v283, 0
        %v316 = vsub.s32 0, %v283
        %v317 = vsel %vm315, %v316, %v283
        %v318 = vshrl.u32 %v317, 3
        %v319 = vand.u32 %v317, 7
        %v320 = vsub.s32 0, %v319
        %v321 = vsel %vm315, %v320, %v319
        %vm322 = vcmp.lt.s32.totalorder %v284, 0
        %v323 = vsub.s32 0, %v284
        %v324 = vsel %vm322, %v323, %v284
        %v325 = vshrl.u32 %v324, 3
        %v326 = vand.u32 %v324, 7
        %v327 = vsub.s32 0, %v326
        %v328 = vsel %vm322, %v327, %v326
        %vm329 = vcmp.lt.s32.totalorder %v285, 0
        %v330 = vsub.s32 0, %v285
        %v331 = vsel %vm329, %v330, %v285
        %v332 = vshrl.u32 %v331, 3
        %v333 = vand.u32 %v331, 7
        %v334 = vsub.s32 0, %v333
        %v335 = vsel %vm329, %v334, %v333
        %vm336 = vcmp.lt.s32.totalorder %v286, 0
        %v337 = vsub.s32 0, %v286
        %v338 = vsel %vm336, %v337, %v286
        %v339 = vshrl.u32 %v338, 3
        %v340 = vand.u32 %v338, 7
        %v341 = vsub.s32 0, %v340
        %v342 = vsel %vm336, %v341, %v340
        %vm343 = vcmp.ne.s32.totalorder %v293, 0
        %vm344 = vcmp.ne.s32.totalorder %v300, 0
        %vm345 = vcmp.ne.s32.totalorder %v307, 0
        %vm346 = vcmp.ne.s32.totalorder %v314, 0
        %vm347 = vcmp.ne.s32.totalorder %v321, 0
        %vm348 = vcmp.ne.s32.totalorder %v328, 0
        %vm349 = vcmp.ne.s32.totalorder %v335, 0
        %vm350 = vcmp.ne.s32.totalorder %v342, 0
        %vm351 = vcmp.lt.s32.totalorder %v293, 0
        %vm352 = vcmp.lt.s32.totalorder %v300, 0
        %vm353 = vcmp.lt.s32.totalorder %v307, 0
        %vm354 = vcmp.lt.s32.totalorder %v314, 0
        %vm355 = vcmp.lt.s32.totalorder %v321, 0
        %vm356 = vcmp.lt.s32.totalorder %v328, 0
        %vm357 = vcmp.lt.s32.totalorder %v335, 0
        %vm358 = vcmp.lt.s32.totalorder %v342, 0
        %vm359 = vmand %vm351, %vm343
        %vm360 = vmand %vm352, %vm344
        %vm361 = vmand %vm353, %vm345
        %vm362 = vmand %vm354, %vm346
        %vm363 = vmand %vm355, %vm347
        %vm364 = vmand %vm356, %vm348
        %vm365 = vmand %vm357, %vm349
        %vm366 = vmand %vm358, %vm350
        %v367 = vadd.s32 %v293, 8
        %v368 = vadd.s32 %v300, 8
        %v369 = vadd.s32 %v307, 8
        %v370 = vadd.s32 %v314, 8
        %v371 = vadd.s32 %v321, 8
        %v372 = vadd.s32 %v328, 8
        %v373 = vadd.s32 %v335, 8
        %v374 = vadd.s32 %v342, 8
        %v375 = vsel %vm359, %v367, %v293
        %v376 = vsel %vm360, %v368, %v300
        %v377 = vsel %vm361, %v369, %v307
        %v378 = vsel %vm362, %v370, %v314
        %v379 = vsel %vm363, %v371, %v321
        %v380 = vsel %vm364, %v372, %v328
        %v381 = vsel %vm365, %v373, %v335
        %v382 = vsel %vm366, %v374, %v342
        %vm383 = vcmp.ne.s32.totalorder %v375, 0
        %vm384 = vcmp.ne.s32.totalorder %v376, 0
        %vm385 = vcmp.ne.s32.totalorder %v377, 0
        %vm386 = vcmp.ne.s32.totalorder %v378, 0
        %vm387 = vcmp.ne.s32.totalorder %v379, 0
        %vm388 = vcmp.ne.s32.totalorder %v380, 0
        %vm389 = vcmp.ne.s32.totalorder %v381, 0
        %vm390 = vcmp.ne.s32.totalorder %v382, 0
        %vm391 = vcmp.ne.s32.totalorder %v375, 7
        %vm392 = vcmp.ne.s32.totalorder %v376, 7
        %vm393 = vcmp.ne.s32.totalorder %v377, 7
        %vm394 = vcmp.ne.s32.totalorder %v378, 7
        %vm395 = vcmp.ne.s32.totalorder %v379, 7
        %vm396 = vcmp.ne.s32.totalorder %v380, 7
        %vm397 = vcmp.ne.s32.totalorder %v381, 7
        %vm398 = vcmp.ne.s32.totalorder %v382, 7
        %v399 = vrot.slane %v270, 7
        %v400 = vrot.slane %v271, 7
        %v401 = vrot.slane %v272, 7
        %v402 = vrot.slane %v273, 7
        %v403 = vrot.slane %v274, 7
        %v404 = vrot.slane %v275, 7
        %v405 = vrot.slane %v276, 7
        %v406 = vrot.slane %v277, 7
        %vm407 = vcmp.lt.s32.totalorder %v279, 1
        %v408 = vsel %vm407, %v405, %v406
        %v409 = vsel %vm407, %v404, %v405
        %v410 = vsel %vm407, %v403, %v404
        %v411 = vsel %vm407, %v402, %v403
        %v412 = vsel %vm407, %v401, %v402
        %v413 = vsel %vm407, %v400, %v401
        %v414 = vsel %vm407, %v399, %v400
        %v415 = vsel %vm407, %v406, %v399
        %v416 = vsel %vm383, 1, 0
        %v417 = vsel %vm384, 1, 0
        %v418 = vsel %vm385, 1, 0
        %v419 = vsel %vm386, 1, 0
        %v420 = vsel %vm387, 1, 0
        %v421 = vsel %vm388, 1, 0
        %v422 = vsel %vm389, 1, 0
        %v423 = vsel %vm390, 1, 0
        %vm424 = vcmp.eq.s32.totalorder %v416, 1
        %vm425 = vcmp.eq.s32.totalorder %v417, 1
        %vm426 = vcmp.eq.s32.totalorder %v418, 1
        %vm427 = vcmp.eq.s32.totalorder %v419, 1
        %vm428 = vcmp.eq.s32.totalorder %v420, 1
        %vm429 = vcmp.eq.s32.totalorder %v421, 1
        %vm430 = vcmp.eq.s32.totalorder %v422, 1
        %vm431 = vcmp.eq.s32.totalorder %v423, 1
        %v432 = vsel %vm424, %v415, 0.0
        %v433 = vsel %vm425, %v414, 0.0
        %v434 = vsel %vm426, %v413, 0.0
        %v435 = vsel %vm427, %v412, 0.0
        %v436 = vsel %vm428, %v411, 0.0
        %v437 = vsel %vm429, %v410, 0.0
        %v438 = vsel %vm430, %v409, 0.0
        %v439 = vsel %vm431, %v408, 0.0
        %v440 = vrot.slane %v270, 1
        %v441 = vrot.slane %v271, 1
        %v442 = vrot.slane %v272, 1
        %v443 = vrot.slane %v273, 1
        %v444 = vrot.slane %v274, 1
        %v445 = vrot.slane %v275, 1
        %v446 = vrot.slane %v276, 1
        %v447 = vrot.slane %v277, 1
        %vm448 = vcmp.lt.s32.totalorder %v279, 7
        %v449 = vsel %vm448, %v446, %v447
        %v450 = vsel %vm448, %v445, %v446
        %v451 = vsel %vm448, %v444, %v445
        %v452 = vsel %vm448, %v443, %v444
        %v453 = vsel %vm448, %v442, %v443
        %v454 = vsel %vm448, %v441, %v442
        %v455 = vsel %vm448, %v440, %v441
        %v456 = vsel %vm448, %v447, %v440
        %v457 = vsel %vm391, 1, 0
        %v458 = vsel %vm392, 1, 0
        %v459 = vsel %vm393, 1, 0
        %v460 = vsel %vm394, 1, 0
        %v461 = vsel %vm395, 1, 0
        %v462 = vsel %vm396, 1, 0
        %v463 = vsel %vm397, 1, 0
        %v464 = vsel %vm398, 1, 0
        %vm465 = vcmp.eq.s32.totalorder %v457, 1
        %vm466 = vcmp.eq.s32.totalorder %v458, 1
        %vm467 = vcmp.eq.s32.totalorder %v459, 1
        %vm468 = vcmp.eq.s32.totalorder %v460, 1
        %vm469 = vcmp.eq.s32.totalorder %v461, 1
        %vm470 = vcmp.eq.s32.totalorder %v462, 1
        %vm471 = vcmp.eq.s32.totalorder %v463, 1
        %vm472 = vcmp.eq.s32.totalorder %v464, 1
        %v473 = vsel %vm465, %v455, 0.0
        %v474 = vsel %vm466, %v454, 0.0
        %v475 = vsel %vm467, %v453, 0.0
        %v476 = vsel %vm468, %v452, 0.0
        %v477 = vsel %vm469, %v451, 0.0
        %v478 = vsel %vm470, %v450, 0.0
        %v479 = vsel %vm471, %v449, 0.0
        %v480 = vsel %vm472, %v456, 0.0
        %v481 = vpack.c.bf16 %v433, %v432
        %v482 = vpack.c.bf16 %v271, %v270
        %v483 = vpack.c.bf16 %v474, %v473
        %v484 = vpack.c.bf16 %v435, %v434
        %v485 = vpack.c.bf16 %v273, %v272
        %v486 = vpack.c.bf16 %v476, %v475
        %v487 = vpack.c.bf16 %v437, %v436
        %v488 = vpack.c.bf16 %v275, %v274
        %v489 = vpack.c.bf16 %v478, %v477
        %v490 = vpack.c.bf16 %v439, %v438
        %v491 = vpack.c.bf16 %v277, %v276
        %v492 = vpack.c.bf16 %v480, %v479
        %v493 = vld [vmem:[#allocation3] sm:$0xf]
        %v494 = vld [vmem:[#allocation3 + $0x4] sm:$0xf]
        %v495 = vld [vmem:[#allocation3 + $0x8] sm:$0xf]
        %v496 = vld [vmem:[#allocation3 + $0xc] sm:$0xf]
        %v497 = vld [vmem:[#allocation3 + $0x10] sm:$0xf]
        %v498 = vld [vmem:[#allocation3 + $0x14] sm:$0xf]
        %v499 = vld [vmem:[#allocation3 + $0x18] sm:$0xf]
        %v500 = vld [vmem:[#allocation3 + $0x1c] sm:$0xf]
        %v501 = vld [vmem:[#allocation3 + $0x20] sm:$0xf]
        %v502 = vld [vmem:[#allocation3 + $0x24] sm:$0xf]
        %v503 = vld [vmem:[#allocation3 + $0x28] sm:$0xf]
        %v504 = vld [vmem:[#allocation3 + $0x2c] sm:$0xf]
        %v505 = vld [vmem:[#allocation3 + $0x30] sm:$0xf]
        %v506 = vld [vmem:[#allocation3 + $0x34] sm:$0xf]
        %v507 = vld [vmem:[#allocation3 + $0x38] sm:$0xf]
        %v508 = vld [vmem:[#allocation3 + $0x3c] sm:$0xf]
        %v509 = vld [vmem:[#allocation3 + $0x40] sm:$0xf]
        %v510 = vld [vmem:[#allocation3 + $0x44] sm:$0xf]
        %v511 = vld [vmem:[#allocation3 + $0x48] sm:$0xf]
        %v512 = vld [vmem:[#allocation3 + $0x4c] sm:$0xf]
        %v513 = vld [vmem:[#allocation3 + $0x50] sm:$0xf]
        %v514 = vld [vmem:[#allocation3 + $0x54] sm:$0xf]
        %v515 = vld [vmem:[#allocation3 + $0x58] sm:$0xf]
        %v516 = vld [vmem:[#allocation3 + $0x5c] sm:$0xf]
        %v517 = vld [vmem:[#allocation3 + $0x60] sm:$0xf]
        %v518 = vld [vmem:[#allocation3 + $0x64] sm:$0xf]
        %v519 = vld [vmem:[#allocation3 + $0x68] sm:$0xf]
        %v520 = vld [vmem:[#allocation3 + $0x6c] sm:$0xf]
        %v521 = vld [vmem:[#allocation3 + $0x70] sm:$0xf]
        %v522 = vld [vmem:[#allocation3 + $0x74] sm:$0xf]
        %v523 = vld [vmem:[#allocation3 + $0x78] sm:$0xf]
        %v524 = vld [vmem:[#allocation3 + $0x7c] sm:$0xf]
        %v525 = vld [vmem:[#allocation3 + $0x80] sm:$0xf]
        %v526 = vld [vmem:[#allocation3 + $0x84] sm:$0xf]
        %v527 = vld [vmem:[#allocation3 + $0x88] sm:$0xf]
        %v528 = vld [vmem:[#allocation3 + $0x8c] sm:$0xf]
        %v529 = vld [vmem:[#allocation3 + $0x90] sm:$0xf]
        %v530 = vld [vmem:[#allocation3 + $0x94] sm:$0xf]
        %v531 = vld [vmem:[#allocation3 + $0x98] sm:$0xf]
        %v532 = vld [vmem:[#allocation3 + $0x9c] sm:$0xf]
        %v533 = vld [vmem:[#allocation3 + $0xa0] sm:$0xf]
        %v534 = vld [vmem:[#allocation3 + $0xa4] sm:$0xf]
        %v535 = vld [vmem:[#allocation3 + $0xa8] sm:$0xf]
        %v536 = vld [vmem:[#allocation3 + $0xac] sm:$0xf]
        %v537 = vld [vmem:[#allocation3 + $0xb0] sm:$0xf]
        %v538 = vld [vmem:[#allocation3 + $0xb4] sm:$0xf]
        %v539 = vld [vmem:[#allocation3 + $0xb8] sm:$0xf]
        %v540 = vld [vmem:[#allocation3 + $0xbc] sm:$0xf]
        %v589 = vunpack.c.l.b16 %v493
        %v590 = vunpack.c.l.b16 %v494
        %v591 = vunpack.c.l.b16 %v495
        %v592 = vunpack.c.l.b16 %v496
        %v593 = vunpack.c.l.b16 %v497
        %v594 = vunpack.c.l.b16 %v498
        %v595 = vunpack.c.l.b16 %v499
        %v596 = vunpack.c.l.b16 %v500
        %v597 = vunpack.c.l.b16 %v501
        %v598 = vunpack.c.l.b16 %v502
        %v599 = vunpack.c.l.b16 %v503
        %v600 = vunpack.c.l.b16 %v504
        %v601 = vunpack.c.l.b16 %v505
        %v602 = vunpack.c.l.b16 %v506
        %v603 = vunpack.c.l.b16 %v507
        %v604 = vunpack.c.l.b16 %v508
        %v605 = vunpack.c.l.b16 %v509
        %v606 = vunpack.c.l.b16 %v510
        %v607 = vunpack.c.l.b16 %v511
        %v608 = vunpack.c.l.b16 %v512
        %v609 = vunpack.c.l.b16 %v513
        %v610 = vunpack.c.l.b16 %v514
        %v611 = vunpack.c.l.b16 %v515
        %v612 = vunpack.c.l.b16 %v516
        %v613 = vunpack.c.l.b16 %v517
        %v614 = vunpack.c.l.b16 %v518
        %v615 = vunpack.c.l.b16 %v519
        %v616 = vunpack.c.l.b16 %v520
        %v617 = vunpack.c.l.b16 %v521
        %v618 = vunpack.c.l.b16 %v522
        %v619 = vunpack.c.l.b16 %v523
        %v620 = vunpack.c.l.b16 %v524
        %v621 = vunpack.c.l.b16 %v525
        %v622 = vunpack.c.l.b16 %v526
        %v623 = vunpack.c.l.b16 %v527
        %v624 = vunpack.c.l.b16 %v528
        %v625 = vunpack.c.l.b16 %v529
        %v626 = vunpack.c.l.b16 %v530
        %v627 = vunpack.c.l.b16 %v531
        %v628 = vunpack.c.l.b16 %v532
        %v629 = vunpack.c.l.b16 %v533
        %v630 = vunpack.c.l.b16 %v534
        %v631 = vunpack.c.l.b16 %v535
        %v632 = vunpack.c.l.b16 %v536
        %v633 = vunpack.c.l.b16 %v537
        %v634 = vunpack.c.l.b16 %v538
        %v635 = vunpack.c.l.b16 %v539
        %v636 = vunpack.c.l.b16 %v540
        %v637 = vpack.c.b16 %v590, %v589
        %v638 = vpack.c.b16 %v592, %v591
        %v639 = vpack.c.b16 %v594, %v593
        %v640 = vpack.c.b16 %v596, %v595
        %v641 = vpack.c.b16 %v598, %v597
        %v642 = vpack.c.b16 %v600, %v599
        %v643 = vpack.c.b16 %v602, %v601
        %v644 = vpack.c.b16 %v604, %v603
        %v645 = vpack.c.b16 %v606, %v605
        %v646 = vpack.c.b16 %v608, %v607
        %v647 = vpack.c.b16 %v610, %v609
        %v648 = vpack.c.b16 %v612, %v611
        %v649 = vpack.c.b16 %v614, %v613
        %v650 = vpack.c.b16 %v616, %v615
        %v651 = vpack.c.b16 %v618, %v617
        %v652 = vpack.c.b16 %v620, %v619
        %v653 = vpack.c.b16 %v622, %v621
        %v654 = vpack.c.b16 %v624, %v623
        %v655 = vpack.c.b16 %v626, %v625
        %v656 = vpack.c.b16 %v628, %v627
        %v657 = vpack.c.b16 %v630, %v629
        %v658 = vpack.c.b16 %v632, %v631
        %v659 = vpack.c.b16 %v634, %v633
        %v660 = vpack.c.b16 %v636, %v635
        %685 = vmatprep.subr.bf16.mxu0 0
        %686 = vmatpush1.bf16.msra.mxu0 %v637
        %687 = vmatprep.subr.bf16.mxu0 0
        %688 = vmatpush1.bf16.msra.mxu0 %v638
        %689 = vmatprep.subr.bf16.mxu0 0
        %690 = vmatpush1.bf16.msra.mxu0 %v639
        %691 = vmatprep.subr.bf16.mxu0 0
        %692 = vmatpush1.bf16.msra.mxu0 %v640
        %693 = vmatprep.subr.bf16.mxu0 0
        %694 = vmatpush1.bf16.msra.mxu0 %v641
        %695 = vmatprep.subr.bf16.mxu0 0
        %696 = vmatpush1.bf16.msra.mxu0 %v642
        %697 = vmatprep.subr.bf16.mxu0 0
        %698 = vmatpush1.bf16.msra.mxu0 %v643
        %699 = vmatprep.subr.bf16.mxu0 0
        %700 = vmatpush1.bf16.msra.mxu0 %v644
        %701 = vmatprep.subr.bf16.mxu0 0
        %702 = vmatpush1.bf16.msra.mxu0 %v645
        %703 = vmatprep.subr.bf16.mxu0 0
        %704 = vmatpush1.bf16.msra.mxu0 %v646
        %705 = vmatprep.subr.bf16.mxu0 0
        %706 = vmatpush1.bf16.msra.mxu0 %v647
        %707 = vmatprep.subr.bf16.mxu0 0
        %708 = vmatpush1.bf16.msra.mxu0 %v648
        %709 = vmatprep.subr.bf16.mxu0 0
        %710 = vmatpush1.bf16.msra.mxu0 %v649
        %711 = vmatprep.subr.bf16.mxu0 0
        %712 = vmatpush1.bf16.msra.mxu0 %v650
        %713 = vmatprep.subr.bf16.mxu0 0
        %714 = vmatpush1.bf16.msra.mxu0 %v651
        %715 = vmatprep.subr.bf16.mxu0 0
        %716 = vmatpush1.bf16.msra.mxu0 %v652
        %717 = vmatprep.mubr.bf16.mxu0 %v482
        %718 = vmatmul.mubr.bf16.gmra.mrb[0].mxu0 %v481
        %v719 = vpop.f32.mrb[0].mxu0
        %v720 = vadd.f32 0.0, %v719
        %v721 = vpop.f32.mrb[0].mxu0
        %v722 = vpop.f32.mrb[0].mxu0
        %v723 = vadd.f32 0.0, %v722
        %v724 = vpop.f32.mrb[0].mxu0
        %725 = vmatprep.mubr.bf16.mxu0 %v485
        %726 = vmatmul.mubr.bf16.gmra.mrb[0].mxu0 %v484
        %v727 = vpop.f32.mrb[0].mxu0
        %v728 = vadd.f32 0.0, %v727
        %v729 = vpop.f32.mrb[0].mxu0
        %v730 = vpop.f32.mrb[0].mxu0
        %v731 = vadd.f32 0.0, %v730
        %v732 = vpop.f32.mrb[0].mxu0
        %733 = vmatprep.mubr.bf16.mxu0 %v488
        %734 = vmatmul.mubr.bf16.gmra.mrb[0].mxu0 %v487
        %v735 = vpop.f32.mrb[0].mxu0
        %v736 = vadd.f32 0.0, %v735
        %v737 = vpop.f32.mrb[0].mxu0
        %v738 = vpop.f32.mrb[0].mxu0
        %v739 = vadd.f32 0.0, %v738
        %v740 = vpop.f32.mrb[0].mxu0
        %741 = vmatprep.mubr.bf16.mxu0 %v491
        %742 = vmatmul.mubr.bf16.gmra.mrb[0].mxu0 %v490
        %v743 = vpop.f32.mrb[0].mxu0
        %v744 = vadd.f32 0.0, %v743
        %v745 = vpop.f32.mrb[0].mxu0
        %v746 = vpop.f32.mrb[0].mxu0
        %v747 = vadd.f32 0.0, %v746
        %v748 = vpop.f32.mrb[0].mxu0
        %749 = vdwg.mxu0
        %750 = vmatprep.subr.bf16.mxu0 0
        %751 = vmatpush1.bf16.msra.mxu0 %v653
        %752 = vmatprep.subr.bf16.mxu0 0
        %753 = vmatpush1.bf16.msra.mxu0 %v654
        %754 = vmatprep.subr.bf16.mxu0 0
        %755 = vmatpush1.bf16.msra.mxu0 %v655
        %756 = vmatprep.subr.bf16.mxu0 0
        %757 = vmatpush1.bf16.msra.mxu0 %v656
        %758 = vmatprep.subr.bf16.mxu0 0
        %759 = vmatpush1.bf16.msra.mxu0 %v657
        %760 = vmatprep.subr.bf16.mxu0 0
        %761 = vmatpush1.bf16.msra.mxu0 %v658
        %762 = vmatprep.subr.bf16.mxu0 0
        %763 = vmatpush1.bf16.msra.mxu0 %v659
        %764 = vmatprep.subr.bf16.mxu0 0
        %765 = vmatpush1.bf16.msra.mxu0 %v660
        %766 = vmatprep.subr.bf16.mxu0 0
        %767 = vmatpush1.bf16.msra.mxu0 0
        %768 = vmatprep.subr.bf16.mxu0 0
        %769 = vmatpush1.bf16.msra.mxu0 0
        %770 = vmatprep.subr.bf16.mxu0 0
        %771 = vmatpush1.bf16.msra.mxu0 0
        %772 = vmatprep.subr.bf16.mxu0 0
        %773 = vmatpush1.bf16.msra.mxu0 0
        %774 = vmatprep.subr.bf16.mxu0 0
        %775 = vmatpush1.bf16.msra.mxu0 0
        %776 = vmatprep.subr.bf16.mxu0 0
        %777 = vmatpush1.bf16.msra.mxu0 0
        %778 = vmatprep.subr.bf16.mxu0 0
        %779 = vmatpush1.bf16.msra.mxu0 0
        %780 = vmatprep.subr.bf16.mxu0 0
        %781 = vmatpush1.bf16.msra.mxu0 0
        %782 = vmatprep.mubr.bf16.mxu0 0
        %783 = vmatmul.mubr.bf16.gmra.mrb[0].mxu0 %v483
        %v784 = vpop.f32.mrb[0].mxu0
        %v785 = vadd.f32 %v720, %v784
        %v786 = vpop.f32.mrb[0].mxu0
        %v787 = vpop.f32.mrb[0].mxu0
        %v788 = vadd.f32 %v723, %v787
        %v789 = vpop.f32.mrb[0].mxu0
        %790 = vmatprep.mubr.bf16.mxu0 0
        %791 = vmatmul.mubr.bf16.gmra.mrb[0].mxu0 %v486
        %v792 = vpop.f32.mrb[0].mxu0
        %v793 = vadd.f32 %v728, %v792
        %v794 = vpop.f32.mrb[0].mxu0
        %v795 = vpop.f32.mrb[0].mxu0
        %v796 = vadd.f32 %v731, %v795
        %v797 = vpop.f32.mrb[0].mxu0
        %798 = vmatprep.mubr.bf16.mxu0 0
        %799 = vmatmul.mubr.bf16.gmra.mrb[0].mxu0 %v489
        %v800 = vpop.f32.mrb[0].mxu0
        %v801 = vadd.f32 %v736, %v800
        %v802 = vpop.f32.mrb[0].mxu0
        %v803 = vpop.f32.mrb[0].mxu0
        %v804 = vadd.f32 %v739, %v803
        %v805 = vpop.f32.mrb[0].mxu0
        %806 = vmatprep.mubr.bf16.mxu0 0
        %807 = vmatmul.mubr.bf16.gmra.mrb[0].mxu0 %v492
        %v808 = vpop.f32.mrb[0].mxu0
        %v809 = vadd.f32 %v744, %v808
        %v810 = vpop.f32.mrb[0].mxu0
        %v811 = vpop.f32.mrb[0].mxu0
        %v812 = vadd.f32 %v747, %v811
        %v813 = vpop.f32.mrb[0].mxu0
        %814 = vdwg.mxu0
        %v815 = vmax.f32 %v785, 0.0
        %v816 = vmax.f32 %v788, 0.0
        %v817 = vmax.f32 %v793, 0.0
        %v818 = vmax.f32 %v796, 0.0
        %v819 = vmax.f32 %v801, 0.0
        %v820 = vmax.f32 %v804, 0.0
        %v821 = vmax.f32 %v809, 0.0
        %v822 = vmax.f32 %v812, 0.0
        %v823 = vrot.slane %v815, 7
        %v824 = vrot.slane %v816, 7
        %v825 = vrot.slane %v817, 7
        %v826 = vrot.slane %v818, 7
        %v827 = vrot.slane %v819, 7
        %v828 = vrot.slane %v820, 7
        %v829 = vrot.slane %v821, 7
        %v830 = vrot.slane %v822, 7
        %v831 = vsel %vm407, %v829, %v830
        %v832 = vsel %vm407, %v828, %v829
        %v833 = vsel %vm407, %v827, %v828
        %v834 = vsel %vm407, %v826, %v827
        %v835 = vsel %vm407, %v825, %v826
        %v836 = vsel %vm407, %v824, %v825
        %v837 = vsel %vm407, %v823, %v824
        %v838 = vsel %vm407, %v830, %v823
        %v839 = vsel %vm424, %v838, 0.0
        %v840 = vsel %vm425, %v837, 0.0
        %v841 = vsel %vm426, %v836, 0.0
        %v842 = vsel %vm427, %v835, 0.0
        %v843 = vsel %vm428, %v834, 0.0
        %v844 = vsel %vm429, %v833, 0.0
        %v845 = vsel %vm430, %v832, 0.0
        %v846 = vsel %vm431, %v831, 0.0
        %v847 = vrot.slane %v815, 1
        %v848 = vrot.slane %v816, 1
        %v849 = vrot.slane %v817, 1
        %v850 = vrot.slane %v818, 1
        %v851 = vrot.slane %v819, 1
        %v852 = vrot.slane %v820, 1
        %v853 = vrot.slane %v821, 1
        %v854 = vrot.slane %v822, 1
        %v855 = vsel %vm448, %v853, %v854
        %v856 = vsel %vm448, %v852, %v853
        %v857 = vsel %vm448, %v851, %v852
        %v858 = vsel %vm448, %v850, %v851
        %v859 = vsel %vm448, %v849, %v850
        %v860 = vsel %vm448, %v848, %v849
        %v861 = vsel %vm448, %v847, %v848
        %v862 = vsel %vm448, %v854, %v847
        %v863 = vsel %vm465, %v861, 0.0
        %v864 = vsel %vm466, %v860, 0.0
        %v865 = vsel %vm467, %v859, 0.0
        %v866 = vsel %vm468, %v858, 0.0
        %v867 = vsel %vm469, %v857, 0.0
        %v868 = vsel %vm470, %v856, 0.0
        %v869 = vsel %vm471, %v855, 0.0
        %v870 = vsel %vm472, %v862, 0.0
        %v871 = vpack.c.bf16 %v840, %v839
        %v872 = vpack.c.bf16 %v816, %v815
        %v873 = vpack.c.bf16 %v864, %v863
        %v874 = vpack.c.bf16 %v842, %v841
        %v875 = vpack.c.bf16 %v818, %v817
        %v876 = vpack.c.bf16 %v866, %v865
        %v877 = vpack.c.bf16 %v844, %v843
        %v878 = vpack.c.bf16 %v820, %v819
        %v879 = vpack.c.bf16 %v868, %v867
        %v880 = vpack.c.bf16 %v846, %v845
        %v881 = vpack.c.bf16 %v822, %v821
        %v882 = vpack.c.bf16 %v870, %v869
        %s883 = scalar_lea.vmem [#allocation3], 192
        %v884 = vld [vmem:[%s883] sm:$0xf]
        %v885 = vld [vmem:[%s883 + $0x4] sm:$0xf]
        %v886 = vld [vmem:[%s883 + $0x8] sm:$0xf]
        %v887 = vld [vmem:[%s883 + $0xc] sm:$0xf]
        %v888 = vld [vmem:[%s883 + $0x10] sm:$0xf]
        %v889 = vld [vmem:[%s883 + $0x14] sm:$0xf]
        %v890 = vld [vmem:[%s883 + $0x18] sm:$0xf]
        %v891 = vld [vmem:[%s883 + $0x1c] sm:$0xf]
        %v892 = vld [vmem:[%s883 + $0x20] sm:$0xf]
        %v893 = vld [vmem:[%s883 + $0x24] sm:$0xf]
        %v894 = vld [vmem:[%s883 + $0x28] sm:$0xf]
        %v895 = vld [vmem:[%s883 + $0x2c] sm:$0xf]
        %v896 = vld [vmem:[%s883 + $0x30] sm:$0xf]
        %v897 = vld [vmem:[%s883 + $0x34] sm:$0xf]
        %v898 = vld [vmem:[%s883 + $0x38] sm:$0xf]
        %v899 = vld [vmem:[%s883 + $0x3c] sm:$0xf]
        %v900 = vld [vmem:[%s883 + $0x40] sm:$0xf]
        %v901 = vld [vmem:[%s883 + $0x44] sm:$0xf]
        %v902 = vld [vmem:[%s883 + $0x48] sm:$0xf]
        %v903 = vld [vmem:[%s883 + $0x4c] sm:$0xf]
        %v904 = vld [vmem:[%s883 + $0x50] sm:$0xf]
        %v905 = vld [vmem:[%s883 + $0x54] sm:$0xf]
        %v906 = vld [vmem:[%s883 + $0x58] sm:$0xf]
        %v907 = vld [vmem:[%s883 + $0x5c] sm:$0xf]
        %v908 = vld [vmem:[%s883 + $0x60] sm:$0xf]
        %v909 = vld [vmem:[%s883 + $0x64] sm:$0xf]
        %v910 = vld [vmem:[%s883 + $0x68] sm:$0xf]
        %v911 = vld [vmem:[%s883 + $0x6c] sm:$0xf]
        %v912 = vld [vmem:[%s883 + $0x70] sm:$0xf]
        %v913 = vld [vmem:[%s883 + $0x74] sm:$0xf]
        %v914 = vld [vmem:[%s883 + $0x78] sm:$0xf]
        %v915 = vld [vmem:[%s883 + $0x7c] sm:$0xf]
        %v916 = vld [vmem:[%s883 + $0x80] sm:$0xf]
        %v917 = vld [vmem:[%s883 + $0x84] sm:$0xf]
        %v918 = vld [vmem:[%s883 + $0x88] sm:$0xf]
        %v919 = vld [vmem:[%s883 + $0x8c] sm:$0xf]
        %v920 = vld [vmem:[%s883 + $0x90] sm:$0xf]
        %v921 = vld [vmem:[%s883 + $0x94] sm:$0xf]
        %v922 = vld [vmem:[%s883 + $0x98] sm:$0xf]
        %v923 = vld [vmem:[%s883 + $0x9c] sm:$0xf]
        %v924 = vld [vmem:[%s883 + $0xa0] sm:$0xf]
        %v925 = vld [vmem:[%s883 + $0xa4] sm:$0xf]
        %v926 = vld [vmem:[%s883 + $0xa8] sm:$0xf]
        %v927 = vld [vmem:[%s883 + $0xac] sm:$0xf]
        %v928 = vld [vmem:[%s883 + $0xb0] sm:$0xf]
        %v929 = vld [vmem:[%s883 + $0xb4] sm:$0xf]
        %v930 = vld [vmem:[%s883 + $0xb8] sm:$0xf]
        %v931 = vld [vmem:[%s883 + $0xbc] sm:$0xf]
        %v980 = vunpack.c.l.b16 %v884
        %v981 = vunpack.c.l.b16 %v885
        %v982 = vunpack.c.l.b16 %v886
        %v983 = vunpack.c.l.b16 %v887
        %v984 = vunpack.c.l.b16 %v888
        %v985 = vunpack.c.l.b16 %v889
        %v986 = vunpack.c.l.b16 %v890
        %v987 = vunpack.c.l.b16 %v891
        %v988 = vunpack.c.l.b16 %v892
        %v989 = vunpack.c.l.b16 %v893
        %v990 = vunpack.c.l.b16 %v894
        %v991 = vunpack.c.l.b16 %v895
        %v992 = vunpack.c.l.b16 %v896
        %v993 = vunpack.c.l.b16 %v897
        %v994 = vunpack.c.l.b16 %v898
        %v995 = vunpack.c.l.b16 %v899
        %v996 = vunpack.c.l.b16 %v900
        %v997 = vunpack.c.l.b16 %v901
        %v998 = vunpack.c.l.b16 %v902
        %v999 = vunpack.c.l.b16 %v903
        %v1000 = vunpack.c.l.b16 %v904
        %v1001 = vunpack.c.l.b16 %v905
        %v1002 = vunpack.c.l.b16 %v906
        %v1003 = vunpack.c.l.b16 %v907
        %v1004 = vunpack.c.l.b16 %v908
        %v1005 = vunpack.c.l.b16 %v909
        %v1006 = vunpack.c.l.b16 %v910
        %v1007 = vunpack.c.l.b16 %v911
        %v1008 = vunpack.c.l.b16 %v912
        %v1009 = vunpack.c.l.b16 %v913
        %v1010 = vunpack.c.l.b16 %v914
        %v1011 = vunpack.c.l.b16 %v915
        %v1012 = vunpack.c.l.b16 %v916
        %v1013 = vunpack.c.l.b16 %v917
        %v1014 = vunpack.c.l.b16 %v918
        %v1015 = vunpack.c.l.b16 %v919
        %v1016 = vunpack.c.l.b16 %v920
        %v1017 = vunpack.c.l.b16 %v921
        %v1018 = vunpack.c.l.b16 %v922
        %v1019 = vunpack.c.l.b16 %v923
        %v1020 = vunpack.c.l.b16 %v924
        %v1021 = vunpack.c.l.b16 %v925
        %v1022 = vunpack.c.l.b16 %v926
        %v1023 = vunpack.c.l.b16 %v927
        %v1024 = vunpack.c.l.b16 %v928
        %v1025 = vunpack.c.l.b16 %v929
        %v1026 = vunpack.c.l.b16 %v930
        %v1027 = vunpack.c.l.b16 %v931
        %v1028 = vpack.c.b16 %v981, %v980
        %v1029 = vpack.c.b16 %v983, %v982
        %v1030 = vpack.c.b16 %v985, %v984
        %v1031 = vpack.c.b16 %v987, %v986
        %v1032 = vpack.c.b16 %v989, %v988
        %v1033 = vpack.c.b16 %v991, %v990
        %v1034 = vpack.c.b16 %v993, %v992
        %v1035 = vpack.c.b16 %v995, %v994
        %v1036 = vpack.c.b16 %v997, %v996
        %v1037 = vpack.c.b16 %v999, %v998
        %v1038 = vpack.c.b16 %v1001, %v1000
        %v1039 = vpack.c.b16 %v1003, %v1002
        %v1040 = vpack.c.b16 %v1005, %v1004
        %v1041 = vpack.c.b16 %v1007, %v1006
        %v1042 = vpack.c.b16 %v1009, %v1008
        %v1043 = vpack.c.b16 %v1011, %v1010
        %v1044 = vpack.c.b16 %v1013, %v1012
        %v1045 = vpack.c.b16 %v1015, %v1014
        %v1046 = vpack.c.b16 %v1017, %v1016
        %v1047 = vpack.c.b16 %v1019, %v1018
        %v1048 = vpack.c.b16 %v1021, %v1020
        %v1049 = vpack.c.b16 %v1023, %v1022
        %v1050 = vpack.c.b16 %v1025, %v1024
        %v1051 = vpack.c.b16 %v1027, %v1026
        %1076 = vmatprep.subr.bf16.mxu0 0
        %1077 = vmatpush1.bf16.msra.mxu0 %v1028
        %1078 = vmatprep.subr.bf16.mxu0 0
        %1079 = vmatpush1.bf16.msra.mxu0 %v1029
        %1080 = vmatprep.subr.bf16.mxu0 0
        %1081 = vmatpush1.bf16.msra.mxu0 %v1030
        %1082 = vmatprep.subr.bf16.mxu0 0
        %1083 = vmatpush1.bf16.msra.mxu0 %v1031
        %1084 = vmatprep.subr.bf16.mxu0 0
        %1085 = vmatpush1.bf16.msra.mxu0 %v1032
        %1086 = vmatprep.subr.bf16.mxu0 0
        %1087 = vmatpush1.bf16.msra.mxu0 %v1033
        %1088 = vmatprep.subr.bf16.mxu0 0
        %1089 = vmatpush1.bf16.msra.mxu0 %v1034
        %1090 = vmatprep.subr.bf16.mxu0 0
        %1091 = vmatpush1.bf16.msra.mxu0 %v1035
        %1092 = vmatprep.subr.bf16.mxu0 0
        %1093 = vmatpush1.bf16.msra.mxu0 %v1036
        %1094 = vmatprep.subr.bf16.mxu0 0
        %1095 = vmatpush1.bf16.msra.mxu0 %v1037
        %1096 = vmatprep.subr.bf16.mxu0 0
        %1097 = vmatpush1.bf16.msra.mxu0 %v1038
        %1098 = vmatprep.subr.bf16.mxu0 0
        %1099 = vmatpush1.bf16.msra.mxu0 %v1039
        %1100 = vmatprep.subr.bf16.mxu0 0
        %1101 = vmatpush1.bf16.msra.mxu0 %v1040
        %1102 = vmatprep.subr.bf16.mxu0 0
        %1103 = vmatpush1.bf16.msra.mxu0 %v1041
        %1104 = vmatprep.subr.bf16.mxu0 0
        %1105 = vmatpush1.bf16.msra.mxu0 %v1042
        %1106 = vmatprep.subr.bf16.mxu0 0
        %1107 = vmatpush1.bf16.msra.mxu0 %v1043
        %1108 = vmatprep.mubr.bf16.mxu0 %v872
        %1109 = vmatmul.mubr.bf16.gmra.mrb[0].mxu0 %v871
        %v1110 = vpop.f32.mrb[0].mxu0
        %v1111 = vadd.f32 0.0, %v1110
        %v1112 = vpop.f32.mrb[0].mxu0
        %v1113 = vpop.f32.mrb[0].mxu0
        %v1114 = vadd.f32 0.0, %v1113
        %v1115 = vpop.f32.mrb[0].mxu0
        %1116 = vmatprep.mubr.bf16.mxu0 %v875
        %1117 = vmatmul.mubr.bf16.gmra.mrb[0].mxu0 %v874
        %v1118 = vpop.f32.mrb[0].mxu0
        %v1119 = vadd.f32 0.0, %v1118
        %v1120 = vpop.f32.mrb[0].mxu0
        %v1121 = vpop.f32.mrb[0].mxu0
        %v1122 = vadd.f32 0.0, %v1121
        %v1123 = vpop.f32.mrb[0].mxu0
        %1124 = vmatprep.mubr.bf16.mxu0 %v878
        %1125 = vmatmul.mubr.bf16.gmra.mrb[0].mxu0 %v877
        %v1126 = vpop.f32.mrb[0].mxu0
        %v1127 = vadd.f32 0.0, %v1126
        %v1128 = vpop.f32.mrb[0].mxu0
        %v1129 = vpop.f32.mrb[0].mxu0
        %v1130 = vadd.f32 0.0, %v1129
        %v1131 = vpop.f32.mrb[0].mxu0
        %1132 = vmatprep.mubr.bf16.mxu0 %v881
        %1133 = vmatmul.mubr.bf16.gmra.mrb[0].mxu0 %v880
        %v1134 = vpop.f32.mrb[0].mxu0
        %v1135 = vadd.f32 0.0, %v1134
        %v1136 = vpop.f32.mrb[0].mxu0
        %v1137 = vpop.f32.mrb[0].mxu0
        %v1138 = vadd.f32 0.0, %v1137
        %v1139 = vpop.f32.mrb[0].mxu0
        %1140 = vdwg.mxu0
        %1141 = vmatprep.subr.bf16.mxu0 0
        %1142 = vmatpush1.bf16.msra.mxu0 %v1044
        %1143 = vmatprep.subr.bf16.mxu0 0
        %1144 = vmatpush1.bf16.msra.mxu0 %v1045
        %1145 = vmatprep.subr.bf16.mxu0 0
        %1146 = vmatpush1.bf16.msra.mxu0 %v1046
        %1147 = vmatprep.subr.bf16.mxu0 0
        %1148 = vmatpush1.bf16.msra.mxu0 %v1047
        %1149 = vmatprep.subr.bf16.mxu0 0
        %1150 = vmatpush1.bf16.msra.mxu0 %v1048
        %1151 = vmatprep.subr.bf16.mxu0 0
        %1152 = vmatpush1.bf16.msra.mxu0 %v1049
        %1153 = vmatprep.subr.bf16.mxu0 0
        %1154 = vmatpush1.bf16.msra.mxu0 %v1050
        %1155 = vmatprep.subr.bf16.mxu0 0
        %1156 = vmatpush1.bf16.msra.mxu0 %v1051
        %1157 = vmatprep.subr.bf16.mxu0 0
        %1158 = vmatpush1.bf16.msra.mxu0 0
        %1159 = vmatprep.subr.bf16.mxu0 0
        %1160 = vmatpush1.bf16.msra.mxu0 0
        %1161 = vmatprep.subr.bf16.mxu0 0
        %1162 = vmatpush1.bf16.msra.mxu0 0
        %1163 = vmatprep.subr.bf16.mxu0 0
        %1164 = vmatpush1.bf16.msra.mxu0 0
        %1165 = vmatprep.subr.bf16.mxu0 0
        %1166 = vmatpush1.bf16.msra.mxu0 0
        %1167 = vmatprep.subr.bf16.mxu0 0
        %1168 = vmatpush1.bf16.msra.mxu0 0
        %1169 = vmatprep.subr.bf16.mxu0 0
        %1170 = vmatpush1.bf16.msra.mxu0 0
        %1171 = vmatprep.subr.bf16.mxu0 0
        %1172 = vmatpush1.bf16.msra.mxu0 0
        %1173 = vmatprep.mubr.bf16.mxu0 0
        %1174 = vmatmul.mubr.bf16.gmra.mrb[0].mxu0 %v873
        %v1175 = vpop.f32.mrb[0].mxu0
        %v1176 = vadd.f32 %v1111, %v1175
        %v1177 = vpop.f32.mrb[0].mxu0
        %v1178 = vpop.f32.mrb[0].mxu0
        %v1179 = vadd.f32 %v1114, %v1178
        %v1180 = vpop.f32.mrb[0].mxu0
        %1181 = vmatprep.mubr.bf16.mxu0 0
        %1182 = vmatmul.mubr.bf16.gmra.mrb[0].mxu0 %v876
        %v1183 = vpop.f32.mrb[0].mxu0
        %v1184 = vadd.f32 %v1119, %v1183
        %v1185 = vpop.f32.mrb[0].mxu0
        %v1186 = vpop.f32.mrb[0].mxu0
        %v1187 = vadd.f32 %v1122, %v1186
        %v1188 = vpop.f32.mrb[0].mxu0
        %1189 = vmatprep.mubr.bf16.mxu0 0
        %1190 = vmatmul.mubr.bf16.gmra.mrb[0].mxu0 %v879
        %v1191 = vpop.f32.mrb[0].mxu0
        %v1192 = vadd.f32 %v1127, %v1191
        %v1193 = vpop.f32.mrb[0].mxu0
        %v1194 = vpop.f32.mrb[0].mxu0
        %v1195 = vadd.f32 %v1130, %v1194
        %v1196 = vpop.f32.mrb[0].mxu0
        %1197 = vmatprep.mubr.bf16.mxu0 0
        %1198 = vmatmul.mubr.bf16.gmra.mrb[0].mxu0 %v882
        %v1199 = vpop.f32.mrb[0].mxu0
        %v1200 = vadd.f32 %v1135, %v1199
        %v1201 = vpop.f32.mrb[0].mxu0
        %v1202 = vpop.f32.mrb[0].mxu0
        %v1203 = vadd.f32 %v1138, %v1202
        %v1204 = vpop.f32.mrb[0].mxu0
        %1205 = vdwg.mxu0
        %v1206 = vmax.f32 %v1176, 0.0
        %v1207 = vmax.f32 %v1179, 0.0
        %v1208 = vmax.f32 %v1184, 0.0
        %v1209 = vmax.f32 %v1187, 0.0
        %v1210 = vmax.f32 %v1192, 0.0
        %v1211 = vmax.f32 %v1195, 0.0
        %v1212 = vmax.f32 %v1200, 0.0
        %v1213 = vmax.f32 %v1203, 0.0
        %v1214 = vrot.slane %v1206, 7
        %v1215 = vrot.slane %v1207, 7
        %v1216 = vrot.slane %v1208, 7
        %v1217 = vrot.slane %v1209, 7
        %v1218 = vrot.slane %v1210, 7
        %v1219 = vrot.slane %v1211, 7
        %v1220 = vrot.slane %v1212, 7
        %v1221 = vrot.slane %v1213, 7
        %v1222 = vsel %vm407, %v1220, %v1221
        %v1223 = vsel %vm407, %v1219, %v1220
        %v1224 = vsel %vm407, %v1218, %v1219
        %v1225 = vsel %vm407, %v1217, %v1218
        %v1226 = vsel %vm407, %v1216, %v1217
        %v1227 = vsel %vm407, %v1215, %v1216
        %v1228 = vsel %vm407, %v1214, %v1215
        %v1229 = vsel %vm407, %v1221, %v1214
        %v1230 = vsel %vm424, %v1229, 0.0
        %v1231 = vsel %vm425, %v1228, 0.0
        %v1232 = vsel %vm426, %v1227, 0.0
        %v1233 = vsel %vm427, %v1226, 0.0
        %v1234 = vsel %vm428, %v1225, 0.0
        %v1235 = vsel %vm429, %v1224, 0.0
        %v1236 = vsel %vm430, %v1223, 0.0
        %v1237 = vsel %vm431, %v1222, 0.0
        %v1238 = vrot.slane %v1206, 1
        %v1239 = vrot.slane %v1207, 1
        %v1240 = vrot.slane %v1208, 1
        %v1241 = vrot.slane %v1209, 1
        %v1242 = vrot.slane %v1210, 1
        %v1243 = vrot.slane %v1211, 1
        %v1244 = vrot.slane %v1212, 1
        %v1245 = vrot.slane %v1213, 1
        %v1246 = vsel %vm448, %v1244, %v1245
        %v1247 = vsel %vm448, %v1243, %v1244
        %v1248 = vsel %vm448, %v1242, %v1243
        %v1249 = vsel %vm448, %v1241, %v1242
        %v1250 = vsel %vm448, %v1240, %v1241
        %v1251 = vsel %vm448, %v1239, %v1240
        %v1252 = vsel %vm448, %v1238, %v1239
        %v1253 = vsel %vm448, %v1245, %v1238
        %v1254 = vsel %vm465, %v1252, 0.0
        %v1255 = vsel %vm466, %v1251, 0.0
        %v1256 = vsel %vm467, %v1250, 0.0
        %v1257 = vsel %vm468, %v1249, 0.0
        %v1258 = vsel %vm469, %v1248, 0.0
        %v1259 = vsel %vm470, %v1247, 0.0
        %v1260 = vsel %vm471, %v1246, 0.0
        %v1261 = vsel %vm472, %v1253, 0.0
        %v1262 = vpack.c.bf16 %v1231, %v1230
        %v1263 = vpack.c.bf16 %v1207, %v1206
        %v1264 = vpack.c.bf16 %v1255, %v1254
        %v1265 = vpack.c.bf16 %v1233, %v1232
        %v1266 = vpack.c.bf16 %v1209, %v1208
        %v1267 = vpack.c.bf16 %v1257, %v1256
        %v1268 = vpack.c.bf16 %v1235, %v1234
        %v1269 = vpack.c.bf16 %v1211, %v1210
        %v1270 = vpack.c.bf16 %v1259, %v1258
        %v1271 = vpack.c.bf16 %v1237, %v1236
        %v1272 = vpack.c.bf16 %v1213, %v1212
        %v1273 = vpack.c.bf16 %v1261, %v1260
        %s1274 = scalar_lea.vmem [#allocation3], 384
        %v1275 = vld [vmem:[%s1274] sm:$0xf]
        %v1276 = vld [vmem:[%s1274 + $0x4] sm:$0xf]
        %v1277 = vld [vmem:[%s1274 + $0x8] sm:$0xf]
        %v1278 = vld [vmem:[%s1274 + $0xc] sm:$0xf]
        %v1279 = vld [vmem:[%s1274 + $0x10] sm:$0xf]
        %v1280 = vld [vmem:[%s1274 + $0x14] sm:$0xf]
        %v1281 = vld [vmem:[%s1274 + $0x18] sm:$0xf]
        %v1282 = vld [vmem:[%s1274 + $0x1c] sm:$0xf]
        %v1283 = vld [vmem:[%s1274 + $0x20] sm:$0xf]
        %v1284 = vld [vmem:[%s1274 + $0x24] sm:$0xf]
        %v1285 = vld [vmem:[%s1274 + $0x28] sm:$0xf]
        %v1286 = vld [vmem:[%s1274 + $0x2c] sm:$0xf]
        %v1287 = vld [vmem:[%s1274 + $0x30] sm:$0xf]
        %v1288 = vld [vmem:[%s1274 + $0x34] sm:$0xf]
        %v1289 = vld [vmem:[%s1274 + $0x38] sm:$0xf]
        %v1290 = vld [vmem:[%s1274 + $0x3c] sm:$0xf]
        %v1291 = vld [vmem:[%s1274 + $0x40] sm:$0xf]
        %v1292 = vld [vmem:[%s1274 + $0x44] sm:$0xf]
        %v1293 = vld [vmem:[%s1274 + $0x48] sm:$0xf]
        %v1294 = vld [vmem:[%s1274 + $0x4c] sm:$0xf]
        %v1295 = vld [vmem:[%s1274 + $0x50] sm:$0xf]
        %v1296 = vld [vmem:[%s1274 + $0x54] sm:$0xf]
        %v1297 = vld [vmem:[%s1274 + $0x58] sm:$0xf]
        %v1298 = vld [vmem:[%s1274 + $0x5c] sm:$0xf]
        %v1299 = vld [vmem:[%s1274 + $0x60] sm:$0xf]
        %v1300 = vld [vmem:[%s1274 + $0x64] sm:$0xf]
        %v1301 = vld [vmem:[%s1274 + $0x68] sm:$0xf]
        %v1302 = vld [vmem:[%s1274 + $0x6c] sm:$0xf]
        %v1303 = vld [vmem:[%s1274 + $0x70] sm:$0xf]
        %v1304 = vld [vmem:[%s1274 + $0x74] sm:$0xf]
        %v1305 = vld [vmem:[%s1274 + $0x78] sm:$0xf]
        %v1306 = vld [vmem:[%s1274 + $0x7c] sm:$0xf]
        %v1307 = vld [vmem:[%s1274 + $0x80] sm:$0xf]
        %v1308 = vld [vmem:[%s1274 + $0x84] sm:$0xf]
        %v1309 = vld [vmem:[%s1274 + $0x88] sm:$0xf]
        %v1310 = vld [vmem:[%s1274 + $0x8c] sm:$0xf]
        %v1311 = vld [vmem:[%s1274 + $0x90] sm:$0xf]
        %v1312 = vld [vmem:[%s1274 + $0x94] sm:$0xf]
        %v1313 = vld [vmem:[%s1274 + $0x98] sm:$0xf]
        %v1314 = vld [vmem:[%s1274 + $0x9c] sm:$0xf]
        %v1315 = vld [vmem:[%s1274 + $0xa0] sm:$0xf]
        %v1316 = vld [vmem:[%s1274 + $0xa4] sm:$0xf]
        %v1317 = vld [vmem:[%s1274 + $0xa8] sm:$0xf]
        %v1318 = vld [vmem:[%s1274 + $0xac] sm:$0xf]
        %v1319 = vld [vmem:[%s1274 + $0xb0] sm:$0xf]
        %v1320 = vld [vmem:[%s1274 + $0xb4] sm:$0xf]
        %v1321 = vld [vmem:[%s1274 + $0xb8] sm:$0xf]
        %v1322 = vld [vmem:[%s1274 + $0xbc] sm:$0xf]
        %v1371 = vunpack.c.l.b16 %v1275
        %v1372 = vunpack.c.l.b16 %v1276
        %v1373 = vunpack.c.l.b16 %v1277
        %v1374 = vunpack.c.l.b16 %v1278
        %v1375 = vunpack.c.l.b16 %v1279
        %v1376 = vunpack.c.l.b16 %v1280
        %v1377 = vunpack.c.l.b16 %v1281
        %v1378 = vunpack.c.l.b16 %v1282
        %v1379 = vunpack.c.l.b16 %v1283
        %v1380 = vunpack.c.l.b16 %v1284
        %v1381 = vunpack.c.l.b16 %v1285
        %v1382 = vunpack.c.l.b16 %v1286
        %v1383 = vunpack.c.l.b16 %v1287
        %v1384 = vunpack.c.l.b16 %v1288
        %v1385 = vunpack.c.l.b16 %v1289
        %v1386 = vunpack.c.l.b16 %v1290
        %v1387 = vunpack.c.l.b16 %v1291
        %v1388 = vunpack.c.l.b16 %v1292
        %v1389 = vunpack.c.l.b16 %v1293
        %v1390 = vunpack.c.l.b16 %v1294
        %v1391 = vunpack.c.l.b16 %v1295
        %v1392 = vunpack.c.l.b16 %v1296
        %v1393 = vunpack.c.l.b16 %v1297
        %v1394 = vunpack.c.l.b16 %v1298
        %v1395 = vunpack.c.l.b16 %v1299
        %v1396 = vunpack.c.l.b16 %v1300
        %v1397 = vunpack.c.l.b16 %v1301
        %v1398 = vunpack.c.l.b16 %v1302
        %v1399 = vunpack.c.l.b16 %v1303
        %v1400 = vunpack.c.l.b16 %v1304
        %v1401 = vunpack.c.l.b16 %v1305
        %v1402 = vunpack.c.l.b16 %v1306
        %v1403 = vunpack.c.l.b16 %v1307
        %v1404 = vunpack.c.l.b16 %v1308
        %v1405 = vunpack.c.l.b16 %v1309
        %v1406 = vunpack.c.l.b16 %v1310
        %v1407 = vunpack.c.l.b16 %v1311
        %v1408 = vunpack.c.l.b16 %v1312
        %v1409 = vunpack.c.l.b16 %v1313
        %v1410 = vunpack.c.l.b16 %v1314
        %v1411 = vunpack.c.l.b16 %v1315
        %v1412 = vunpack.c.l.b16 %v1316
        %v1413 = vunpack.c.l.b16 %v1317
        %v1414 = vunpack.c.l.b16 %v1318
        %v1415 = vunpack.c.l.b16 %v1319
        %v1416 = vunpack.c.l.b16 %v1320
        %v1417 = vunpack.c.l.b16 %v1321
        %v1418 = vunpack.c.l.b16 %v1322
        %v1419 = vpack.c.b16 %v1372, %v1371
        %v1420 = vpack.c.b16 %v1374, %v1373
        %v1421 = vpack.c.b16 %v1376, %v1375
        %v1422 = vpack.c.b16 %v1378, %v1377
        %v1423 = vpack.c.b16 %v1380, %v1379
        %v1424 = vpack.c.b16 %v1382, %v1381
        %v1425 = vpack.c.b16 %v1384, %v1383
        %v1426 = vpack.c.b16 %v1386, %v1385
        %v1427 = vpack.c.b16 %v1388, %v1387
        %v1428 = vpack.c.b16 %v1390, %v1389
        %v1429 = vpack.c.b16 %v1392, %v1391
        %v1430 = vpack.c.b16 %v1394, %v1393
        %v1431 = vpack.c.b16 %v1396, %v1395
        %v1432 = vpack.c.b16 %v1398, %v1397
        %v1433 = vpack.c.b16 %v1400, %v1399
        %v1434 = vpack.c.b16 %v1402, %v1401
        %v1435 = vpack.c.b16 %v1404, %v1403
        %v1436 = vpack.c.b16 %v1406, %v1405
        %v1437 = vpack.c.b16 %v1408, %v1407
        %v1438 = vpack.c.b16 %v1410, %v1409
        %v1439 = vpack.c.b16 %v1412, %v1411
        %v1440 = vpack.c.b16 %v1414, %v1413
        %v1441 = vpack.c.b16 %v1416, %v1415
        %v1442 = vpack.c.b16 %v1418, %v1417
        %1467 = vmatprep.subr.bf16.mxu0 0
        %1468 = vmatpush1.bf16.msra.mxu0 %v1419
        %1469 = vmatprep.subr.bf16.mxu0 0
        %1470 = vmatpush1.bf16.msra.mxu0 %v1420
        %1471 = vmatprep.subr.bf16.mxu0 0
        %1472 = vmatpush1.bf16.msra.mxu0 %v1421
        %1473 = vmatprep.subr.bf16.mxu0 0
        %1474 = vmatpush1.bf16.msra.mxu0 %v1422
        %1475 = vmatprep.subr.bf16.mxu0 0
        %1476 = vmatpush1.bf16.msra.mxu0 %v1423
        %1477 = vmatprep.subr.bf16.mxu0 0
        %1478 = vmatpush1.bf16.msra.mxu0 %v1424
        %1479 = vmatprep.subr.bf16.mxu0 0
        %1480 = vmatpush1.bf16.msra.mxu0 %v1425
        %1481 = vmatprep.subr.bf16.mxu0 0
        %1482 = vmatpush1.bf16.msra.mxu0 %v1426
        %1483 = vmatprep.subr.bf16.mxu0 0
        %1484 = vmatpush1.bf16.msra.mxu0 %v1427
        %1485 = vmatprep.subr.bf16.mxu0 0
        %1486 = vmatpush1.bf16.msra.mxu0 %v1428
        %1487 = vmatprep.subr.bf16.mxu0 0
        %1488 = vmatpush1.bf16.msra.mxu0 %v1429
        %1489 = vmatprep.subr.bf16.mxu0 0
        %1490 = vmatpush1.bf16.msra.mxu0 %v1430
        %1491 = vmatprep.subr.bf16.mxu0 0
        %1492 = vmatpush1.bf16.msra.mxu0 %v1431
        %1493 = vmatprep.subr.bf16.mxu0 0
        %1494 = vmatpush1.bf16.msra.mxu0 %v1432
        %1495 = vmatprep.subr.bf16.mxu0 0
        %1496 = vmatpush1.bf16.msra.mxu0 %v1433
        %1497 = vmatprep.subr.bf16.mxu0 0
        %1498 = vmatpush1.bf16.msra.mxu0 %v1434
        %1499 = vmatprep.mubr.bf16.mxu0 %v1263
        %1500 = vmatmul.mubr.bf16.gmra.mrb[0].mxu0 %v1262
        %v1501 = vpop.f32.mrb[0].mxu0
        %v1502 = vadd.f32 0.0, %v1501
        %v1503 = vpop.f32.mrb[0].mxu0
        %v1504 = vpop.f32.mrb[0].mxu0
        %v1505 = vadd.f32 0.0, %v1504
        %v1506 = vpop.f32.mrb[0].mxu0
        %1507 = vmatprep.mubr.bf16.mxu0 %v1266
        %1508 = vmatmul.mubr.bf16.gmra.mrb[0].mxu0 %v1265
        %v1509 = vpop.f32.mrb[0].mxu0
        %v1510 = vadd.f32 0.0, %v1509
        %v1511 = vpop.f32.mrb[0].mxu0
        %v1512 = vpop.f32.mrb[0].mxu0
        %v1513 = vadd.f32 0.0, %v1512
        %v1514 = vpop.f32.mrb[0].mxu0
        %1515 = vmatprep.mubr.bf16.mxu0 %v1269
        %1516 = vmatmul.mubr.bf16.gmra.mrb[0].mxu0 %v1268
        %v1517 = vpop.f32.mrb[0].mxu0
        %v1518 = vadd.f32 0.0, %v1517
        %v1519 = vpop.f32.mrb[0].mxu0
        %v1520 = vpop.f32.mrb[0].mxu0
        %v1521 = vadd.f32 0.0, %v1520
        %v1522 = vpop.f32.mrb[0].mxu0
        %1523 = vmatprep.mubr.bf16.mxu0 %v1272
        %1524 = vmatmul.mubr.bf16.gmra.mrb[0].mxu0 %v1271
        %v1525 = vpop.f32.mrb[0].mxu0
        %v1526 = vadd.f32 0.0, %v1525
        %v1527 = vpop.f32.mrb[0].mxu0
        %v1528 = vpop.f32.mrb[0].mxu0
        %v1529 = vadd.f32 0.0, %v1528
        %v1530 = vpop.f32.mrb[0].mxu0
        %1531 = vdwg.mxu0
        %1532 = vmatprep.subr.bf16.mxu0 0
        %1533 = vmatpush1.bf16.msra.mxu0 %v1435
        %1534 = vmatprep.subr.bf16.mxu0 0
        %1535 = vmatpush1.bf16.msra.mxu0 %v1436
        %1536 = vmatprep.subr.bf16.mxu0 0
        %1537 = vmatpush1.bf16.msra.mxu0 %v1437
        %1538 = vmatprep.subr.bf16.mxu0 0
        %1539 = vmatpush1.bf16.msra.mxu0 %v1438
        %1540 = vmatprep.subr.bf16.mxu0 0
        %1541 = vmatpush1.bf16.msra.mxu0 %v1439
        %1542 = vmatprep.subr.bf16.mxu0 0
        %1543 = vmatpush1.bf16.msra.mxu0 %v1440
        %1544 = vmatprep.subr.bf16.mxu0 0
        %1545 = vmatpush1.bf16.msra.mxu0 %v1441
        %1546 = vmatprep.subr.bf16.mxu0 0
        %1547 = vmatpush1.bf16.msra.mxu0 %v1442
        %1548 = vmatprep.subr.bf16.mxu0 0
        %1549 = vmatpush1.bf16.msra.mxu0 0
        %1550 = vmatprep.subr.bf16.mxu0 0
        %1551 = vmatpush1.bf16.msra.mxu0 0
        %1552 = vmatprep.subr.bf16.mxu0 0
        %1553 = vmatpush1.bf16.msra.mxu0 0
        %1554 = vmatprep.subr.bf16.mxu0 0
        %1555 = vmatpush1.bf16.msra.mxu0 0
        %1556 = vmatprep.subr.bf16.mxu0 0
        %1557 = vmatpush1.bf16.msra.mxu0 0
        %1558 = vmatprep.subr.bf16.mxu0 0
        %1559 = vmatpush1.bf16.msra.mxu0 0
        %1560 = vmatprep.subr.bf16.mxu0 0
        %1561 = vmatpush1.bf16.msra.mxu0 0
        %1562 = vmatprep.subr.bf16.mxu0 0
        %1563 = vmatpush1.bf16.msra.mxu0 0
        %1564 = vmatprep.mubr.bf16.mxu0 0
        %1565 = vmatmul.mubr.bf16.gmra.mrb[0].mxu0 %v1264
        %v1566 = vpop.f32.mrb[0].mxu0
        %v1567 = vadd.f32 %v1502, %v1566
        %v1568 = vpop.f32.mrb[0].mxu0
        %v1569 = vpop.f32.mrb[0].mxu0
        %v1570 = vadd.f32 %v1505, %v1569
        %v1571 = vpop.f32.mrb[0].mxu0
        %1572 = vmatprep.mubr.bf16.mxu0 0
        %1573 = vmatmul.mubr.bf16.gmra.mrb[0].mxu0 %v1267
        %v1574 = vpop.f32.mrb[0].mxu0
        %v1575 = vadd.f32 %v1510, %v1574
        %v1576 = vpop.f32.mrb[0].mxu0
        %v1577 = vpop.f32.mrb[0].mxu0
        %v1578 = vadd.f32 %v1513, %v1577
        %v1579 = vpop.f32.mrb[0].mxu0
        %1580 = vmatprep.mubr.bf16.mxu0 0
        %1581 = vmatmul.mubr.bf16.gmra.mrb[0].mxu0 %v1270
        %v1582 = vpop.f32.mrb[0].mxu0
        %v1583 = vadd.f32 %v1518, %v1582
        %v1584 = vpop.f32.mrb[0].mxu0
        %v1585 = vpop.f32.mrb[0].mxu0
        %v1586 = vadd.f32 %v1521, %v1585
        %v1587 = vpop.f32.mrb[0].mxu0
        %1588 = vmatprep.mubr.bf16.mxu0 0
        %1589 = vmatmul.mubr.bf16.gmra.mrb[0].mxu0 %v1273
        %v1590 = vpop.f32.mrb[0].mxu0
        %v1591 = vadd.f32 %v1526, %v1590
        %v1592 = vpop.f32.mrb[0].mxu0
        %v1593 = vpop.f32.mrb[0].mxu0
        %v1594 = vadd.f32 %v1529, %v1593
        %v1595 = vpop.f32.mrb[0].mxu0
        %1596 = vdwg.mxu0
        %v1597 = vmax.f32 %v1567, 0.0
        %v1598 = vmax.f32 %v1570, 0.0
        %v1599 = vmax.f32 %v1575, 0.0
        %v1600 = vmax.f32 %v1578, 0.0
        %v1601 = vmax.f32 %v1583, 0.0
        %v1602 = vmax.f32 %v1586, 0.0
        %v1603 = vmax.f32 %v1591, 0.0
        %v1604 = vmax.f32 %v1594, 0.0
        %v1605 = vrot.slane %v1597, 7
        %v1606 = vrot.slane %v1598, 7
        %v1607 = vrot.slane %v1599, 7
        %v1608 = vrot.slane %v1600, 7
        %v1609 = vrot.slane %v1601, 7
        %v1610 = vrot.slane %v1602, 7
        %v1611 = vrot.slane %v1603, 7
        %v1612 = vrot.slane %v1604, 7
        %v1613 = vsel %vm407, %v1611, %v1612
        %v1614 = vsel %vm407, %v1610, %v1611
        %v1615 = vsel %vm407, %v1609, %v1610
        %v1616 = vsel %vm407, %v1608, %v1609
        %v1617 = vsel %vm407, %v1607, %v1608
        %v1618 = vsel %vm407, %v1606, %v1607
        %v1619 = vsel %vm407, %v1605, %v1606
        %v1620 = vsel %vm407, %v1612, %v1605
        %v1621 = vsel %vm424, %v1620, 0.0
        %v1622 = vsel %vm425, %v1619, 0.0
        %v1623 = vsel %vm426, %v1618, 0.0
        %v1624 = vsel %vm427, %v1617, 0.0
        %v1625 = vsel %vm428, %v1616, 0.0
        %v1626 = vsel %vm429, %v1615, 0.0
        %v1627 = vsel %vm430, %v1614, 0.0
        %v1628 = vsel %vm431, %v1613, 0.0
        %v1629 = vrot.slane %v1597, 1
        %v1630 = vrot.slane %v1598, 1
        %v1631 = vrot.slane %v1599, 1
        %v1632 = vrot.slane %v1600, 1
        %v1633 = vrot.slane %v1601, 1
        %v1634 = vrot.slane %v1602, 1
        %v1635 = vrot.slane %v1603, 1
        %v1636 = vrot.slane %v1604, 1
        %v1637 = vsel %vm448, %v1635, %v1636
        %v1638 = vsel %vm448, %v1634, %v1635
        %v1639 = vsel %vm448, %v1633, %v1634
        %v1640 = vsel %vm448, %v1632, %v1633
        %v1641 = vsel %vm448, %v1631, %v1632
        %v1642 = vsel %vm448, %v1630, %v1631
        %v1643 = vsel %vm448, %v1629, %v1630
        %v1644 = vsel %vm448, %v1636, %v1629
        %v1645 = vsel %vm465, %v1643, 0.0
        %v1646 = vsel %vm466, %v1642, 0.0
        %v1647 = vsel %vm467, %v1641, 0.0
        %v1648 = vsel %vm468, %v1640, 0.0
        %v1649 = vsel %vm469, %v1639, 0.0
        %v1650 = vsel %vm470, %v1638, 0.0
        %v1651 = vsel %vm471, %v1637, 0.0
        %v1652 = vsel %vm472, %v1644, 0.0
        %v1653 = vpack.c.bf16 %v1622, %v1621
        %v1654 = vpack.c.bf16 %v1598, %v1597
        %v1655 = vpack.c.bf16 %v1646, %v1645
        %v1656 = vpack.c.bf16 %v1624, %v1623
        %v1657 = vpack.c.bf16 %v1600, %v1599
        %v1658 = vpack.c.bf16 %v1648, %v1647
        %v1659 = vpack.c.bf16 %v1626, %v1625
        %v1660 = vpack.c.bf16 %v1602, %v1601
        %v1661 = vpack.c.bf16 %v1650, %v1649
        %v1662 = vpack.c.bf16 %v1628, %v1627
        %v1663 = vpack.c.bf16 %v1604, %v1603
        %v1664 = vpack.c.bf16 %v1652, %v1651
        %s1665 = scalar_lea.vmem [#allocation3], 576
        %v1666 = vld [vmem:[%s1665] sm:$0xf]
        %v1667 = vld [vmem:[%s1665 + $0x4] sm:$0xf]
        %v1668 = vld [vmem:[%s1665 + $0x8] sm:$0xf]
        %v1669 = vld [vmem:[%s1665 + $0xc] sm:$0xf]
        %v1670 = vld [vmem:[%s1665 + $0x10] sm:$0xf]
        %v1671 = vld [vmem:[%s1665 + $0x14] sm:$0xf]
        %v1672 = vld [vmem:[%s1665 + $0x18] sm:$0xf]
        %v1673 = vld [vmem:[%s1665 + $0x1c] sm:$0xf]
        %v1674 = vld [vmem:[%s1665 + $0x20] sm:$0xf]
        %v1675 = vld [vmem:[%s1665 + $0x24] sm:$0xf]
        %v1676 = vld [vmem:[%s1665 + $0x28] sm:$0xf]
        %v1677 = vld [vmem:[%s1665 + $0x2c] sm:$0xf]
        %v1678 = vld [vmem:[%s1665 + $0x30] sm:$0xf]
        %v1679 = vld [vmem:[%s1665 + $0x34] sm:$0xf]
        %v1680 = vld [vmem:[%s1665 + $0x38] sm:$0xf]
        %v1681 = vld [vmem:[%s1665 + $0x3c] sm:$0xf]
        %v1682 = vld [vmem:[%s1665 + $0x40] sm:$0xf]
        %v1683 = vld [vmem:[%s1665 + $0x44] sm:$0xf]
        %v1684 = vld [vmem:[%s1665 + $0x48] sm:$0xf]
        %v1685 = vld [vmem:[%s1665 + $0x4c] sm:$0xf]
        %v1686 = vld [vmem:[%s1665 + $0x50] sm:$0xf]
        %v1687 = vld [vmem:[%s1665 + $0x54] sm:$0xf]
        %v1688 = vld [vmem:[%s1665 + $0x58] sm:$0xf]
        %v1689 = vld [vmem:[%s1665 + $0x5c] sm:$0xf]
        %v1690 = vld [vmem:[%s1665 + $0x60] sm:$0xf]
        %v1691 = vld [vmem:[%s1665 + $0x64] sm:$0xf]
        %v1692 = vld [vmem:[%s1665 + $0x68] sm:$0xf]
        %v1693 = vld [vmem:[%s1665 + $0x6c] sm:$0xf]
        %v1694 = vld [vmem:[%s1665 + $0x70] sm:$0xf]
        %v1695 = vld [vmem:[%s1665 + $0x74] sm:$0xf]
        %v1696 = vld [vmem:[%s1665 + $0x78] sm:$0xf]
        %v1697 = vld [vmem:[%s1665 + $0x7c] sm:$0xf]
        %v1698 = vld [vmem:[%s1665 + $0x80] sm:$0xf]
        %v1699 = vld [vmem:[%s1665 + $0x84] sm:$0xf]
        %v1700 = vld [vmem:[%s1665 + $0x88] sm:$0xf]
        %v1701 = vld [vmem:[%s1665 + $0x8c] sm:$0xf]
        %v1702 = vld [vmem:[%s1665 + $0x90] sm:$0xf]
        %v1703 = vld [vmem:[%s1665 + $0x94] sm:$0xf]
        %v1704 = vld [vmem:[%s1665 + $0x98] sm:$0xf]
        %v1705 = vld [vmem:[%s1665 + $0x9c] sm:$0xf]
        %v1706 = vld [vmem:[%s1665 + $0xa0] sm:$0xf]
        %v1707 = vld [vmem:[%s1665 + $0xa4] sm:$0xf]
        %v1708 = vld [vmem:[%s1665 + $0xa8] sm:$0xf]
        %v1709 = vld [vmem:[%s1665 + $0xac] sm:$0xf]
        %v1710 = vld [vmem:[%s1665 + $0xb0] sm:$0xf]
        %v1711 = vld [vmem:[%s1665 + $0xb4] sm:$0xf]
        %v1712 = vld [vmem:[%s1665 + $0xb8] sm:$0xf]
        %v1713 = vld [vmem:[%s1665 + $0xbc] sm:$0xf]
        %v1762 = vunpack.c.l.b16 %v1666
        %v1763 = vunpack.c.l.b16 %v1667
        %v1764 = vunpack.c.l.b16 %v1668
        %v1765 = vunpack.c.l.b16 %v1669
        %v1766 = vunpack.c.l.b16 %v1670
        %v1767 = vunpack.c.l.b16 %v1671
        %v1768 = vunpack.c.l.b16 %v1672
        %v1769 = vunpack.c.l.b16 %v1673
        %v1770 = vunpack.c.l.b16 %v1674
        %v1771 = vunpack.c.l.b16 %v1675
        %v1772 = vunpack.c.l.b16 %v1676
        %v1773 = vunpack.c.l.b16 %v1677
        %v1774 = vunpack.c.l.b16 %v1678
        %v1775 = vunpack.c.l.b16 %v1679
        %v1776 = vunpack.c.l.b16 %v1680
        %v1777 = vunpack.c.l.b16 %v1681
        %v1778 = vunpack.c.l.b16 %v1682
        %v1779 = vunpack.c.l.b16 %v1683
        %v1780 = vunpack.c.l.b16 %v1684
        %v1781 = vunpack.c.l.b16 %v1685
        %v1782 = vunpack.c.l.b16 %v1686
        %v1783 = vunpack.c.l.b16 %v1687
        %v1784 = vunpack.c.l.b16 %v1688
        %v1785 = vunpack.c.l.b16 %v1689
        %v1786 = vunpack.c.l.b16 %v1690
        %v1787 = vunpack.c.l.b16 %v1691
        %v1788 = vunpack.c.l.b16 %v1692
        %v1789 = vunpack.c.l.b16 %v1693
        %v1790 = vunpack.c.l.b16 %v1694
        %v1791 = vunpack.c.l.b16 %v1695
        %v1792 = vunpack.c.l.b16 %v1696
        %v1793 = vunpack.c.l.b16 %v1697
        %v1794 = vunpack.c.l.b16 %v1698
        %v1795 = vunpack.c.l.b16 %v1699
        %v1796 = vunpack.c.l.b16 %v1700
        %v1797 = vunpack.c.l.b16 %v1701
        %v1798 = vunpack.c.l.b16 %v1702
        %v1799 = vunpack.c.l.b16 %v1703
        %v1800 = vunpack.c.l.b16 %v1704
        %v1801 = vunpack.c.l.b16 %v1705
        %v1802 = vunpack.c.l.b16 %v1706
        %v1803 = vunpack.c.l.b16 %v1707
        %v1804 = vunpack.c.l.b16 %v1708
        %v1805 = vunpack.c.l.b16 %v1709
        %v1806 = vunpack.c.l.b16 %v1710
        %v1807 = vunpack.c.l.b16 %v1711
        %v1808 = vunpack.c.l.b16 %v1712
        %v1809 = vunpack.c.l.b16 %v1713
        %v1810 = vpack.c.b16 %v1763, %v1762
        %v1811 = vpack.c.b16 %v1765, %v1764
        %v1812 = vpack.c.b16 %v1767, %v1766
        %v1813 = vpack.c.b16 %v1769, %v1768
        %v1814 = vpack.c.b16 %v1771, %v1770
        %v1815 = vpack.c.b16 %v1773, %v1772
        %v1816 = vpack.c.b16 %v1775, %v1774
        %v1817 = vpack.c.b16 %v1777, %v1776
        %v1818 = vpack.c.b16 %v1779, %v1778
        %v1819 = vpack.c.b16 %v1781, %v1780
        %v1820 = vpack.c.b16 %v1783, %v1782
        %v1821 = vpack.c.b16 %v1785, %v1784
        %v1822 = vpack.c.b16 %v1787, %v1786
        %v1823 = vpack.c.b16 %v1789, %v1788
        %v1824 = vpack.c.b16 %v1791, %v1790
        %v1825 = vpack.c.b16 %v1793, %v1792
        %v1826 = vpack.c.b16 %v1795, %v1794
        %v1827 = vpack.c.b16 %v1797, %v1796
        %v1828 = vpack.c.b16 %v1799, %v1798
        %v1829 = vpack.c.b16 %v1801, %v1800
        %v1830 = vpack.c.b16 %v1803, %v1802
        %v1831 = vpack.c.b16 %v1805, %v1804
        %v1832 = vpack.c.b16 %v1807, %v1806
        %v1833 = vpack.c.b16 %v1809, %v1808
        %1858 = vmatprep.subr.bf16.mxu0 0
        %1859 = vmatpush1.bf16.msra.mxu0 %v1810
        %1860 = vmatprep.subr.bf16.mxu0 0
        %1861 = vmatpush1.bf16.msra.mxu0 %v1811
        %1862 = vmatprep.subr.bf16.mxu0 0
        %1863 = vmatpush1.bf16.msra.mxu0 %v1812
        %1864 = vmatprep.subr.bf16.mxu0 0
        %1865 = vmatpush1.bf16.msra.mxu0 %v1813
        %1866 = vmatprep.subr.bf16.mxu0 0
        %1867 = vmatpush1.bf16.msra.mxu0 %v1814
        %1868 = vmatprep.subr.bf16.mxu0 0
        %1869 = vmatpush1.bf16.msra.mxu0 %v1815
        %1870 = vmatprep.subr.bf16.mxu0 0
        %1871 = vmatpush1.bf16.msra.mxu0 %v1816
        %1872 = vmatprep.subr.bf16.mxu0 0
        %1873 = vmatpush1.bf16.msra.mxu0 %v1817
        %1874 = vmatprep.subr.bf16.mxu0 0
        %1875 = vmatpush1.bf16.msra.mxu0 %v1818
        %1876 = vmatprep.subr.bf16.mxu0 0
        %1877 = vmatpush1.bf16.msra.mxu0 %v1819
        %1878 = vmatprep.subr.bf16.mxu0 0
        %1879 = vmatpush1.bf16.msra.mxu0 %v1820
        %1880 = vmatprep.subr.bf16.mxu0 0
        %1881 = vmatpush1.bf16.msra.mxu0 %v1821
        %1882 = vmatprep.subr.bf16.mxu0 0
        %1883 = vmatpush1.bf16.msra.mxu0 %v1822
        %1884 = vmatprep.subr.bf16.mxu0 0
        %1885 = vmatpush1.bf16.msra.mxu0 %v1823
        %1886 = vmatprep.subr.bf16.mxu0 0
        %1887 = vmatpush1.bf16.msra.mxu0 %v1824
        %1888 = vmatprep.subr.bf16.mxu0 0
        %1889 = vmatpush1.bf16.msra.mxu0 %v1825
        %1890 = vmatprep.mubr.bf16.mxu0 %v1654
        %1891 = vmatmul.mubr.bf16.gmra.mrb[0].mxu0 %v1653
        %v1892 = vpop.f32.mrb[0].mxu0
        %v1893 = vadd.f32 0.0, %v1892
        %v1894 = vpop.f32.mrb[0].mxu0
        %v1895 = vpop.f32.mrb[0].mxu0
        %v1896 = vadd.f32 0.0, %v1895
        %v1897 = vpop.f32.mrb[0].mxu0
        %1898 = vmatprep.mubr.bf16.mxu0 %v1657
        %1899 = vmatmul.mubr.bf16.gmra.mrb[0].mxu0 %v1656
        %v1900 = vpop.f32.mrb[0].mxu0
        %v1901 = vadd.f32 0.0, %v1900
        %v1902 = vpop.f32.mrb[0].mxu0
        %v1903 = vpop.f32.mrb[0].mxu0
        %v1904 = vadd.f32 0.0, %v1903
        %v1905 = vpop.f32.mrb[0].mxu0
        %1906 = vmatprep.mubr.bf16.mxu0 %v1660
        %1907 = vmatmul.mubr.bf16.gmra.mrb[0].mxu0 %v1659
        %v1908 = vpop.f32.mrb[0].mxu0
        %v1909 = vadd.f32 0.0, %v1908
        %v1910 = vpop.f32.mrb[0].mxu0
        %v1911 = vpop.f32.mrb[0].mxu0
        %v1912 = vadd.f32 0.0, %v1911
        %v1913 = vpop.f32.mrb[0].mxu0
        %1914 = vmatprep.mubr.bf16.mxu0 %v1663
        %1915 = vmatmul.mubr.bf16.gmra.mrb[0].mxu0 %v1662
        %v1916 = vpop.f32.mrb[0].mxu0
        %v1917 = vadd.f32 0.0, %v1916
        %v1918 = vpop.f32.mrb[0].mxu0
        %v1919 = vpop.f32.mrb[0].mxu0
        %v1920 = vadd.f32 0.0, %v1919
        %v1921 = vpop.f32.mrb[0].mxu0
        %1922 = vdwg.mxu0
        %1923 = vmatprep.subr.bf16.mxu0 0
        %1924 = vmatpush1.bf16.msra.mxu0 %v1826
        %1925 = vmatprep.subr.bf16.mxu0 0
        %1926 = vmatpush1.bf16.msra.mxu0 %v1827
        %1927 = vmatprep.subr.bf16.mxu0 0
        %1928 = vmatpush1.bf16.msra.mxu0 %v1828
        %1929 = vmatprep.subr.bf16.mxu0 0
        %1930 = vmatpush1.bf16.msra.mxu0 %v1829
        %1931 = vmatprep.subr.bf16.mxu0 0
        %1932 = vmatpush1.bf16.msra.mxu0 %v1830
        %1933 = vmatprep.subr.bf16.mxu0 0
        %1934 = vmatpush1.bf16.msra.mxu0 %v1831
        %1935 = vmatprep.subr.bf16.mxu0 0
        %1936 = vmatpush1.bf16.msra.mxu0 %v1832
        %1937 = vmatprep.subr.bf16.mxu0 0
        %1938 = vmatpush1.bf16.msra.mxu0 %v1833
        %1939 = vmatprep.subr.bf16.mxu0 0
        %1940 = vmatpush1.bf16.msra.mxu0 0
        %1941 = vmatprep.subr.bf16.mxu0 0
        %1942 = vmatpush1.bf16.msra.mxu0 0
        %1943 = vmatprep.subr.bf16.mxu0 0
        %1944 = vmatpush1.bf16.msra.mxu0 0
        %1945 = vmatprep.subr.bf16.mxu0 0
        %1946 = vmatpush1.bf16.msra.mxu0 0
        %1947 = vmatprep.subr.bf16.mxu0 0
        %1948 = vmatpush1.bf16.msra.mxu0 0
        %1949 = vmatprep.subr.bf16.mxu0 0
        %1950 = vmatpush1.bf16.msra.mxu0 0
        %1951 = vmatprep.subr.bf16.mxu0 0
        %1952 = vmatpush1.bf16.msra.mxu0 0
        %1953 = vmatprep.subr.bf16.mxu0 0
        %1954 = vmatpush1.bf16.msra.mxu0 0
        %1955 = vmatprep.mubr.bf16.mxu0 0
        %1956 = vmatmul.mubr.bf16.gmra.mrb[0].mxu0 %v1655
        %v1957 = vpop.f32.mrb[0].mxu0
        %v1958 = vadd.f32 %v1893, %v1957
        %v1959 = vpop.f32.mrb[0].mxu0
        %v1960 = vpop.f32.mrb[0].mxu0
        %v1961 = vadd.f32 %v1896, %v1960
        %v1962 = vpop.f32.mrb[0].mxu0
        %1963 = vmatprep.mubr.bf16.mxu0 0
        %1964 = vmatmul.mubr.bf16.gmra.mrb[0].mxu0 %v1658
        %v1965 = vpop.f32.mrb[0].mxu0
        %v1966 = vadd.f32 %v1901, %v1965
        %v1967 = vpop.f32.mrb[0].mxu0
        %v1968 = vpop.f32.mrb[0].mxu0
        %v1969 = vadd.f32 %v1904, %v1968
        %v1970 = vpop.f32.mrb[0].mxu0
        %1971 = vmatprep.mubr.bf16.mxu0 0
        %1972 = vmatmul.mubr.bf16.gmra.mrb[0].mxu0 %v1661
        %v1973 = vpop.f32.mrb[0].mxu0
        %v1974 = vadd.f32 %v1909, %v1973
        %v1975 = vpop.f32.mrb[0].mxu0
        %v1976 = vpop.f32.mrb[0].mxu0
        %v1977 = vadd.f32 %v1912, %v1976
        %v1978 = vpop.f32.mrb[0].mxu0
        %1979 = vmatprep.mubr.bf16.mxu0 0
        %1980 = vmatmul.mubr.bf16.gmra.mrb[0].mxu0 %v1664
        %v1981 = vpop.f32.mrb[0].mxu0
        %v1982 = vadd.f32 %v1917, %v1981
        %v1983 = vpop.f32.mrb[0].mxu0
        %v1984 = vpop.f32.mrb[0].mxu0
        %v1985 = vadd.f32 %v1920, %v1984
        %v1986 = vpop.f32.mrb[0].mxu0
        %1987 = vdwg.mxu0
        %v1988 = vmax.f32 %v1958, 0.0
        %v1989 = vmax.f32 %v1961, 0.0
        %v1990 = vmax.f32 %v1966, 0.0
        %v1991 = vmax.f32 %v1969, 0.0
        %v1992 = vmax.f32 %v1974, 0.0
        %v1993 = vmax.f32 %v1977, 0.0
        %v1994 = vmax.f32 %v1982, 0.0
        %v1995 = vmax.f32 %v1985, 0.0
        %v1996 = vrot.slane %v1988, 7
        %v1997 = vrot.slane %v1989, 7
        %v1998 = vrot.slane %v1990, 7
        %v1999 = vrot.slane %v1991, 7
        %v2000 = vrot.slane %v1992, 7
        %v2001 = vrot.slane %v1993, 7
        %v2002 = vrot.slane %v1994, 7
        %v2003 = vrot.slane %v1995, 7
        %v2004 = vsel %vm407, %v2002, %v2003
        %v2005 = vsel %vm407, %v2001, %v2002
        %v2006 = vsel %vm407, %v2000, %v2001
        %v2007 = vsel %vm407, %v1999, %v2000
        %v2008 = vsel %vm407, %v1998, %v1999
        %v2009 = vsel %vm407, %v1997, %v1998
        %v2010 = vsel %vm407, %v1996, %v1997
        %v2011 = vsel %vm407, %v2003, %v1996
        %v2012 = vsel %vm424, %v2011, 0.0
        %v2013 = vsel %vm425, %v2010, 0.0
        %v2014 = vsel %vm426, %v2009, 0.0
        %v2015 = vsel %vm427, %v2008, 0.0
        %v2016 = vsel %vm428, %v2007, 0.0
        %v2017 = vsel %vm429, %v2006, 0.0
        %v2018 = vsel %vm430, %v2005, 0.0
        %v2019 = vsel %vm431, %v2004, 0.0
        %v2020 = vrot.slane %v1988, 1
        %v2021 = vrot.slane %v1989, 1
        %v2022 = vrot.slane %v1990, 1
        %v2023 = vrot.slane %v1991, 1
        %v2024 = vrot.slane %v1992, 1
        %v2025 = vrot.slane %v1993, 1
        %v2026 = vrot.slane %v1994, 1
        %v2027 = vrot.slane %v1995, 1
        %v2028 = vsel %vm448, %v2026, %v2027
        %v2029 = vsel %vm448, %v2025, %v2026
        %v2030 = vsel %vm448, %v2024, %v2025
        %v2031 = vsel %vm448, %v2023, %v2024
        %v2032 = vsel %vm448, %v2022, %v2023
        %v2033 = vsel %vm448, %v2021, %v2022
        %v2034 = vsel %vm448, %v2020, %v2021
        %v2035 = vsel %vm448, %v2027, %v2020
        %v2036 = vsel %vm465, %v2034, 0.0
        %v2037 = vsel %vm466, %v2033, 0.0
        %v2038 = vsel %vm467, %v2032, 0.0
        %v2039 = vsel %vm468, %v2031, 0.0
        %v2040 = vsel %vm469, %v2030, 0.0
        %v2041 = vsel %vm470, %v2029, 0.0
        %v2042 = vsel %vm471, %v2028, 0.0
        %v2043 = vsel %vm472, %v2035, 0.0
        %v2044 = vpack.c.bf16 %v2013, %v2012
        %v2045 = vpack.c.bf16 %v1989, %v1988
        %v2046 = vpack.c.bf16 %v2037, %v2036
        %v2047 = vpack.c.bf16 %v2015, %v2014
        %v2048 = vpack.c.bf16 %v1991, %v1990
        %v2049 = vpack.c.bf16 %v2039, %v2038
        %v2050 = vpack.c.bf16 %v2017, %v2016
        %v2051 = vpack.c.bf16 %v1993, %v1992
        %v2052 = vpack.c.bf16 %v2041, %v2040
        %v2053 = vpack.c.bf16 %v2019, %v2018
        %v2054 = vpack.c.bf16 %v1995, %v1994
        %v2055 = vpack.c.bf16 %v2043, %v2042
        %s2056 = scalar_lea.vmem [#allocation3], 768
        %v2057 = vld [vmem:[%s2056] sm:$0xf]
        %v2058 = vld [vmem:[%s2056 + $0x4] sm:$0xf]
        %v2059 = vld [vmem:[%s2056 + $0x8] sm:$0xf]
        %v2060 = vld [vmem:[%s2056 + $0xc] sm:$0xf]
        %v2061 = vld [vmem:[%s2056 + $0x10] sm:$0xf]
        %v2062 = vld [vmem:[%s2056 + $0x14] sm:$0xf]
        %v2063 = vld [vmem:[%s2056 + $0x18] sm:$0xf]
        %v2064 = vld [vmem:[%s2056 + $0x1c] sm:$0xf]
        %v2065 = vld [vmem:[%s2056 + $0x20] sm:$0xf]
        %v2066 = vld [vmem:[%s2056 + $0x24] sm:$0xf]
        %v2067 = vld [vmem:[%s2056 + $0x28] sm:$0xf]
        %v2068 = vld [vmem:[%s2056 + $0x2c] sm:$0xf]
        %v2069 = vld [vmem:[%s2056 + $0x30] sm:$0xf]
        %v2070 = vld [vmem:[%s2056 + $0x34] sm:$0xf]
        %v2071 = vld [vmem:[%s2056 + $0x38] sm:$0xf]
        %v2072 = vld [vmem:[%s2056 + $0x3c] sm:$0xf]
        %v2073 = vld [vmem:[%s2056 + $0x40] sm:$0xf]
        %v2074 = vld [vmem:[%s2056 + $0x44] sm:$0xf]
        %v2075 = vld [vmem:[%s2056 + $0x48] sm:$0xf]
        %v2076 = vld [vmem:[%s2056 + $0x4c] sm:$0xf]
        %v2077 = vld [vmem:[%s2056 + $0x50] sm:$0xf]
        %v2078 = vld [vmem:[%s2056 + $0x54] sm:$0xf]
        %v2079 = vld [vmem:[%s2056 + $0x58] sm:$0xf]
        %v2080 = vld [vmem:[%s2056 + $0x5c] sm:$0xf]
        %v2081 = vld [vmem:[%s2056 + $0x60] sm:$0xf]
        %v2082 = vld [vmem:[%s2056 + $0x64] sm:$0xf]
        %v2083 = vld [vmem:[%s2056 + $0x68] sm:$0xf]
        %v2084 = vld [vmem:[%s2056 + $0x6c] sm:$0xf]
        %v2085 = vld [vmem:[%s2056 + $0x70] sm:$0xf]
        %v2086 = vld [vmem:[%s2056 + $0x74] sm:$0xf]
        %v2087 = vld [vmem:[%s2056 + $0x78] sm:$0xf]
        %v2088 = vld [vmem:[%s2056 + $0x7c] sm:$0xf]
        %v2089 = vld [vmem:[%s2056 + $0x80] sm:$0xf]
        %v2090 = vld [vmem:[%s2056 + $0x84] sm:$0xf]
        %v2091 = vld [vmem:[%s2056 + $0x88] sm:$0xf]
        %v2092 = vld [vmem:[%s2056 + $0x8c] sm:$0xf]
        %v2093 = vld [vmem:[%s2056 + $0x90] sm:$0xf]
        %v2094 = vld [vmem:[%s2056 + $0x94] sm:$0xf]
        %v2095 = vld [vmem:[%s2056 + $0x98] sm:$0xf]
        %v2096 = vld [vmem:[%s2056 + $0x9c] sm:$0xf]
        %v2097 = vld [vmem:[%s2056 + $0xa0] sm:$0xf]
        %v2098 = vld [vmem:[%s2056 + $0xa4] sm:$0xf]
        %v2099 = vld [vmem:[%s2056 + $0xa8] sm:$0xf]
        %v2100 = vld [vmem:[%s2056 + $0xac] sm:$0xf]
        %v2101 = vld [vmem:[%s2056 + $0xb0] sm:$0xf]
        %v2102 = vld [vmem:[%s2056 + $0xb4] sm:$0xf]
        %v2103 = vld [vmem:[%s2056 + $0xb8] sm:$0xf]
        %v2104 = vld [vmem:[%s2056 + $0xbc] sm:$0xf]
        %v2153 = vunpack.c.l.b16 %v2057
        %v2154 = vunpack.c.l.b16 %v2058
        %v2155 = vunpack.c.l.b16 %v2059
        %v2156 = vunpack.c.l.b16 %v2060
        %v2157 = vunpack.c.l.b16 %v2061
        %v2158 = vunpack.c.l.b16 %v2062
        %v2159 = vunpack.c.l.b16 %v2063
        %v2160 = vunpack.c.l.b16 %v2064
        %v2161 = vunpack.c.l.b16 %v2065
        %v2162 = vunpack.c.l.b16 %v2066
        %v2163 = vunpack.c.l.b16 %v2067
        %v2164 = vunpack.c.l.b16 %v2068
        %v2165 = vunpack.c.l.b16 %v2069
        %v2166 = vunpack.c.l.b16 %v2070
        %v2167 = vunpack.c.l.b16 %v2071
        %v2168 = vunpack.c.l.b16 %v2072
        %v2169 = vunpack.c.l.b16 %v2073
        %v2170 = vunpack.c.l.b16 %v2074
        %v2171 = vunpack.c.l.b16 %v2075
        %v2172 = vunpack.c.l.b16 %v2076
        %v2173 = vunpack.c.l.b16 %v2077
        %v2174 = vunpack.c.l.b16 %v2078
        %v2175 = vunpack.c.l.b16 %v2079
        %v2176 = vunpack.c.l.b16 %v2080
        %v2177 = vunpack.c.l.b16 %v2081
        %v2178 = vunpack.c.l.b16 %v2082
        %v2179 = vunpack.c.l.b16 %v2083
        %v2180 = vunpack.c.l.b16 %v2084
        %v2181 = vunpack.c.l.b16 %v2085
        %v2182 = vunpack.c.l.b16 %v2086
        %v2183 = vunpack.c.l.b16 %v2087
        %v2184 = vunpack.c.l.b16 %v2088
        %v2185 = vunpack.c.l.b16 %v2089
        %v2186 = vunpack.c.l.b16 %v2090
        %v2187 = vunpack.c.l.b16 %v2091
        %v2188 = vunpack.c.l.b16 %v2092
        %v2189 = vunpack.c.l.b16 %v2093
        %v2190 = vunpack.c.l.b16 %v2094
        %v2191 = vunpack.c.l.b16 %v2095
        %v2192 = vunpack.c.l.b16 %v2096
        %v2193 = vunpack.c.l.b16 %v2097
        %v2194 = vunpack.c.l.b16 %v2098
        %v2195 = vunpack.c.l.b16 %v2099
        %v2196 = vunpack.c.l.b16 %v2100
        %v2197 = vunpack.c.l.b16 %v2101
        %v2198 = vunpack.c.l.b16 %v2102
        %v2199 = vunpack.c.l.b16 %v2103
        %v2200 = vunpack.c.l.b16 %v2104
        %v2201 = vpack.c.b16 %v2154, %v2153
        %v2202 = vpack.c.b16 %v2156, %v2155
        %v2203 = vpack.c.b16 %v2158, %v2157
        %v2204 = vpack.c.b16 %v2160, %v2159
        %v2205 = vpack.c.b16 %v2162, %v2161
        %v2206 = vpack.c.b16 %v2164, %v2163
        %v2207 = vpack.c.b16 %v2166, %v2165
        %v2208 = vpack.c.b16 %v2168, %v2167
        %v2209 = vpack.c.b16 %v2170, %v2169
        %v2210 = vpack.c.b16 %v2172, %v2171
        %v2211 = vpack.c.b16 %v2174, %v2173
        %v2212 = vpack.c.b16 %v2176, %v2175
        %v2213 = vpack.c.b16 %v2178, %v2177
        %v2214 = vpack.c.b16 %v2180, %v2179
        %v2215 = vpack.c.b16 %v2182, %v2181
        %v2216 = vpack.c.b16 %v2184, %v2183
        %v2217 = vpack.c.b16 %v2186, %v2185
        %v2218 = vpack.c.b16 %v2188, %v2187
        %v2219 = vpack.c.b16 %v2190, %v2189
        %v2220 = vpack.c.b16 %v2192, %v2191
        %v2221 = vpack.c.b16 %v2194, %v2193
        %v2222 = vpack.c.b16 %v2196, %v2195
        %v2223 = vpack.c.b16 %v2198, %v2197
        %v2224 = vpack.c.b16 %v2200, %v2199
        %2249 = vmatprep.subr.bf16.mxu0 0
        %2250 = vmatpush1.bf16.msra.mxu0 %v2201
        %2251 = vmatprep.subr.bf16.mxu0 0
        %2252 = vmatpush1.bf16.msra.mxu0 %v2202
        %2253 = vmatprep.subr.bf16.mxu0 0
        %2254 = vmatpush1.bf16.msra.mxu0 %v2203
        %2255 = vmatprep.subr.bf16.mxu0 0
        %2256 = vmatpush1.bf16.msra.mxu0 %v2204
        %2257 = vmatprep.subr.bf16.mxu0 0
        %2258 = vmatpush1.bf16.msra.mxu0 %v2205
        %2259 = vmatprep.subr.bf16.mxu0 0
        %2260 = vmatpush1.bf16.msra.mxu0 %v2206
        %2261 = vmatprep.subr.bf16.mxu0 0
        %2262 = vmatpush1.bf16.msra.mxu0 %v2207
        %2263 = vmatprep.subr.bf16.mxu0 0
        %2264 = vmatpush1.bf16.msra.mxu0 %v2208
        %2265 = vmatprep.subr.bf16.mxu0 0
        %2266 = vmatpush1.bf16.msra.mxu0 %v2209
        %2267 = vmatprep.subr.bf16.mxu0 0
        %2268 = vmatpush1.bf16.msra.mxu0 %v2210
        %2269 = vmatprep.subr.bf16.mxu0 0
        %2270 = vmatpush1.bf16.msra.mxu0 %v2211
        %2271 = vmatprep.subr.bf16.mxu0 0
        %2272 = vmatpush1.bf16.msra.mxu0 %v2212
        %2273 = vmatprep.subr.bf16.mxu0 0
        %2274 = vmatpush1.bf16.msra.mxu0 %v2213
        %2275 = vmatprep.subr.bf16.mxu0 0
        %2276 = vmatpush1.bf16.msra.mxu0 %v2214
        %2277 = vmatprep.subr.bf16.mxu0 0
        %2278 = vmatpush1.bf16.msra.mxu0 %v2215
        %2279 = vmatprep.subr.bf16.mxu0 0
        %2280 = vmatpush1.bf16.msra.mxu0 %v2216
        %2281 = vmatprep.mubr.bf16.mxu0 %v2045
        %2282 = vmatmul.mubr.bf16.gmra.mrb[0].mxu0 %v2044
        %v2283 = vpop.f32.mrb[0].mxu0
        %v2284 = vadd.f32 0.0, %v2283
        %v2285 = vpop.f32.mrb[0].mxu0
        %v2286 = vpop.f32.mrb[0].mxu0
        %v2287 = vadd.f32 0.0, %v2286
        %v2288 = vpop.f32.mrb[0].mxu0
        %2289 = vmatprep.mubr.bf16.mxu0 %v2048
        %2290 = vmatmul.mubr.bf16.gmra.mrb[0].mxu0 %v2047
        %v2291 = vpop.f32.mrb[0].mxu0
        %v2292 = vadd.f32 0.0, %v2291
        %v2293 = vpop.f32.mrb[0].mxu0
        %v2294 = vpop.f32.mrb[0].mxu0
        %v2295 = vadd.f32 0.0, %v2294
        %v2296 = vpop.f32.mrb[0].mxu0
        %2297 = vmatprep.mubr.bf16.mxu0 %v2051
        %2298 = vmatmul.mubr.bf16.gmra.mrb[0].mxu0 %v2050
        %v2299 = vpop.f32.mrb[0].mxu0
        %v2300 = vadd.f32 0.0, %v2299
        %v2301 = vpop.f32.mrb[0].mxu0
        %v2302 = vpop.f32.mrb[0].mxu0
        %v2303 = vadd.f32 0.0, %v2302
        %v2304 = vpop.f32.mrb[0].mxu0
        %2305 = vmatprep.mubr.bf16.mxu0 %v2054
        %2306 = vmatmul.mubr.bf16.gmra.mrb[0].mxu0 %v2053
        %v2307 = vpop.f32.mrb[0].mxu0
        %v2308 = vadd.f32 0.0, %v2307
        %v2309 = vpop.f32.mrb[0].mxu0
        %v2310 = vpop.f32.mrb[0].mxu0
        %v2311 = vadd.f32 0.0, %v2310
        %v2312 = vpop.f32.mrb[0].mxu0
        %2313 = vdwg.mxu0
        %2314 = vmatprep.subr.bf16.mxu0 0
        %2315 = vmatpush1.bf16.msra.mxu0 %v2217
        %2316 = vmatprep.subr.bf16.mxu0 0
        %2317 = vmatpush1.bf16.msra.mxu0 %v2218
        %2318 = vmatprep.subr.bf16.mxu0 0
        %2319 = vmatpush1.bf16.msra.mxu0 %v2219
        %2320 = vmatprep.subr.bf16.mxu0 0
        %2321 = vmatpush1.bf16.msra.mxu0 %v2220
        %2322 = vmatprep.subr.bf16.mxu0 0
        %2323 = vmatpush1.bf16.msra.mxu0 %v2221
        %2324 = vmatprep.subr.bf16.mxu0 0
        %2325 = vmatpush1.bf16.msra.mxu0 %v2222
        %2326 = vmatprep.subr.bf16.mxu0 0
        %2327 = vmatpush1.bf16.msra.mxu0 %v2223
        %2328 = vmatprep.subr.bf16.mxu0 0
        %2329 = vmatpush1.bf16.msra.mxu0 %v2224
        %2330 = vmatprep.subr.bf16.mxu0 0
        %2331 = vmatpush1.bf16.msra.mxu0 0
        %2332 = vmatprep.subr.bf16.mxu0 0
        %2333 = vmatpush1.bf16.msra.mxu0 0
        %2334 = vmatprep.subr.bf16.mxu0 0
        %2335 = vmatpush1.bf16.msra.mxu0 0
        %2336 = vmatprep.subr.bf16.mxu0 0
        %2337 = vmatpush1.bf16.msra.mxu0 0
        %2338 = vmatprep.subr.bf16.mxu0 0
        %2339 = vmatpush1.bf16.msra.mxu0 0
        %2340 = vmatprep.subr.bf16.mxu0 0
        %2341 = vmatpush1.bf16.msra.mxu0 0
        %2342 = vmatprep.subr.bf16.mxu0 0
        %2343 = vmatpush1.bf16.msra.mxu0 0
        %2344 = vmatprep.subr.bf16.mxu0 0
        %2345 = vmatpush1.bf16.msra.mxu0 0
        %2346 = vmatprep.mubr.bf16.mxu0 0
        %2347 = vmatmul.mubr.bf16.gmra.mrb[0].mxu0 %v2046
        %v2348 = vpop.f32.mrb[0].mxu0
        %v2349 = vadd.f32 %v2284, %v2348
        %v2350 = vpop.f32.mrb[0].mxu0
        %v2351 = vpop.f32.mrb[0].mxu0
        %v2352 = vadd.f32 %v2287, %v2351
        %v2353 = vpop.f32.mrb[0].mxu0
        %2354 = vmatprep.mubr.bf16.mxu0 0
        %2355 = vmatmul.mubr.bf16.gmra.mrb[0].mxu0 %v2049
        %v2356 = vpop.f32.mrb[0].mxu0
        %v2357 = vadd.f32 %v2292, %v2356
        %v2358 = vpop.f32.mrb[0].mxu0
        %v2359 = vpop.f32.mrb[0].mxu0
        %v2360 = vadd.f32 %v2295, %v2359
        %v2361 = vpop.f32.mrb[0].mxu0
        %2362 = vmatprep.mubr.bf16.mxu0 0
        %2363 = vmatmul.mubr.bf16.gmra.mrb[0].mxu0 %v2052
        %v2364 = vpop.f32.mrb[0].mxu0
        %v2365 = vadd.f32 %v2300, %v2364
        %v2366 = vpop.f32.mrb[0].mxu0
        %v2367 = vpop.f32.mrb[0].mxu0
        %v2368 = vadd.f32 %v2303, %v2367
        %v2369 = vpop.f32.mrb[0].mxu0
        %2370 = vmatprep.mubr.bf16.mxu0 0
        %2371 = vmatmul.mubr.bf16.gmra.mrb[0].mxu0 %v2055
        %v2372 = vpop.f32.mrb[0].mxu0
        %v2373 = vadd.f32 %v2308, %v2372
        %v2374 = vpop.f32.mrb[0].mxu0
        %v2375 = vpop.f32.mrb[0].mxu0
        %v2376 = vadd.f32 %v2311, %v2375
        %v2377 = vpop.f32.mrb[0].mxu0
        %2378 = vdwg.mxu0
        %v2379 = vmax.f32 %v2349, 0.0
        %v2380 = vmax.f32 %v2352, 0.0
        %v2381 = vmax.f32 %v2357, 0.0
        %v2382 = vmax.f32 %v2360, 0.0
        %v2383 = vmax.f32 %v2365, 0.0
        %v2384 = vmax.f32 %v2368, 0.0
        %v2385 = vmax.f32 %v2373, 0.0
        %v2386 = vmax.f32 %v2376, 0.0
        %v2387 = vrot.slane %v2379, 7
        %v2388 = vrot.slane %v2380, 7
        %v2389 = vrot.slane %v2381, 7
        %v2390 = vrot.slane %v2382, 7
        %v2391 = vrot.slane %v2383, 7
        %v2392 = vrot.slane %v2384, 7
        %v2393 = vrot.slane %v2385, 7
        %v2394 = vrot.slane %v2386, 7
        %v2395 = vsel %vm407, %v2393, %v2394
        %v2396 = vsel %vm407, %v2392, %v2393
        %v2397 = vsel %vm407, %v2391, %v2392
        %v2398 = vsel %vm407, %v2390, %v2391
        %v2399 = vsel %vm407, %v2389, %v2390
        %v2400 = vsel %vm407, %v2388, %v2389
        %v2401 = vsel %vm407, %v2387, %v2388
        %v2402 = vsel %vm407, %v2394, %v2387
        %v2403 = vsel %vm424, %v2402, 0.0
        %v2404 = vsel %vm425, %v2401, 0.0
        %v2405 = vsel %vm426, %v2400, 0.0
        %v2406 = vsel %vm427, %v2399, 0.0
        %v2407 = vsel %vm428, %v2398, 0.0
        %v2408 = vsel %vm429, %v2397, 0.0
        %v2409 = vsel %vm430, %v2396, 0.0
        %v2410 = vsel %vm431, %v2395, 0.0
        %v2411 = vrot.slane %v2379, 1
        %v2412 = vrot.slane %v2380, 1
        %v2413 = vrot.slane %v2381, 1
        %v2414 = vrot.slane %v2382, 1
        %v2415 = vrot.slane %v2383, 1
        %v2416 = vrot.slane %v2384, 1
        %v2417 = vrot.slane %v2385, 1
        %v2418 = vrot.slane %v2386, 1
        %v2419 = vsel %vm448, %v2417, %v2418
        %v2420 = vsel %vm448, %v2416, %v2417
        %v2421 = vsel %vm448, %v2415, %v2416
        %v2422 = vsel %vm448, %v2414, %v2415
        %v2423 = vsel %vm448, %v2413, %v2414
        %v2424 = vsel %vm448, %v2412, %v2413
        %v2425 = vsel %vm448, %v2411, %v2412
        %v2426 = vsel %vm448, %v2418, %v2411
        %v2427 = vsel %vm465, %v2425, 0.0
        %v2428 = vsel %vm466, %v2424, 0.0
        %v2429 = vsel %vm467, %v2423, 0.0
        %v2430 = vsel %vm468, %v2422, 0.0
        %v2431 = vsel %vm469, %v2421, 0.0
        %v2432 = vsel %vm470, %v2420, 0.0
        %v2433 = vsel %vm471, %v2419, 0.0
        %v2434 = vsel %vm472, %v2426, 0.0
        %v2435 = vpack.c.bf16 %v2404, %v2403
        %v2436 = vpack.c.bf16 %v2380, %v2379
        %v2437 = vpack.c.bf16 %v2428, %v2427
        %v2438 = vpack.c.bf16 %v2406, %v2405
        %v2439 = vpack.c.bf16 %v2382, %v2381
        %v2440 = vpack.c.bf16 %v2430, %v2429
        %v2441 = vpack.c.bf16 %v2408, %v2407
        %v2442 = vpack.c.bf16 %v2384, %v2383
        %v2443 = vpack.c.bf16 %v2432, %v2431
        %v2444 = vpack.c.bf16 %v2410, %v2409
        %v2445 = vpack.c.bf16 %v2386, %v2385
        %v2446 = vpack.c.bf16 %v2434, %v2433
        %s2447 = scalar_lea.vmem [#allocation3], 960
        %v2448 = vld [vmem:[%s2447] sm:$0xf]
        %v2449 = vld [vmem:[%s2447 + $0x4] sm:$0xf]
        %v2450 = vld [vmem:[%s2447 + $0x8] sm:$0xf]
        %v2451 = vld [vmem:[%s2447 + $0xc] sm:$0xf]
        %v2452 = vld [vmem:[%s2447 + $0x10] sm:$0xf]
        %v2453 = vld [vmem:[%s2447 + $0x14] sm:$0xf]
        %v2454 = vld [vmem:[%s2447 + $0x18] sm:$0xf]
        %v2455 = vld [vmem:[%s2447 + $0x1c] sm:$0xf]
        %v2456 = vld [vmem:[%s2447 + $0x20] sm:$0xf]
        %v2457 = vld [vmem:[%s2447 + $0x24] sm:$0xf]
        %v2458 = vld [vmem:[%s2447 + $0x28] sm:$0xf]
        %v2459 = vld [vmem:[%s2447 + $0x2c] sm:$0xf]
        %v2460 = vld [vmem:[%s2447 + $0x30] sm:$0xf]
        %v2461 = vld [vmem:[%s2447 + $0x34] sm:$0xf]
        %v2462 = vld [vmem:[%s2447 + $0x38] sm:$0xf]
        %v2463 = vld [vmem:[%s2447 + $0x3c] sm:$0xf]
        %v2464 = vld [vmem:[%s2447 + $0x40] sm:$0xf]
        %v2465 = vld [vmem:[%s2447 + $0x44] sm:$0xf]
        %v2466 = vld [vmem:[%s2447 + $0x48] sm:$0xf]
        %v2467 = vld [vmem:[%s2447 + $0x4c] sm:$0xf]
        %v2468 = vld [vmem:[%s2447 + $0x50] sm:$0xf]
        %v2469 = vld [vmem:[%s2447 + $0x54] sm:$0xf]
        %v2470 = vld [vmem:[%s2447 + $0x58] sm:$0xf]
        %v2471 = vld [vmem:[%s2447 + $0x5c] sm:$0xf]
        %v2472 = vld [vmem:[%s2447 + $0x60] sm:$0xf]
        %v2473 = vld [vmem:[%s2447 + $0x64] sm:$0xf]
        %v2474 = vld [vmem:[%s2447 + $0x68] sm:$0xf]
        %v2475 = vld [vmem:[%s2447 + $0x6c] sm:$0xf]
        %v2476 = vld [vmem:[%s2447 + $0x70] sm:$0xf]
        %v2477 = vld [vmem:[%s2447 + $0x74] sm:$0xf]
        %v2478 = vld [vmem:[%s2447 + $0x78] sm:$0xf]
        %v2479 = vld [vmem:[%s2447 + $0x7c] sm:$0xf]
        %v2480 = vld [vmem:[%s2447 + $0x80] sm:$0xf]
        %v2481 = vld [vmem:[%s2447 + $0x84] sm:$0xf]
        %v2482 = vld [vmem:[%s2447 + $0x88] sm:$0xf]
        %v2483 = vld [vmem:[%s2447 + $0x8c] sm:$0xf]
        %v2484 = vld [vmem:[%s2447 + $0x90] sm:$0xf]
        %v2485 = vld [vmem:[%s2447 + $0x94] sm:$0xf]
        %v2486 = vld [vmem:[%s2447 + $0x98] sm:$0xf]
        %v2487 = vld [vmem:[%s2447 + $0x9c] sm:$0xf]
        %v2488 = vld [vmem:[%s2447 + $0xa0] sm:$0xf]
        %v2489 = vld [vmem:[%s2447 + $0xa4] sm:$0xf]
        %v2490 = vld [vmem:[%s2447 + $0xa8] sm:$0xf]
        %v2491 = vld [vmem:[%s2447 + $0xac] sm:$0xf]
        %v2492 = vld [vmem:[%s2447 + $0xb0] sm:$0xf]
        %v2493 = vld [vmem:[%s2447 + $0xb4] sm:$0xf]
        %v2494 = vld [vmem:[%s2447 + $0xb8] sm:$0xf]
        %v2495 = vld [vmem:[%s2447 + $0xbc] sm:$0xf]
        %v2544 = vunpack.c.l.b16 %v2448
        %v2545 = vunpack.c.l.b16 %v2449
        %v2546 = vunpack.c.l.b16 %v2450
        %v2547 = vunpack.c.l.b16 %v2451
        %v2548 = vunpack.c.l.b16 %v2452
        %v2549 = vunpack.c.l.b16 %v2453
        %v2550 = vunpack.c.l.b16 %v2454
        %v2551 = vunpack.c.l.b16 %v2455
        %v2552 = vunpack.c.l.b16 %v2456
        %v2553 = vunpack.c.l.b16 %v2457
        %v2554 = vunpack.c.l.b16 %v2458
        %v2555 = vunpack.c.l.b16 %v2459
        %v2556 = vunpack.c.l.b16 %v2460
        %v2557 = vunpack.c.l.b16 %v2461
        %v2558 = vunpack.c.l.b16 %v2462
        %v2559 = vunpack.c.l.b16 %v2463
        %v2560 = vunpack.c.l.b16 %v2464
        %v2561 = vunpack.c.l.b16 %v2465
        %v2562 = vunpack.c.l.b16 %v2466
        %v2563 = vunpack.c.l.b16 %v2467
        %v2564 = vunpack.c.l.b16 %v2468
        %v2565 = vunpack.c.l.b16 %v2469
        %v2566 = vunpack.c.l.b16 %v2470
        %v2567 = vunpack.c.l.b16 %v2471
        %v2568 = vunpack.c.l.b16 %v2472
        %v2569 = vunpack.c.l.b16 %v2473
        %v2570 = vunpack.c.l.b16 %v2474
        %v2571 = vunpack.c.l.b16 %v2475
        %v2572 = vunpack.c.l.b16 %v2476
        %v2573 = vunpack.c.l.b16 %v2477
        %v2574 = vunpack.c.l.b16 %v2478
        %v2575 = vunpack.c.l.b16 %v2479
        %v2576 = vunpack.c.l.b16 %v2480
        %v2577 = vunpack.c.l.b16 %v2481
        %v2578 = vunpack.c.l.b16 %v2482
        %v2579 = vunpack.c.l.b16 %v2483
        %v2580 = vunpack.c.l.b16 %v2484
        %v2581 = vunpack.c.l.b16 %v2485
        %v2582 = vunpack.c.l.b16 %v2486
        %v2583 = vunpack.c.l.b16 %v2487
        %v2584 = vunpack.c.l.b16 %v2488
        %v2585 = vunpack.c.l.b16 %v2489
        %v2586 = vunpack.c.l.b16 %v2490
        %v2587 = vunpack.c.l.b16 %v2491
        %v2588 = vunpack.c.l.b16 %v2492
        %v2589 = vunpack.c.l.b16 %v2493
        %v2590 = vunpack.c.l.b16 %v2494
        %v2591 = vunpack.c.l.b16 %v2495
        %v2592 = vpack.c.b16 %v2545, %v2544
        %v2593 = vpack.c.b16 %v2547, %v2546
        %v2594 = vpack.c.b16 %v2549, %v2548
        %v2595 = vpack.c.b16 %v2551, %v2550
        %v2596 = vpack.c.b16 %v2553, %v2552
        %v2597 = vpack.c.b16 %v2555, %v2554
        %v2598 = vpack.c.b16 %v2557, %v2556
        %v2599 = vpack.c.b16 %v2559, %v2558
        %v2600 = vpack.c.b16 %v2561, %v2560
        %v2601 = vpack.c.b16 %v2563, %v2562
        %v2602 = vpack.c.b16 %v2565, %v2564
        %v2603 = vpack.c.b16 %v2567, %v2566
        %v2604 = vpack.c.b16 %v2569, %v2568
        %v2605 = vpack.c.b16 %v2571, %v2570
        %v2606 = vpack.c.b16 %v2573, %v2572
        %v2607 = vpack.c.b16 %v2575, %v2574
        %v2608 = vpack.c.b16 %v2577, %v2576
        %v2609 = vpack.c.b16 %v2579, %v2578
        %v2610 = vpack.c.b16 %v2581, %v2580
        %v2611 = vpack.c.b16 %v2583, %v2582
        %v2612 = vpack.c.b16 %v2585, %v2584
        %v2613 = vpack.c.b16 %v2587, %v2586
        %v2614 = vpack.c.b16 %v2589, %v2588
        %v2615 = vpack.c.b16 %v2591, %v2590
        %2640 = vmatprep.subr.bf16.mxu0 0
        %2641 = vmatpush1.bf16.msra.mxu0 %v2592
        %2642 = vmatprep.subr.bf16.mxu0 0
        %2643 = vmatpush1.bf16.msra.mxu0 %v2593
        %2644 = vmatprep.subr.bf16.mxu0 0
        %2645 = vmatpush1.bf16.msra.mxu0 %v2594
        %2646 = vmatprep.subr.bf16.mxu0 0
        %2647 = vmatpush1.bf16.msra.mxu0 %v2595
        %2648 = vmatprep.subr.bf16.mxu0 0
        %2649 = vmatpush1.bf16.msra.mxu0 %v2596
        %2650 = vmatprep.subr.bf16.mxu0 0
        %2651 = vmatpush1.bf16.msra.mxu0 %v2597
        %2652 = vmatprep.subr.bf16.mxu0 0
        %2653 = vmatpush1.bf16.msra.mxu0 %v2598
        %2654 = vmatprep.subr.bf16.mxu0 0
        %2655 = vmatpush1.bf16.msra.mxu0 %v2599
        %2656 = vmatprep.subr.bf16.mxu0 0
        %2657 = vmatpush1.bf16.msra.mxu0 %v2600
        %2658 = vmatprep.subr.bf16.mxu0 0
        %2659 = vmatpush1.bf16.msra.mxu0 %v2601
        %2660 = vmatprep.subr.bf16.mxu0 0
        %2661 = vmatpush1.bf16.msra.mxu0 %v2602
        %2662 = vmatprep.subr.bf16.mxu0 0
        %2663 = vmatpush1.bf16.msra.mxu0 %v2603
        %2664 = vmatprep.subr.bf16.mxu0 0
        %2665 = vmatpush1.bf16.msra.mxu0 %v2604
        %2666 = vmatprep.subr.bf16.mxu0 0
        %2667 = vmatpush1.bf16.msra.mxu0 %v2605
        %2668 = vmatprep.subr.bf16.mxu0 0
        %2669 = vmatpush1.bf16.msra.mxu0 %v2606
        %2670 = vmatprep.subr.bf16.mxu0 0
        %2671 = vmatpush1.bf16.msra.mxu0 %v2607
        %2672 = vmatprep.mubr.bf16.mxu0 %v2436
        %2673 = vmatmul.mubr.bf16.gmra.mrb[0].mxu0 %v2435
        %v2674 = vpop.f32.mrb[0].mxu0
        %v2675 = vadd.f32 0.0, %v2674
        %v2676 = vpop.f32.mrb[0].mxu0
        %v2677 = vpop.f32.mrb[0].mxu0
        %v2678 = vadd.f32 0.0, %v2677
        %v2679 = vpop.f32.mrb[0].mxu0
        %2680 = vmatprep.mubr.bf16.mxu0 %v2439
        %2681 = vmatmul.mubr.bf16.gmra.mrb[0].mxu0 %v2438
        %v2682 = vpop.f32.mrb[0].mxu0
        %v2683 = vadd.f32 0.0, %v2682
        %v2684 = vpop.f32.mrb[0].mxu0
        %v2685 = vpop.f32.mrb[0].mxu0
        %v2686 = vadd.f32 0.0, %v2685
        %v2687 = vpop.f32.mrb[0].mxu0
        %2688 = vmatprep.mubr.bf16.mxu0 %v2442
        %2689 = vmatmul.mubr.bf16.gmra.mrb[0].mxu0 %v2441
        %v2690 = vpop.f32.mrb[0].mxu0
        %v2691 = vadd.f32 0.0, %v2690
        %v2692 = vpop.f32.mrb[0].mxu0
        %v2693 = vpop.f32.mrb[0].mxu0
        %v2694 = vadd.f32 0.0, %v2693
        %v2695 = vpop.f32.mrb[0].mxu0
        %2696 = vmatprep.mubr.bf16.mxu0 %v2445
        %2697 = vmatmul.mubr.bf16.gmra.mrb[0].mxu0 %v2444
        %v2698 = vpop.f32.mrb[0].mxu0
        %v2699 = vadd.f32 0.0, %v2698
        %v2700 = vpop.f32.mrb[0].mxu0
        %v2701 = vpop.f32.mrb[0].mxu0
        %v2702 = vadd.f32 0.0, %v2701
        %v2703 = vpop.f32.mrb[0].mxu0
        %2704 = vdwg.mxu0
        %2705 = vmatprep.subr.bf16.mxu0 0
        %2706 = vmatpush1.bf16.msra.mxu0 %v2608
        %2707 = vmatprep.subr.bf16.mxu0 0
        %2708 = vmatpush1.bf16.msra.mxu0 %v2609
        %2709 = vmatprep.subr.bf16.mxu0 0
        %2710 = vmatpush1.bf16.msra.mxu0 %v2610
        %2711 = vmatprep.subr.bf16.mxu0 0
        %2712 = vmatpush1.bf16.msra.mxu0 %v2611
        %2713 = vmatprep.subr.bf16.mxu0 0
        %2714 = vmatpush1.bf16.msra.mxu0 %v2612
        %2715 = vmatprep.subr.bf16.mxu0 0
        %2716 = vmatpush1.bf16.msra.mxu0 %v2613
        %2717 = vmatprep.subr.bf16.mxu0 0
        %2718 = vmatpush1.bf16.msra.mxu0 %v2614
        %2719 = vmatprep.subr.bf16.mxu0 0
        %2720 = vmatpush1.bf16.msra.mxu0 %v2615
        %2721 = vmatprep.subr.bf16.mxu0 0
        %2722 = vmatpush1.bf16.msra.mxu0 0
        %2723 = vmatprep.subr.bf16.mxu0 0
        %2724 = vmatpush1.bf16.msra.mxu0 0
        %2725 = vmatprep.subr.bf16.mxu0 0
        %2726 = vmatpush1.bf16.msra.mxu0 0
        %2727 = vmatprep.subr.bf16.mxu0 0
        %2728 = vmatpush1.bf16.msra.mxu0 0
        %2729 = vmatprep.subr.bf16.mxu0 0
        %2730 = vmatpush1.bf16.msra.mxu0 0
        %2731 = vmatprep.subr.bf16.mxu0 0
        %2732 = vmatpush1.bf16.msra.mxu0 0
        %2733 = vmatprep.subr.bf16.mxu0 0
        %2734 = vmatpush1.bf16.msra.mxu0 0
        %2735 = vmatprep.subr.bf16.mxu0 0
        %2736 = vmatpush1.bf16.msra.mxu0 0
        %2737 = vmatprep.mubr.bf16.mxu0 0
        %2738 = vmatmul.mubr.bf16.gmra.mrb[0].mxu0 %v2437
        %v2739 = vpop.f32.mrb[0].mxu0
        %v2740 = vadd.f32 %v2675, %v2739
        %v2741 = vpop.f32.mrb[0].mxu0
        %v2742 = vpop.f32.mrb[0].mxu0
        %v2743 = vadd.f32 %v2678, %v2742
        %v2744 = vpop.f32.mrb[0].mxu0
        %2745 = vmatprep.mubr.bf16.mxu0 0
        %2746 = vmatmul.mubr.bf16.gmra.mrb[0].mxu0 %v2440
        %v2747 = vpop.f32.mrb[0].mxu0
        %v2748 = vadd.f32 %v2683, %v2747
        %v2749 = vpop.f32.mrb[0].mxu0
        %v2750 = vpop.f32.mrb[0].mxu0
        %v2751 = vadd.f32 %v2686, %v2750
        %v2752 = vpop.f32.mrb[0].mxu0
        %2753 = vmatprep.mubr.bf16.mxu0 0
        %2754 = vmatmul.mubr.bf16.gmra.mrb[0].mxu0 %v2443
        %v2755 = vpop.f32.mrb[0].mxu0
        %v2756 = vadd.f32 %v2691, %v2755
        %v2757 = vpop.f32.mrb[0].mxu0
        %v2758 = vpop.f32.mrb[0].mxu0
        %v2759 = vadd.f32 %v2694, %v2758
        %v2760 = vpop.f32.mrb[0].mxu0
        %2761 = vmatprep.mubr.bf16.mxu0 0
        %2762 = vmatmul.mubr.bf16.gmra.mrb[0].mxu0 %v2446
        %v2763 = vpop.f32.mrb[0].mxu0
        %v2764 = vadd.f32 %v2699, %v2763
        %v2765 = vpop.f32.mrb[0].mxu0
        %v2766 = vpop.f32.mrb[0].mxu0
        %v2767 = vadd.f32 %v2702, %v2766
        %v2768 = vpop.f32.mrb[0].mxu0
        %2769 = vdwg.mxu0
        %v2770 = vmax.f32 %v2740, 0.0
        %v2771 = vmax.f32 %v2743, 0.0
        %v2772 = vmax.f32 %v2748, 0.0
        %v2773 = vmax.f32 %v2751, 0.0
        %v2774 = vmax.f32 %v2756, 0.0
        %v2775 = vmax.f32 %v2759, 0.0
        %v2776 = vmax.f32 %v2764, 0.0
        %v2777 = vmax.f32 %v2767, 0.0
        %v2778 = vrot.slane %v2770, 7
        %v2779 = vrot.slane %v2771, 7
        %v2780 = vrot.slane %v2772, 7
        %v2781 = vrot.slane %v2773, 7
        %v2782 = vrot.slane %v2774, 7
        %v2783 = vrot.slane %v2775, 7
        %v2784 = vrot.slane %v2776, 7
        %v2785 = vrot.slane %v2777, 7
        %v2786 = vsel %vm407, %v2784, %v2785
        %v2787 = vsel %vm407, %v2783, %v2784
        %v2788 = vsel %vm407, %v2782, %v2783
        %v2789 = vsel %vm407, %v2781, %v2782
        %v2790 = vsel %vm407, %v2780, %v2781
        %v2791 = vsel %vm407, %v2779, %v2780
        %v2792 = vsel %vm407, %v2778, %v2779
        %v2793 = vsel %vm407, %v2785, %v2778
        %v2794 = vsel %vm424, %v2793, 0.0
        %v2795 = vsel %vm425, %v2792, 0.0
        %v2796 = vsel %vm426, %v2791, 0.0
        %v2797 = vsel %vm427, %v2790, 0.0
        %v2798 = vsel %vm428, %v2789, 0.0
        %v2799 = vsel %vm429, %v2788, 0.0
        %v2800 = vsel %vm430, %v2787, 0.0
        %v2801 = vsel %vm431, %v2786, 0.0
        %v2802 = vrot.slane %v2770, 1
        %v2803 = vrot.slane %v2771, 1
        %v2804 = vrot.slane %v2772, 1
        %v2805 = vrot.slane %v2773, 1
        %v2806 = vrot.slane %v2774, 1
        %v2807 = vrot.slane %v2775, 1
        %v2808 = vrot.slane %v2776, 1
        %v2809 = vrot.slane %v2777, 1
        %v2810 = vsel %vm448, %v2808, %v2809
        %v2811 = vsel %vm448, %v2807, %v2808
        %v2812 = vsel %vm448, %v2806, %v2807
        %v2813 = vsel %vm448, %v2805, %v2806
        %v2814 = vsel %vm448, %v2804, %v2805
        %v2815 = vsel %vm448, %v2803, %v2804
        %v2816 = vsel %vm448, %v2802, %v2803
        %v2817 = vsel %vm448, %v2809, %v2802
        %v2818 = vsel %vm465, %v2816, 0.0
        %v2819 = vsel %vm466, %v2815, 0.0
        %v2820 = vsel %vm467, %v2814, 0.0
        %v2821 = vsel %vm468, %v2813, 0.0
        %v2822 = vsel %vm469, %v2812, 0.0
        %v2823 = vsel %vm470, %v2811, 0.0
        %v2824 = vsel %vm471, %v2810, 0.0
        %v2825 = vsel %vm472, %v2817, 0.0
        %v2826 = vpack.c.bf16 %v2795, %v2794
        %v2827 = vpack.c.bf16 %v2771, %v2770
        %v2828 = vpack.c.bf16 %v2819, %v2818
        %v2829 = vpack.c.bf16 %v2797, %v2796
        %v2830 = vpack.c.bf16 %v2773, %v2772
        %v2831 = vpack.c.bf16 %v2821, %v2820
        %v2832 = vpack.c.bf16 %v2799, %v2798
        %v2833 = vpack.c.bf16 %v2775, %v2774
        %v2834 = vpack.c.bf16 %v2823, %v2822
        %v2835 = vpack.c.bf16 %v2801, %v2800
        %v2836 = vpack.c.bf16 %v2777, %v2776
        %v2837 = vpack.c.bf16 %v2825, %v2824
        %s2838 = scalar_lea.vmem [#allocation3], 1152
        %v2839 = vld [vmem:[%s2838] sm:$0xf]
        %v2840 = vld [vmem:[%s2838 + $0x4] sm:$0xf]
        %v2841 = vld [vmem:[%s2838 + $0x8] sm:$0xf]
        %v2842 = vld [vmem:[%s2838 + $0xc] sm:$0xf]
        %v2843 = vld [vmem:[%s2838 + $0x10] sm:$0xf]
        %v2844 = vld [vmem:[%s2838 + $0x14] sm:$0xf]
        %v2845 = vld [vmem:[%s2838 + $0x18] sm:$0xf]
        %v2846 = vld [vmem:[%s2838 + $0x1c] sm:$0xf]
        %v2847 = vld [vmem:[%s2838 + $0x20] sm:$0xf]
        %v2848 = vld [vmem:[%s2838 + $0x24] sm:$0xf]
        %v2849 = vld [vmem:[%s2838 + $0x28] sm:$0xf]
        %v2850 = vld [vmem:[%s2838 + $0x2c] sm:$0xf]
        %v2851 = vld [vmem:[%s2838 + $0x30] sm:$0xf]
        %v2852 = vld [vmem:[%s2838 + $0x34] sm:$0xf]
        %v2853 = vld [vmem:[%s2838 + $0x38] sm:$0xf]
        %v2854 = vld [vmem:[%s2838 + $0x3c] sm:$0xf]
        %v2855 = vld [vmem:[%s2838 + $0x40] sm:$0xf]
        %v2856 = vld [vmem:[%s2838 + $0x44] sm:$0xf]
        %v2857 = vld [vmem:[%s2838 + $0x48] sm:$0xf]
        %v2858 = vld [vmem:[%s2838 + $0x4c] sm:$0xf]
        %v2859 = vld [vmem:[%s2838 + $0x50] sm:$0xf]
        %v2860 = vld [vmem:[%s2838 + $0x54] sm:$0xf]
        %v2861 = vld [vmem:[%s2838 + $0x58] sm:$0xf]
        %v2862 = vld [vmem:[%s2838 + $0x5c] sm:$0xf]
        %v2863 = vld [vmem:[%s2838 + $0x60] sm:$0xf]
        %v2864 = vld [vmem:[%s2838 + $0x64] sm:$0xf]
        %v2865 = vld [vmem:[%s2838 + $0x68] sm:$0xf]
        %v2866 = vld [vmem:[%s2838 + $0x6c] sm:$0xf]
        %v2867 = vld [vmem:[%s2838 + $0x70] sm:$0xf]
        %v2868 = vld [vmem:[%s2838 + $0x74] sm:$0xf]
        %v2869 = vld [vmem:[%s2838 + $0x78] sm:$0xf]
        %v2870 = vld [vmem:[%s2838 + $0x7c] sm:$0xf]
        %v2871 = vld [vmem:[%s2838 + $0x80] sm:$0xf]
        %v2872 = vld [vmem:[%s2838 + $0x84] sm:$0xf]
        %v2873 = vld [vmem:[%s2838 + $0x88] sm:$0xf]
        %v2874 = vld [vmem:[%s2838 + $0x8c] sm:$0xf]
        %v2875 = vld [vmem:[%s2838 + $0x90] sm:$0xf]
        %v2876 = vld [vmem:[%s2838 + $0x94] sm:$0xf]
        %v2877 = vld [vmem:[%s2838 + $0x98] sm:$0xf]
        %v2878 = vld [vmem:[%s2838 + $0x9c] sm:$0xf]
        %v2879 = vld [vmem:[%s2838 + $0xa0] sm:$0xf]
        %v2880 = vld [vmem:[%s2838 + $0xa4] sm:$0xf]
        %v2881 = vld [vmem:[%s2838 + $0xa8] sm:$0xf]
        %v2882 = vld [vmem:[%s2838 + $0xac] sm:$0xf]
        %v2883 = vld [vmem:[%s2838 + $0xb0] sm:$0xf]
        %v2884 = vld [vmem:[%s2838 + $0xb4] sm:$0xf]
        %v2885 = vld [vmem:[%s2838 + $0xb8] sm:$0xf]
        %v2886 = vld [vmem:[%s2838 + $0xbc] sm:$0xf]
        %v2935 = vunpack.c.l.b16 %v2839
        %v2936 = vunpack.c.l.b16 %v2840
        %v2937 = vunpack.c.l.b16 %v2841
        %v2938 = vunpack.c.l.b16 %v2842
        %v2939 = vunpack.c.l.b16 %v2843
        %v2940 = vunpack.c.l.b16 %v2844
        %v2941 = vunpack.c.l.b16 %v2845
        %v2942 = vunpack.c.l.b16 %v2846
        %v2943 = vunpack.c.l.b16 %v2847
        %v2944 = vunpack.c.l.b16 %v2848
        %v2945 = vunpack.c.l.b16 %v2849
        %v2946 = vunpack.c.l.b16 %v2850
        %v2947 = vunpack.c.l.b16 %v2851
        %v2948 = vunpack.c.l.b16 %v2852
        %v2949 = vunpack.c.l.b16 %v2853
        %v2950 = vunpack.c.l.b16 %v2854
        %v2951 = vunpack.c.l.b16 %v2855
        %v2952 = vunpack.c.l.b16 %v2856
        %v2953 = vunpack.c.l.b16 %v2857
        %v2954 = vunpack.c.l.b16 %v2858
        %v2955 = vunpack.c.l.b16 %v2859
        %v2956 = vunpack.c.l.b16 %v2860
        %v2957 = vunpack.c.l.b16 %v2861
        %v2958 = vunpack.c.l.b16 %v2862
        %v2959 = vunpack.c.l.b16 %v2863
        %v2960 = vunpack.c.l.b16 %v2864
        %v2961 = vunpack.c.l.b16 %v2865
        %v2962 = vunpack.c.l.b16 %v2866
        %v2963 = vunpack.c.l.b16 %v2867
        %v2964 = vunpack.c.l.b16 %v2868
        %v2965 = vunpack.c.l.b16 %v2869
        %v2966 = vunpack.c.l.b16 %v2870
        %v2967 = vunpack.c.l.b16 %v2871
        %v2968 = vunpack.c.l.b16 %v2872
        %v2969 = vunpack.c.l.b16 %v2873
        %v2970 = vunpack.c.l.b16 %v2874
        %v2971 = vunpack.c.l.b16 %v2875
        %v2972 = vunpack.c.l.b16 %v2876
        %v2973 = vunpack.c.l.b16 %v2877
        %v2974 = vunpack.c.l.b16 %v2878
        %v2975 = vunpack.c.l.b16 %v2879
        %v2976 = vunpack.c.l.b16 %v2880
        %v2977 = vunpack.c.l.b16 %v2881
        %v2978 = vunpack.c.l.b16 %v2882
        %v2979 = vunpack.c.l.b16 %v2883
        %v2980 = vunpack.c.l.b16 %v2884
        %v2981 = vunpack.c.l.b16 %v2885
        %v2982 = vunpack.c.l.b16 %v2886
        %v2983 = vpack.c.b16 %v2936, %v2935
        %v2984 = vpack.c.b16 %v2938, %v2937
        %v2985 = vpack.c.b16 %v2940, %v2939
        %v2986 = vpack.c.b16 %v2942, %v2941
        %v2987 = vpack.c.b16 %v2944, %v2943
        %v2988 = vpack.c.b16 %v2946, %v2945
        %v2989 = vpack.c.b16 %v2948, %v2947
        %v2990 = vpack.c.b16 %v2950, %v2949
        %v2991 = vpack.c.b16 %v2952, %v2951
        %v2992 = vpack.c.b16 %v2954, %v2953
        %v2993 = vpack.c.b16 %v2956, %v2955
        %v2994 = vpack.c.b16 %v2958, %v2957
        %v2995 = vpack.c.b16 %v2960, %v2959
        %v2996 = vpack.c.b16 %v2962, %v2961
        %v2997 = vpack.c.b16 %v2964, %v2963
        %v2998 = vpack.c.b16 %v2966, %v2965
        %v2999 = vpack.c.b16 %v2968, %v2967
        %v3000 = vpack.c.b16 %v2970, %v2969
        %v3001 = vpack.c.b16 %v2972, %v2971
        %v3002 = vpack.c.b16 %v2974, %v2973
        %v3003 = vpack.c.b16 %v2976, %v2975
        %v3004 = vpack.c.b16 %v2978, %v2977
        %v3005 = vpack.c.b16 %v2980, %v2979
        %v3006 = vpack.c.b16 %v2982, %v2981
        %3031 = vmatprep.subr.bf16.mxu0 0
        %3032 = vmatpush1.bf16.msra.mxu0 %v2983
        %3033 = vmatprep.subr.bf16.mxu0 0
        %3034 = vmatpush1.bf16.msra.mxu0 %v2984
        %3035 = vmatprep.subr.bf16.mxu0 0
        %3036 = vmatpush1.bf16.msra.mxu0 %v2985
        %3037 = vmatprep.subr.bf16.mxu0 0
        %3038 = vmatpush1.bf16.msra.mxu0 %v2986
        %3039 = vmatprep.subr.bf16.mxu0 0
        %3040 = vmatpush1.bf16.msra.mxu0 %v2987
        %3041 = vmatprep.subr.bf16.mxu0 0
        %3042 = vmatpush1.bf16.msra.mxu0 %v2988
        %3043 = vmatprep.subr.bf16.mxu0 0
        %3044 = vmatpush1.bf16.msra.mxu0 %v2989
        %3045 = vmatprep.subr.bf16.mxu0 0
        %3046 = vmatpush1.bf16.msra.mxu0 %v2990
        %3047 = vmatprep.subr.bf16.mxu0 0
        %3048 = vmatpush1.bf16.msra.mxu0 %v2991
        %3049 = vmatprep.subr.bf16.mxu0 0
        %3050 = vmatpush1.bf16.msra.mxu0 %v2992
        %3051 = vmatprep.subr.bf16.mxu0 0
        %3052 = vmatpush1.bf16.msra.mxu0 %v2993
        %3053 = vmatprep.subr.bf16.mxu0 0
        %3054 = vmatpush1.bf16.msra.mxu0 %v2994
        %3055 = vmatprep.subr.bf16.mxu0 0
        %3056 = vmatpush1.bf16.msra.mxu0 %v2995
        %3057 = vmatprep.subr.bf16.mxu0 0
        %3058 = vmatpush1.bf16.msra.mxu0 %v2996
        %3059 = vmatprep.subr.bf16.mxu0 0
        %3060 = vmatpush1.bf16.msra.mxu0 %v2997
        %3061 = vmatprep.subr.bf16.mxu0 0
        %3062 = vmatpush1.bf16.msra.mxu0 %v2998
        %3063 = vmatprep.mubr.bf16.mxu0 %v2827
        %3064 = vmatmul.mubr.bf16.gmra.mrb[0].mxu0 %v2826
        %v3065 = vpop.f32.mrb[0].mxu0
        %v3066 = vadd.f32 0.0, %v3065
        %v3067 = vpop.f32.mrb[0].mxu0
        %v3068 = vpop.f32.mrb[0].mxu0
        %v3069 = vadd.f32 0.0, %v3068
        %v3070 = vpop.f32.mrb[0].mxu0
        %3071 = vmatprep.mubr.bf16.mxu0 %v2830
        %3072 = vmatmul.mubr.bf16.gmra.mrb[0].mxu0 %v2829
        %v3073 = vpop.f32.mrb[0].mxu0
        %v3074 = vadd.f32 0.0, %v3073
        %v3075 = vpop.f32.mrb[0].mxu0
        %v3076 = vpop.f32.mrb[0].mxu0
        %v3077 = vadd.f32 0.0, %v3076
        %v3078 = vpop.f32.mrb[0].mxu0
        %3079 = vmatprep.mubr.bf16.mxu0 %v2833
        %3080 = vmatmul.mubr.bf16.gmra.mrb[0].mxu0 %v2832
        %v3081 = vpop.f32.mrb[0].mxu0
        %v3082 = vadd.f32 0.0, %v3081
        %v3083 = vpop.f32.mrb[0].mxu0
        %v3084 = vpop.f32.mrb[0].mxu0
        %v3085 = vadd.f32 0.0, %v3084
        %v3086 = vpop.f32.mrb[0].mxu0
        %3087 = vmatprep.mubr.bf16.mxu0 %v2836
        %3088 = vmatmul.mubr.bf16.gmra.mrb[0].mxu0 %v2835
        %v3089 = vpop.f32.mrb[0].mxu0
        %v3090 = vadd.f32 0.0, %v3089
        %v3091 = vpop.f32.mrb[0].mxu0
        %v3092 = vpop.f32.mrb[0].mxu0
        %v3093 = vadd.f32 0.0, %v3092
        %v3094 = vpop.f32.mrb[0].mxu0
        %3095 = vdwg.mxu0
        %3096 = vmatprep.subr.bf16.mxu0 0
        %3097 = vmatpush1.bf16.msra.mxu0 %v2999
        %3098 = vmatprep.subr.bf16.mxu0 0
        %3099 = vmatpush1.bf16.msra.mxu0 %v3000
        %3100 = vmatprep.subr.bf16.mxu0 0
        %3101 = vmatpush1.bf16.msra.mxu0 %v3001
        %3102 = vmatprep.subr.bf16.mxu0 0
        %3103 = vmatpush1.bf16.msra.mxu0 %v3002
        %3104 = vmatprep.subr.bf16.mxu0 0
        %3105 = vmatpush1.bf16.msra.mxu0 %v3003
        %3106 = vmatprep.subr.bf16.mxu0 0
        %3107 = vmatpush1.bf16.msra.mxu0 %v3004
        %3108 = vmatprep.subr.bf16.mxu0 0
        %3109 = vmatpush1.bf16.msra.mxu0 %v3005
        %3110 = vmatprep.subr.bf16.mxu0 0
        %3111 = vmatpush1.bf16.msra.mxu0 %v3006
        %3112 = vmatprep.subr.bf16.mxu0 0
        %3113 = vmatpush1.bf16.msra.mxu0 0
        %3114 = vmatprep.subr.bf16.mxu0 0
        %3115 = vmatpush1.bf16.msra.mxu0 0
        %3116 = vmatprep.subr.bf16.mxu0 0
        %3117 = vmatpush1.bf16.msra.mxu0 0
        %3118 = vmatprep.subr.bf16.mxu0 0
        %3119 = vmatpush1.bf16.msra.mxu0 0
        %3120 = vmatprep.subr.bf16.mxu0 0
        %3121 = vmatpush1.bf16.msra.mxu0 0
        %3122 = vmatprep.subr.bf16.mxu0 0
        %3123 = vmatpush1.bf16.msra.mxu0 0
        %3124 = vmatprep.subr.bf16.mxu0 0
        %3125 = vmatpush1.bf16.msra.mxu0 0
        %3126 = vmatprep.subr.bf16.mxu0 0
        %3127 = vmatpush1.bf16.msra.mxu0 0
        %3128 = vmatprep.mubr.bf16.mxu0 0
        %3129 = vmatmul.mubr.bf16.gmra.mrb[0].mxu0 %v2828
        %v3130 = vpop.f32.mrb[0].mxu0
        %v3131 = vadd.f32 %v3066, %v3130
        %v3132 = vpop.f32.mrb[0].mxu0
        %v3133 = vpop.f32.mrb[0].mxu0
        %v3134 = vadd.f32 %v3069, %v3133
        %v3135 = vpop.f32.mrb[0].mxu0
        %3136 = vmatprep.mubr.bf16.mxu0 0
        %3137 = vmatmul.mubr.bf16.gmra.mrb[0].mxu0 %v2831
        %v3138 = vpop.f32.mrb[0].mxu0
        %v3139 = vadd.f32 %v3074, %v3138
        %v3140 = vpop.f32.mrb[0].mxu0
        %v3141 = vpop.f32.mrb[0].mxu0
        %v3142 = vadd.f32 %v3077, %v3141
        %v3143 = vpop.f32.mrb[0].mxu0
        %3144 = vmatprep.mubr.bf16.mxu0 0
        %3145 = vmatmul.mubr.bf16.gmra.mrb[0].mxu0 %v2834
        %v3146 = vpop.f32.mrb[0].mxu0
        %v3147 = vadd.f32 %v3082, %v3146
        %v3148 = vpop.f32.mrb[0].mxu0
        %v3149 = vpop.f32.mrb[0].mxu0
        %v3150 = vadd.f32 %v3085, %v3149
        %v3151 = vpop.f32.mrb[0].mxu0
        %3152 = vmatprep.mubr.bf16.mxu0 0
        %3153 = vmatmul.mubr.bf16.gmra.mrb[0].mxu0 %v2837
        %v3154 = vpop.f32.mrb[0].mxu0
        %v3155 = vadd.f32 %v3090, %v3154
        %v3156 = vpop.f32.mrb[0].mxu0
        %v3157 = vpop.f32.mrb[0].mxu0
        %v3158 = vadd.f32 %v3093, %v3157
        %v3159 = vpop.f32.mrb[0].mxu0
        %3160 = vdwg.mxu0
        %v3161 = vmax.f32 %v3131, 0.0
        %v3162 = vmax.f32 %v3134, 0.0
        %v3163 = vmax.f32 %v3139, 0.0
        %v3164 = vmax.f32 %v3142, 0.0
        %v3165 = vmax.f32 %v3147, 0.0
        %v3166 = vmax.f32 %v3150, 0.0
        %v3167 = vmax.f32 %v3155, 0.0
        %v3168 = vmax.f32 %v3158, 0.0
        %v3169 = vrot.slane %v3161, 7
        %v3170 = vrot.slane %v3162, 7
        %v3171 = vrot.slane %v3163, 7
        %v3172 = vrot.slane %v3164, 7
        %v3173 = vrot.slane %v3165, 7
        %v3174 = vrot.slane %v3166, 7
        %v3175 = vrot.slane %v3167, 7
        %v3176 = vrot.slane %v3168, 7
        %v3177 = vsel %vm407, %v3175, %v3176
        %v3178 = vsel %vm407, %v3174, %v3175
        %v3179 = vsel %vm407, %v3173, %v3174
        %v3180 = vsel %vm407, %v3172, %v3173
        %v3181 = vsel %vm407, %v3171, %v3172
        %v3182 = vsel %vm407, %v3170, %v3171
        %v3183 = vsel %vm407, %v3169, %v3170
        %v3184 = vsel %vm407, %v3176, %v3169
        %v3185 = vsel %vm424, %v3184, 0.0
        %v3186 = vsel %vm425, %v3183, 0.0
        %v3187 = vsel %vm426, %v3182, 0.0
        %v3188 = vsel %vm427, %v3181, 0.0
        %v3189 = vsel %vm428, %v3180, 0.0
        %v3190 = vsel %vm429, %v3179, 0.0
        %v3191 = vsel %vm430, %v3178, 0.0
        %v3192 = vsel %vm431, %v3177, 0.0
        %v3193 = vrot.slane %v3161, 1
        %v3194 = vrot.slane %v3162, 1
        %v3195 = vrot.slane %v3163, 1
        %v3196 = vrot.slane %v3164, 1
        %v3197 = vrot.slane %v3165, 1
        %v3198 = vrot.slane %v3166, 1
        %v3199 = vrot.slane %v3167, 1
        %v3200 = vrot.slane %v3168, 1
        %v3201 = vsel %vm448, %v3199, %v3200
        %v3202 = vsel %vm448, %v3198, %v3199
        %v3203 = vsel %vm448, %v3197, %v3198
        %v3204 = vsel %vm448, %v3196, %v3197
        %v3205 = vsel %vm448, %v3195, %v3196
        %v3206 = vsel %vm448, %v3194, %v3195
        %v3207 = vsel %vm448, %v3193, %v3194
        %v3208 = vsel %vm448, %v3200, %v3193
        %v3209 = vsel %vm465, %v3207, 0.0
        %v3210 = vsel %vm466, %v3206, 0.0
        %v3211 = vsel %vm467, %v3205, 0.0
        %v3212 = vsel %vm468, %v3204, 0.0
        %v3213 = vsel %vm469, %v3203, 0.0
        %v3214 = vsel %vm470, %v3202, 0.0
        %v3215 = vsel %vm471, %v3201, 0.0
        %v3216 = vsel %vm472, %v3208, 0.0
        %v3217 = vpack.c.bf16 %v3186, %v3185
        %v3218 = vpack.c.bf16 %v3162, %v3161
        %v3219 = vpack.c.bf16 %v3210, %v3209
        %v3220 = vpack.c.bf16 %v3188, %v3187
        %v3221 = vpack.c.bf16 %v3164, %v3163
        %v3222 = vpack.c.bf16 %v3212, %v3211
        %v3223 = vpack.c.bf16 %v3190, %v3189
        %v3224 = vpack.c.bf16 %v3166, %v3165
        %v3225 = vpack.c.bf16 %v3214, %v3213
        %v3226 = vpack.c.bf16 %v3192, %v3191
        %v3227 = vpack.c.bf16 %v3168, %v3167
        %v3228 = vpack.c.bf16 %v3216, %v3215
        %s3229 = scalar_lea.vmem [#allocation3], 1344
        %v3230 = vld [vmem:[%s3229] sm:$0xf]
        %v3231 = vld [vmem:[%s3229 + $0x4] sm:$0xf]
        %v3232 = vld [vmem:[%s3229 + $0x8] sm:$0xf]
        %v3233 = vld [vmem:[%s3229 + $0xc] sm:$0xf]
        %v3234 = vld [vmem:[%s3229 + $0x10] sm:$0xf]
        %v3235 = vld [vmem:[%s3229 + $0x14] sm:$0xf]
        %v3236 = vld [vmem:[%s3229 + $0x18] sm:$0xf]
        %v3237 = vld [vmem:[%s3229 + $0x1c] sm:$0xf]
        %v3238 = vld [vmem:[%s3229 + $0x20] sm:$0xf]
        %v3239 = vld [vmem:[%s3229 + $0x24] sm:$0xf]
        %v3240 = vld [vmem:[%s3229 + $0x28] sm:$0xf]
        %v3241 = vld [vmem:[%s3229 + $0x2c] sm:$0xf]
        %v3242 = vld [vmem:[%s3229 + $0x30] sm:$0xf]
        %v3243 = vld [vmem:[%s3229 + $0x34] sm:$0xf]
        %v3244 = vld [vmem:[%s3229 + $0x38] sm:$0xf]
        %v3245 = vld [vmem:[%s3229 + $0x3c] sm:$0xf]
        %v3246 = vld [vmem:[%s3229 + $0x40] sm:$0xf]
        %v3247 = vld [vmem:[%s3229 + $0x44] sm:$0xf]
        %v3248 = vld [vmem:[%s3229 + $0x48] sm:$0xf]
        %v3249 = vld [vmem:[%s3229 + $0x4c] sm:$0xf]
        %v3250 = vld [vmem:[%s3229 + $0x50] sm:$0xf]
        %v3251 = vld [vmem:[%s3229 + $0x54] sm:$0xf]
        %v3252 = vld [vmem:[%s3229 + $0x58] sm:$0xf]
        %v3253 = vld [vmem:[%s3229 + $0x5c] sm:$0xf]
        %v3254 = vld [vmem:[%s3229 + $0x60] sm:$0xf]
        %v3255 = vld [vmem:[%s3229 + $0x64] sm:$0xf]
        %v3256 = vld [vmem:[%s3229 + $0x68] sm:$0xf]
        %v3257 = vld [vmem:[%s3229 + $0x6c] sm:$0xf]
        %v3258 = vld [vmem:[%s3229 + $0x70] sm:$0xf]
        %v3259 = vld [vmem:[%s3229 + $0x74] sm:$0xf]
        %v3260 = vld [vmem:[%s3229 + $0x78] sm:$0xf]
        %v3261 = vld [vmem:[%s3229 + $0x7c] sm:$0xf]
        %v3262 = vld [vmem:[%s3229 + $0x80] sm:$0xf]
        %v3263 = vld [vmem:[%s3229 + $0x84] sm:$0xf]
        %v3264 = vld [vmem:[%s3229 + $0x88] sm:$0xf]
        %v3265 = vld [vmem:[%s3229 + $0x8c] sm:$0xf]
        %v3266 = vld [vmem:[%s3229 + $0x90] sm:$0xf]
        %v3267 = vld [vmem:[%s3229 + $0x94] sm:$0xf]
        %v3268 = vld [vmem:[%s3229 + $0x98] sm:$0xf]
        %v3269 = vld [vmem:[%s3229 + $0x9c] sm:$0xf]
        %v3270 = vld [vmem:[%s3229 + $0xa0] sm:$0xf]
        %v3271 = vld [vmem:[%s3229 + $0xa4] sm:$0xf]
        %v3272 = vld [vmem:[%s3229 + $0xa8] sm:$0xf]
        %v3273 = vld [vmem:[%s3229 + $0xac] sm:$0xf]
        %v3274 = vld [vmem:[%s3229 + $0xb0] sm:$0xf]
        %v3275 = vld [vmem:[%s3229 + $0xb4] sm:$0xf]
        %v3276 = vld [vmem:[%s3229 + $0xb8] sm:$0xf]
        %v3277 = vld [vmem:[%s3229 + $0xbc] sm:$0xf]
        %v3326 = vunpack.c.l.b16 %v3230
        %v3327 = vunpack.c.l.b16 %v3231
        %v3328 = vunpack.c.l.b16 %v3232
        %v3329 = vunpack.c.l.b16 %v3233
        %v3330 = vunpack.c.l.b16 %v3234
        %v3331 = vunpack.c.l.b16 %v3235
        %v3332 = vunpack.c.l.b16 %v3236
        %v3333 = vunpack.c.l.b16 %v3237
        %v3334 = vunpack.c.l.b16 %v3238
        %v3335 = vunpack.c.l.b16 %v3239
        %v3336 = vunpack.c.l.b16 %v3240
        %v3337 = vunpack.c.l.b16 %v3241
        %v3338 = vunpack.c.l.b16 %v3242
        %v3339 = vunpack.c.l.b16 %v3243
        %v3340 = vunpack.c.l.b16 %v3244
        %v3341 = vunpack.c.l.b16 %v3245
        %v3342 = vunpack.c.l.b16 %v3246
        %v3343 = vunpack.c.l.b16 %v3247
        %v3344 = vunpack.c.l.b16 %v3248
        %v3345 = vunpack.c.l.b16 %v3249
        %v3346 = vunpack.c.l.b16 %v3250
        %v3347 = vunpack.c.l.b16 %v3251
        %v3348 = vunpack.c.l.b16 %v3252
        %v3349 = vunpack.c.l.b16 %v3253
        %v3350 = vunpack.c.l.b16 %v3254
        %v3351 = vunpack.c.l.b16 %v3255
        %v3352 = vunpack.c.l.b16 %v3256
        %v3353 = vunpack.c.l.b16 %v3257
        %v3354 = vunpack.c.l.b16 %v3258
        %v3355 = vunpack.c.l.b16 %v3259
        %v3356 = vunpack.c.l.b16 %v3260
        %v3357 = vunpack.c.l.b16 %v3261
        %v3358 = vunpack.c.l.b16 %v3262
        %v3359 = vunpack.c.l.b16 %v3263
        %v3360 = vunpack.c.l.b16 %v3264
        %v3361 = vunpack.c.l.b16 %v3265
        %v3362 = vunpack.c.l.b16 %v3266
        %v3363 = vunpack.c.l.b16 %v3267
        %v3364 = vunpack.c.l.b16 %v3268
        %v3365 = vunpack.c.l.b16 %v3269
        %v3366 = vunpack.c.l.b16 %v3270
        %v3367 = vunpack.c.l.b16 %v3271
        %v3368 = vunpack.c.l.b16 %v3272
        %v3369 = vunpack.c.l.b16 %v3273
        %v3370 = vunpack.c.l.b16 %v3274
        %v3371 = vunpack.c.l.b16 %v3275
        %v3372 = vunpack.c.l.b16 %v3276
        %v3373 = vunpack.c.l.b16 %v3277
        %v3374 = vpack.c.b16 %v3327, %v3326
        %v3375 = vpack.c.b16 %v3329, %v3328
        %v3376 = vpack.c.b16 %v3331, %v3330
        %v3377 = vpack.c.b16 %v3333, %v3332
        %v3378 = vpack.c.b16 %v3335, %v3334
        %v3379 = vpack.c.b16 %v3337, %v3336
        %v3380 = vpack.c.b16 %v3339, %v3338
        %v3381 = vpack.c.b16 %v3341, %v3340
        %v3382 = vpack.c.b16 %v3343, %v3342
        %v3383 = vpack.c.b16 %v3345, %v3344
        %v3384 = vpack.c.b16 %v3347, %v3346
        %v3385 = vpack.c.b16 %v3349, %v3348
        %v3386 = vpack.c.b16 %v3351, %v3350
        %v3387 = vpack.c.b16 %v3353, %v3352
        %v3388 = vpack.c.b16 %v3355, %v3354
        %v3389 = vpack.c.b16 %v3357, %v3356
        %v3390 = vpack.c.b16 %v3359, %v3358
        %v3391 = vpack.c.b16 %v3361, %v3360
        %v3392 = vpack.c.b16 %v3363, %v3362
        %v3393 = vpack.c.b16 %v3365, %v3364
        %v3394 = vpack.c.b16 %v3367, %v3366
        %v3395 = vpack.c.b16 %v3369, %v3368
        %v3396 = vpack.c.b16 %v3371, %v3370
        %v3397 = vpack.c.b16 %v3373, %v3372
        %3422 = vmatprep.subr.bf16.mxu0 0
        %3423 = vmatpush1.bf16.msra.mxu0 %v3374
        %3424 = vmatprep.subr.bf16.mxu0 0
        %3425 = vmatpush1.bf16.msra.mxu0 %v3375
        %3426 = vmatprep.subr.bf16.mxu0 0
        %3427 = vmatpush1.bf16.msra.mxu0 %v3376
        %3428 = vmatprep.subr.bf16.mxu0 0
        %3429 = vmatpush1.bf16.msra.mxu0 %v3377
        %3430 = vmatprep.subr.bf16.mxu0 0
        %3431 = vmatpush1.bf16.msra.mxu0 %v3378
        %3432 = vmatprep.subr.bf16.mxu0 0
        %3433 = vmatpush1.bf16.msra.mxu0 %v3379
        %3434 = vmatprep.subr.bf16.mxu0 0
        %3435 = vmatpush1.bf16.msra.mxu0 %v3380
        %3436 = vmatprep.subr.bf16.mxu0 0
        %3437 = vmatpush1.bf16.msra.mxu0 %v3381
        %3438 = vmatprep.subr.bf16.mxu0 0
        %3439 = vmatpush1.bf16.msra.mxu0 %v3382
        %3440 = vmatprep.subr.bf16.mxu0 0
        %3441 = vmatpush1.bf16.msra.mxu0 %v3383
        %3442 = vmatprep.subr.bf16.mxu0 0
        %3443 = vmatpush1.bf16.msra.mxu0 %v3384
        %3444 = vmatprep.subr.bf16.mxu0 0
        %3445 = vmatpush1.bf16.msra.mxu0 %v3385
        %3446 = vmatprep.subr.bf16.mxu0 0
        %3447 = vmatpush1.bf16.msra.mxu0 %v3386
        %3448 = vmatprep.subr.bf16.mxu0 0
        %3449 = vmatpush1.bf16.msra.mxu0 %v3387
        %3450 = vmatprep.subr.bf16.mxu0 0
        %3451 = vmatpush1.bf16.msra.mxu0 %v3388
        %3452 = vmatprep.subr.bf16.mxu0 0
        %3453 = vmatpush1.bf16.msra.mxu0 %v3389
        %3454 = vmatprep.mubr.bf16.mxu0 %v3218
        %3455 = vmatmul.mubr.bf16.gmra.mrb[0].mxu0 %v3217
        %v3456 = vpop.f32.mrb[0].mxu0
        %v3457 = vadd.f32 0.0, %v3456
        %v3458 = vpop.f32.mrb[0].mxu0
        %v3459 = vpop.f32.mrb[0].mxu0
        %v3460 = vadd.f32 0.0, %v3459
        %v3461 = vpop.f32.mrb[0].mxu0
        %3462 = vmatprep.mubr.bf16.mxu0 %v3221
        %3463 = vmatmul.mubr.bf16.gmra.mrb[0].mxu0 %v3220
        %v3464 = vpop.f32.mrb[0].mxu0
        %v3465 = vadd.f32 0.0, %v3464
        %v3466 = vpop.f32.mrb[0].mxu0
        %v3467 = vpop.f32.mrb[0].mxu0
        %v3468 = vadd.f32 0.0, %v3467
        %v3469 = vpop.f32.mrb[0].mxu0
        %3470 = vmatprep.mubr.bf16.mxu0 %v3224
        %3471 = vmatmul.mubr.bf16.gmra.mrb[0].mxu0 %v3223
        %v3472 = vpop.f32.mrb[0].mxu0
        %v3473 = vadd.f32 0.0, %v3472
        %v3474 = vpop.f32.mrb[0].mxu0
        %v3475 = vpop.f32.mrb[0].mxu0
        %v3476 = vadd.f32 0.0, %v3475
        %v3477 = vpop.f32.mrb[0].mxu0
        %3478 = vmatprep.mubr.bf16.mxu0 %v3227
        %3479 = vmatmul.mubr.bf16.gmra.mrb[0].mxu0 %v3226
        %v3480 = vpop.f32.mrb[0].mxu0
        %v3481 = vadd.f32 0.0, %v3480
        %v3482 = vpop.f32.mrb[0].mxu0
        %v3483 = vpop.f32.mrb[0].mxu0
        %v3484 = vadd.f32 0.0, %v3483
        %v3485 = vpop.f32.mrb[0].mxu0
        %3486 = vdwg.mxu0
        %3487 = vmatprep.subr.bf16.mxu0 0
        %3488 = vmatpush1.bf16.msra.mxu0 %v3390
        %3489 = vmatprep.subr.bf16.mxu0 0
        %3490 = vmatpush1.bf16.msra.mxu0 %v3391
        %3491 = vmatprep.subr.bf16.mxu0 0
        %3492 = vmatpush1.bf16.msra.mxu0 %v3392
        %3493 = vmatprep.subr.bf16.mxu0 0
        %3494 = vmatpush1.bf16.msra.mxu0 %v3393
        %3495 = vmatprep.subr.bf16.mxu0 0
        %3496 = vmatpush1.bf16.msra.mxu0 %v3394
        %3497 = vmatprep.subr.bf16.mxu0 0
        %3498 = vmatpush1.bf16.msra.mxu0 %v3395
        %3499 = vmatprep.subr.bf16.mxu0 0
        %3500 = vmatpush1.bf16.msra.mxu0 %v3396
        %3501 = vmatprep.subr.bf16.mxu0 0
        %3502 = vmatpush1.bf16.msra.mxu0 %v3397
        %3503 = vmatprep.subr.bf16.mxu0 0
        %3504 = vmatpush1.bf16.msra.mxu0 0
        %3505 = vmatprep.subr.bf16.mxu0 0
        %3506 = vmatpush1.bf16.msra.mxu0 0
        %3507 = vmatprep.subr.bf16.mxu0 0
        %3508 = vmatpush1.bf16.msra.mxu0 0
        %3509 = vmatprep.subr.bf16.mxu0 0
        %3510 = vmatpush1.bf16.msra.mxu0 0
        %3511 = vmatprep.subr.bf16.mxu0 0
        %3512 = vmatpush1.bf16.msra.mxu0 0
        %3513 = vmatprep.subr.bf16.mxu0 0
        %3514 = vmatpush1.bf16.msra.mxu0 0
        %3515 = vmatprep.subr.bf16.mxu0 0
        %3516 = vmatpush1.bf16.msra.mxu0 0
        %3517 = vmatprep.subr.bf16.mxu0 0
        %3518 = vmatpush1.bf16.msra.mxu0 0
        %3519 = vmatprep.mubr.bf16.mxu0 0
        %3520 = vmatmul.mubr.bf16.gmra.mrb[0].mxu0 %v3219
        %v3521 = vpop.f32.mrb[0].mxu0
        %v3522 = vadd.f32 %v3457, %v3521
        %v3523 = vpop.f32.mrb[0].mxu0
        %v3524 = vpop.f32.mrb[0].mxu0
        %v3525 = vadd.f32 %v3460, %v3524
        %v3526 = vpop.f32.mrb[0].mxu0
        %3527 = vmatprep.mubr.bf16.mxu0 0
        %3528 = vmatmul.mubr.bf16.gmra.mrb[0].mxu0 %v3222
        %v3529 = vpop.f32.mrb[0].mxu0
        %v3530 = vadd.f32 %v3465, %v3529
        %v3531 = vpop.f32.mrb[0].mxu0
        %v3532 = vpop.f32.mrb[0].mxu0
        %v3533 = vadd.f32 %v3468, %v3532
        %v3534 = vpop.f32.mrb[0].mxu0
        %3535 = vmatprep.mubr.bf16.mxu0 0
        %3536 = vmatmul.mubr.bf16.gmra.mrb[0].mxu0 %v3225
        %v3537 = vpop.f32.mrb[0].mxu0
        %v3538 = vadd.f32 %v3473, %v3537
        %v3539 = vpop.f32.mrb[0].mxu0
        %v3540 = vpop.f32.mrb[0].mxu0
        %v3541 = vadd.f32 %v3476, %v3540
        %v3542 = vpop.f32.mrb[0].mxu0
        %3543 = vmatprep.mubr.bf16.mxu0 0
        %3544 = vmatmul.mubr.bf16.gmra.mrb[0].mxu0 %v3228
        %v3545 = vpop.f32.mrb[0].mxu0
        %v3546 = vadd.f32 %v3481, %v3545
        %v3547 = vpop.f32.mrb[0].mxu0
        %v3548 = vpop.f32.mrb[0].mxu0
        %v3549 = vadd.f32 %v3484, %v3548
        %v3550 = vpop.f32.mrb[0].mxu0
        %3551 = vdwg.mxu0
        %v3552 = vmax.f32 %v3522, 0.0
        %v3553 = vmax.f32 %v3525, 0.0
        %v3554 = vmax.f32 %v3530, 0.0
        %v3555 = vmax.f32 %v3533, 0.0
        %v3556 = vmax.f32 %v3538, 0.0
        %v3557 = vmax.f32 %v3541, 0.0
        %v3558 = vmax.f32 %v3546, 0.0
        %v3559 = vmax.f32 %v3549, 0.0
        %v3560 = vrot.slane %v3552, 7
        %v3561 = vrot.slane %v3553, 7
        %v3562 = vrot.slane %v3554, 7
        %v3563 = vrot.slane %v3555, 7
        %v3564 = vrot.slane %v3556, 7
        %v3565 = vrot.slane %v3557, 7
        %v3566 = vrot.slane %v3558, 7
        %v3567 = vrot.slane %v3559, 7
        %v3568 = vsel %vm407, %v3566, %v3567
        %v3569 = vsel %vm407, %v3565, %v3566
        %v3570 = vsel %vm407, %v3564, %v3565
        %v3571 = vsel %vm407, %v3563, %v3564
        %v3572 = vsel %vm407, %v3562, %v3563
        %v3573 = vsel %vm407, %v3561, %v3562
        %v3574 = vsel %vm407, %v3560, %v3561
        %v3575 = vsel %vm407, %v3567, %v3560
        %v3576 = vsel %vm424, %v3575, 0.0
        %v3577 = vsel %vm425, %v3574, 0.0
        %v3578 = vsel %vm426, %v3573, 0.0
        %v3579 = vsel %vm427, %v3572, 0.0
        %v3580 = vsel %vm428, %v3571, 0.0
        %v3581 = vsel %vm429, %v3570, 0.0
        %v3582 = vsel %vm430, %v3569, 0.0
        %v3583 = vsel %vm431, %v3568, 0.0
        %v3584 = vrot.slane %v3552, 1
        %v3585 = vrot.slane %v3553, 1
        %v3586 = vrot.slane %v3554, 1
        %v3587 = vrot.slane %v3555, 1
        %v3588 = vrot.slane %v3556, 1
        %v3589 = vrot.slane %v3557, 1
        %v3590 = vrot.slane %v3558, 1
        %v3591 = vrot.slane %v3559, 1
        %v3592 = vsel %vm448, %v3590, %v3591
        %v3593 = vsel %vm448, %v3589, %v3590
        %v3594 = vsel %vm448, %v3588, %v3589
        %v3595 = vsel %vm448, %v3587, %v3588
        %v3596 = vsel %vm448, %v3586, %v3587
        %v3597 = vsel %vm448, %v3585, %v3586
        %v3598 = vsel %vm448, %v3584, %v3585
        %v3599 = vsel %vm448, %v3591, %v3584
        %v3600 = vsel %vm465, %v3598, 0.0
        %v3601 = vsel %vm466, %v3597, 0.0
        %v3602 = vsel %vm467, %v3596, 0.0
        %v3603 = vsel %vm468, %v3595, 0.0
        %v3604 = vsel %vm469, %v3594, 0.0
        %v3605 = vsel %vm470, %v3593, 0.0
        %v3606 = vsel %vm471, %v3592, 0.0
        %v3607 = vsel %vm472, %v3599, 0.0
        %v3608 = vpack.c.bf16 %v3577, %v3576
        %v3609 = vpack.c.bf16 %v3553, %v3552
        %v3610 = vpack.c.bf16 %v3601, %v3600
        %v3611 = vpack.c.bf16 %v3579, %v3578
        %v3612 = vpack.c.bf16 %v3555, %v3554
        %v3613 = vpack.c.bf16 %v3603, %v3602
        %v3614 = vpack.c.bf16 %v3581, %v3580
        %v3615 = vpack.c.bf16 %v3557, %v3556
        %v3616 = vpack.c.bf16 %v3605, %v3604
        %v3617 = vpack.c.bf16 %v3583, %v3582
        %v3618 = vpack.c.bf16 %v3559, %v3558
        %v3619 = vpack.c.bf16 %v3607, %v3606
        %s3620 = scalar_lea.vmem [#allocation3], 1536
        %v3621 = vld [vmem:[%s3620] sm:$0xf]
        %v3622 = vld [vmem:[%s3620 + $0x4] sm:$0xf]
        %v3623 = vld [vmem:[%s3620 + $0x8] sm:$0xf]
        %v3624 = vld [vmem:[%s3620 + $0xc] sm:$0xf]
        %v3625 = vld [vmem:[%s3620 + $0x10] sm:$0xf]
        %v3626 = vld [vmem:[%s3620 + $0x14] sm:$0xf]
        %v3627 = vld [vmem:[%s3620 + $0x18] sm:$0xf]
        %v3628 = vld [vmem:[%s3620 + $0x1c] sm:$0xf]
        %v3629 = vld [vmem:[%s3620 + $0x20] sm:$0xf]
        %v3630 = vld [vmem:[%s3620 + $0x24] sm:$0xf]
        %v3631 = vld [vmem:[%s3620 + $0x28] sm:$0xf]
        %v3632 = vld [vmem:[%s3620 + $0x2c] sm:$0xf]
        %v3633 = vld [vmem:[%s3620 + $0x30] sm:$0xf]
        %v3634 = vld [vmem:[%s3620 + $0x34] sm:$0xf]
        %v3635 = vld [vmem:[%s3620 + $0x38] sm:$0xf]
        %v3636 = vld [vmem:[%s3620 + $0x3c] sm:$0xf]
        %v3637 = vld [vmem:[%s3620 + $0x40] sm:$0xf]
        %v3638 = vld [vmem:[%s3620 + $0x44] sm:$0xf]
        %v3639 = vld [vmem:[%s3620 + $0x48] sm:$0xf]
        %v3640 = vld [vmem:[%s3620 + $0x4c] sm:$0xf]
        %v3641 = vld [vmem:[%s3620 + $0x50] sm:$0xf]
        %v3642 = vld [vmem:[%s3620 + $0x54] sm:$0xf]
        %v3643 = vld [vmem:[%s3620 + $0x58] sm:$0xf]
        %v3644 = vld [vmem:[%s3620 + $0x5c] sm:$0xf]
        %v3645 = vld [vmem:[%s3620 + $0x60] sm:$0xf]
        %v3646 = vld [vmem:[%s3620 + $0x64] sm:$0xf]
        %v3647 = vld [vmem:[%s3620 + $0x68] sm:$0xf]
        %v3648 = vld [vmem:[%s3620 + $0x6c] sm:$0xf]
        %v3649 = vld [vmem:[%s3620 + $0x70] sm:$0xf]
        %v3650 = vld [vmem:[%s3620 + $0x74] sm:$0xf]
        %v3651 = vld [vmem:[%s3620 + $0x78] sm:$0xf]
        %v3652 = vld [vmem:[%s3620 + $0x7c] sm:$0xf]
        %v3653 = vld [vmem:[%s3620 + $0x80] sm:$0xf]
        %v3654 = vld [vmem:[%s3620 + $0x84] sm:$0xf]
        %v3655 = vld [vmem:[%s3620 + $0x88] sm:$0xf]
        %v3656 = vld [vmem:[%s3620 + $0x8c] sm:$0xf]
        %v3657 = vld [vmem:[%s3620 + $0x90] sm:$0xf]
        %v3658 = vld [vmem:[%s3620 + $0x94] sm:$0xf]
        %v3659 = vld [vmem:[%s3620 + $0x98] sm:$0xf]
        %v3660 = vld [vmem:[%s3620 + $0x9c] sm:$0xf]
        %v3661 = vld [vmem:[%s3620 + $0xa0] sm:$0xf]
        %v3662 = vld [vmem:[%s3620 + $0xa4] sm:$0xf]
        %v3663 = vld [vmem:[%s3620 + $0xa8] sm:$0xf]
        %v3664 = vld [vmem:[%s3620 + $0xac] sm:$0xf]
        %v3665 = vld [vmem:[%s3620 + $0xb0] sm:$0xf]
        %v3666 = vld [vmem:[%s3620 + $0xb4] sm:$0xf]
        %v3667 = vld [vmem:[%s3620 + $0xb8] sm:$0xf]
        %v3668 = vld [vmem:[%s3620 + $0xbc] sm:$0xf]
        %v3717 = vunpack.c.l.b16 %v3621
        %v3718 = vunpack.c.l.b16 %v3622
        %v3719 = vunpack.c.l.b16 %v3623
        %v3720 = vunpack.c.l.b16 %v3624
        %v3721 = vunpack.c.l.b16 %v3625
        %v3722 = vunpack.c.l.b16 %v3626
        %v3723 = vunpack.c.l.b16 %v3627
        %v3724 = vunpack.c.l.b16 %v3628
        %v3725 = vunpack.c.l.b16 %v3629
        %v3726 = vunpack.c.l.b16 %v3630
        %v3727 = vunpack.c.l.b16 %v3631
        %v3728 = vunpack.c.l.b16 %v3632
        %v3729 = vunpack.c.l.b16 %v3633
        %v3730 = vunpack.c.l.b16 %v3634
        %v3731 = vunpack.c.l.b16 %v3635
        %v3732 = vunpack.c.l.b16 %v3636
        %v3733 = vunpack.c.l.b16 %v3637
        %v3734 = vunpack.c.l.b16 %v3638
        %v3735 = vunpack.c.l.b16 %v3639
        %v3736 = vunpack.c.l.b16 %v3640
        %v3737 = vunpack.c.l.b16 %v3641
        %v3738 = vunpack.c.l.b16 %v3642
        %v3739 = vunpack.c.l.b16 %v3643
        %v3740 = vunpack.c.l.b16 %v3644
        %v3741 = vunpack.c.l.b16 %v3645
        %v3742 = vunpack.c.l.b16 %v3646
        %v3743 = vunpack.c.l.b16 %v3647
        %v3744 = vunpack.c.l.b16 %v3648
        %v3745 = vunpack.c.l.b16 %v3649
        %v3746 = vunpack.c.l.b16 %v3650
        %v3747 = vunpack.c.l.b16 %v3651
        %v3748 = vunpack.c.l.b16 %v3652
        %v3749 = vunpack.c.l.b16 %v3653
        %v3750 = vunpack.c.l.b16 %v3654
        %v3751 = vunpack.c.l.b16 %v3655
        %v3752 = vunpack.c.l.b16 %v3656
        %v3753 = vunpack.c.l.b16 %v3657
        %v3754 = vunpack.c.l.b16 %v3658
        %v3755 = vunpack.c.l.b16 %v3659
        %v3756 = vunpack.c.l.b16 %v3660
        %v3757 = vunpack.c.l.b16 %v3661
        %v3758 = vunpack.c.l.b16 %v3662
        %v3759 = vunpack.c.l.b16 %v3663
        %v3760 = vunpack.c.l.b16 %v3664
        %v3761 = vunpack.c.l.b16 %v3665
        %v3762 = vunpack.c.l.b16 %v3666
        %v3763 = vunpack.c.l.b16 %v3667
        %v3764 = vunpack.c.l.b16 %v3668
        %v3765 = vpack.c.b16 %v3718, %v3717
        %v3766 = vpack.c.b16 %v3720, %v3719
        %v3767 = vpack.c.b16 %v3722, %v3721
        %v3768 = vpack.c.b16 %v3724, %v3723
        %v3769 = vpack.c.b16 %v3726, %v3725
        %v3770 = vpack.c.b16 %v3728, %v3727
        %v3771 = vpack.c.b16 %v3730, %v3729
        %v3772 = vpack.c.b16 %v3732, %v3731
        %v3773 = vpack.c.b16 %v3734, %v3733
        %v3774 = vpack.c.b16 %v3736, %v3735
        %v3775 = vpack.c.b16 %v3738, %v3737
        %v3776 = vpack.c.b16 %v3740, %v3739
        %v3777 = vpack.c.b16 %v3742, %v3741
        %v3778 = vpack.c.b16 %v3744, %v3743
        %v3779 = vpack.c.b16 %v3746, %v3745
        %v3780 = vpack.c.b16 %v3748, %v3747
        %v3781 = vpack.c.b16 %v3750, %v3749
        %v3782 = vpack.c.b16 %v3752, %v3751
        %v3783 = vpack.c.b16 %v3754, %v3753
        %v3784 = vpack.c.b16 %v3756, %v3755
        %v3785 = vpack.c.b16 %v3758, %v3757
        %v3786 = vpack.c.b16 %v3760, %v3759
        %v3787 = vpack.c.b16 %v3762, %v3761
        %v3788 = vpack.c.b16 %v3764, %v3763
        %3813 = vmatprep.subr.bf16.mxu0 0
        %3814 = vmatpush1.bf16.msra.mxu0 %v3765
        %3815 = vmatprep.subr.bf16.mxu0 0
        %3816 = vmatpush1.bf16.msra.mxu0 %v3766
        %3817 = vmatprep.subr.bf16.mxu0 0
        %3818 = vmatpush1.bf16.msra.mxu0 %v3767
        %3819 = vmatprep.subr.bf16.mxu0 0
        %3820 = vmatpush1.bf16.msra.mxu0 %v3768
        %3821 = vmatprep.subr.bf16.mxu0 0
        %3822 = vmatpush1.bf16.msra.mxu0 %v3769
        %3823 = vmatprep.subr.bf16.mxu0 0
        %3824 = vmatpush1.bf16.msra.mxu0 %v3770
        %3825 = vmatprep.subr.bf16.mxu0 0
        %3826 = vmatpush1.bf16.msra.mxu0 %v3771
        %3827 = vmatprep.subr.bf16.mxu0 0
        %3828 = vmatpush1.bf16.msra.mxu0 %v3772
        %3829 = vmatprep.subr.bf16.mxu0 0
        %3830 = vmatpush1.bf16.msra.mxu0 %v3773
        %3831 = vmatprep.subr.bf16.mxu0 0
        %3832 = vmatpush1.bf16.msra.mxu0 %v3774
        %3833 = vmatprep.subr.bf16.mxu0 0
        %3834 = vmatpush1.bf16.msra.mxu0 %v3775
        %3835 = vmatprep.subr.bf16.mxu0 0
        %3836 = vmatpush1.bf16.msra.mxu0 %v3776
        %3837 = vmatprep.subr.bf16.mxu0 0
        %3838 = vmatpush1.bf16.msra.mxu0 %v3777
        %3839 = vmatprep.subr.bf16.mxu0 0
        %3840 = vmatpush1.bf16.msra.mxu0 %v3778
        %3841 = vmatprep.subr.bf16.mxu0 0
        %3842 = vmatpush1.bf16.msra.mxu0 %v3779
        %3843 = vmatprep.subr.bf16.mxu0 0
        %3844 = vmatpush1.bf16.msra.mxu0 %v3780
        %3845 = vmatprep.mubr.bf16.mxu0 %v3609
        %3846 = vmatmul.mubr.bf16.gmra.mrb[0].mxu0 %v3608
        %v3847 = vpop.f32.mrb[0].mxu0
        %v3848 = vadd.f32 0.0, %v3847
        %v3849 = vpop.f32.mrb[0].mxu0
        %v3850 = vpop.f32.mrb[0].mxu0
        %v3851 = vadd.f32 0.0, %v3850
        %v3852 = vpop.f32.mrb[0].mxu0
        %3853 = vmatprep.mubr.bf16.mxu0 %v3612
        %3854 = vmatmul.mubr.bf16.gmra.mrb[0].mxu0 %v3611
        %v3855 = vpop.f32.mrb[0].mxu0
        %v3856 = vadd.f32 0.0, %v3855
        %v3857 = vpop.f32.mrb[0].mxu0
        %v3858 = vpop.f32.mrb[0].mxu0
        %v3859 = vadd.f32 0.0, %v3858
        %v3860 = vpop.f32.mrb[0].mxu0
        %3861 = vmatprep.mubr.bf16.mxu0 %v3615
        %3862 = vmatmul.mubr.bf16.gmra.mrb[0].mxu0 %v3614
        %v3863 = vpop.f32.mrb[0].mxu0
        %v3864 = vadd.f32 0.0, %v3863
        %v3865 = vpop.f32.mrb[0].mxu0
        %v3866 = vpop.f32.mrb[0].mxu0
        %v3867 = vadd.f32 0.0, %v3866
        %v3868 = vpop.f32.mrb[0].mxu0
        %3869 = vmatprep.mubr.bf16.mxu0 %v3618
        %3870 = vmatmul.mubr.bf16.gmra.mrb[0].mxu0 %v3617
        %v3871 = vpop.f32.mrb[0].mxu0
        %v3872 = vadd.f32 0.0, %v3871
        %v3873 = vpop.f32.mrb[0].mxu0
        %v3874 = vpop.f32.mrb[0].mxu0
        %v3875 = vadd.f32 0.0, %v3874
        %v3876 = vpop.f32.mrb[0].mxu0
        %3877 = vdwg.mxu0
        %3878 = vmatprep.subr.bf16.mxu0 0
        %3879 = vmatpush1.bf16.msra.mxu0 %v3781
        %3880 = vmatprep.subr.bf16.mxu0 0
        %3881 = vmatpush1.bf16.msra.mxu0 %v3782
        %3882 = vmatprep.subr.bf16.mxu0 0
        %3883 = vmatpush1.bf16.msra.mxu0 %v3783
        %3884 = vmatprep.subr.bf16.mxu0 0
        %3885 = vmatpush1.bf16.msra.mxu0 %v3784
        %3886 = vmatprep.subr.bf16.mxu0 0
        %3887 = vmatpush1.bf16.msra.mxu0 %v3785
        %3888 = vmatprep.subr.bf16.mxu0 0
        %3889 = vmatpush1.bf16.msra.mxu0 %v3786
        %3890 = vmatprep.subr.bf16.mxu0 0
        %3891 = vmatpush1.bf16.msra.mxu0 %v3787
        %3892 = vmatprep.subr.bf16.mxu0 0
        %3893 = vmatpush1.bf16.msra.mxu0 %v3788
        %3894 = vmatprep.subr.bf16.mxu0 0
        %3895 = vmatpush1.bf16.msra.mxu0 0
        %3896 = vmatprep.subr.bf16.mxu0 0
        %3897 = vmatpush1.bf16.msra.mxu0 0
        %3898 = vmatprep.subr.bf16.mxu0 0
        %3899 = vmatpush1.bf16.msra.mxu0 0
        %3900 = vmatprep.subr.bf16.mxu0 0
        %3901 = vmatpush1.bf16.msra.mxu0 0
        %3902 = vmatprep.subr.bf16.mxu0 0
        %3903 = vmatpush1.bf16.msra.mxu0 0
        %3904 = vmatprep.subr.bf16.mxu0 0
        %3905 = vmatpush1.bf16.msra.mxu0 0
        %3906 = vmatprep.subr.bf16.mxu0 0
        %3907 = vmatpush1.bf16.msra.mxu0 0
        %3908 = vmatprep.subr.bf16.mxu0 0
        %3909 = vmatpush1.bf16.msra.mxu0 0
        %3910 = vmatprep.mubr.bf16.mxu0 0
        %3911 = vmatmul.mubr.bf16.gmra.mrb[0].mxu0 %v3610
        %v3912 = vpop.f32.mrb[0].mxu0
        %v3913 = vadd.f32 %v3848, %v3912
        %v3914 = vpop.f32.mrb[0].mxu0
        %v3915 = vpop.f32.mrb[0].mxu0
        %v3916 = vadd.f32 %v3851, %v3915
        %v3917 = vpop.f32.mrb[0].mxu0
        %3918 = vmatprep.mubr.bf16.mxu0 0
        %3919 = vmatmul.mubr.bf16.gmra.mrb[0].mxu0 %v3613
        %v3920 = vpop.f32.mrb[0].mxu0
        %v3921 = vadd.f32 %v3856, %v3920
        %v3922 = vpop.f32.mrb[0].mxu0
        %v3923 = vpop.f32.mrb[0].mxu0
        %v3924 = vadd.f32 %v3859, %v3923
        %v3925 = vpop.f32.mrb[0].mxu0
        %3926 = vmatprep.mubr.bf16.mxu0 0
        %3927 = vmatmul.mubr.bf16.gmra.mrb[0].mxu0 %v3616
        %v3928 = vpop.f32.mrb[0].mxu0
        %v3929 = vadd.f32 %v3864, %v3928
        %v3930 = vpop.f32.mrb[0].mxu0
        %v3931 = vpop.f32.mrb[0].mxu0
        %v3932 = vadd.f32 %v3867, %v3931
        %v3933 = vpop.f32.mrb[0].mxu0
        %3934 = vmatprep.mubr.bf16.mxu0 0
        %3935 = vmatmul.mubr.bf16.gmra.mrb[0].mxu0 %v3619
        %v3936 = vpop.f32.mrb[0].mxu0
        %v3937 = vadd.f32 %v3872, %v3936
        %v3938 = vpop.f32.mrb[0].mxu0
        %v3939 = vpop.f32.mrb[0].mxu0
        %v3940 = vadd.f32 %v3875, %v3939
        %v3941 = vpop.f32.mrb[0].mxu0
        %3942 = vdwg.mxu0
        %v3943 = vmax.f32 %v3913, 0.0
        %v3944 = vmax.f32 %v3916, 0.0
        %v3945 = vmax.f32 %v3921, 0.0
        %v3946 = vmax.f32 %v3924, 0.0
        %v3947 = vmax.f32 %v3929, 0.0
        %v3948 = vmax.f32 %v3932, 0.0
        %v3949 = vmax.f32 %v3937, 0.0
        %v3950 = vmax.f32 %v3940, 0.0
        %v3951 = vrot.slane %v3943, 7
        %v3952 = vrot.slane %v3944, 7
        %v3953 = vrot.slane %v3945, 7
        %v3954 = vrot.slane %v3946, 7
        %v3955 = vrot.slane %v3947, 7
        %v3956 = vrot.slane %v3948, 7
        %v3957 = vrot.slane %v3949, 7
        %v3958 = vrot.slane %v3950, 7
        %v3959 = vsel %vm407, %v3957, %v3958
        %v3960 = vsel %vm407, %v3956, %v3957
        %v3961 = vsel %vm407, %v3955, %v3956
        %v3962 = vsel %vm407, %v3954, %v3955
        %v3963 = vsel %vm407, %v3953, %v3954
        %v3964 = vsel %vm407, %v3952, %v3953
        %v3965 = vsel %vm407, %v3951, %v3952
        %v3966 = vsel %vm407, %v3958, %v3951
        %v3967 = vsel %vm424, %v3966, 0.0
        %v3968 = vsel %vm425, %v3965, 0.0
        %v3969 = vsel %vm426, %v3964, 0.0
        %v3970 = vsel %vm427, %v3963, 0.0
        %v3971 = vsel %vm428, %v3962, 0.0
        %v3972 = vsel %vm429, %v3961, 0.0
        %v3973 = vsel %vm430, %v3960, 0.0
        %v3974 = vsel %vm431, %v3959, 0.0
        %v3975 = vrot.slane %v3943, 1
        %v3976 = vrot.slane %v3944, 1
        %v3977 = vrot.slane %v3945, 1
        %v3978 = vrot.slane %v3946, 1
        %v3979 = vrot.slane %v3947, 1
        %v3980 = vrot.slane %v3948, 1
        %v3981 = vrot.slane %v3949, 1
        %v3982 = vrot.slane %v3950, 1
        %v3983 = vsel %vm448, %v3981, %v3982
        %v3984 = vsel %vm448, %v3980, %v3981
        %v3985 = vsel %vm448, %v3979, %v3980
        %v3986 = vsel %vm448, %v3978, %v3979
        %v3987 = vsel %vm448, %v3977, %v3978
        %v3988 = vsel %vm448, %v3976, %v3977
        %v3989 = vsel %vm448, %v3975, %v3976
        %v3990 = vsel %vm448, %v3982, %v3975
        %v3991 = vsel %vm465, %v3989, 0.0
        %v3992 = vsel %vm466, %v3988, 0.0
        %v3993 = vsel %vm467, %v3987, 0.0
        %v3994 = vsel %vm468, %v3986, 0.0
        %v3995 = vsel %vm469, %v3985, 0.0
        %v3996 = vsel %vm470, %v3984, 0.0
        %v3997 = vsel %vm471, %v3983, 0.0
        %v3998 = vsel %vm472, %v3990, 0.0
        %v3999 = vpack.c.bf16 %v3968, %v3967
        %v4000 = vpack.c.bf16 %v3944, %v3943
        %v4001 = vpack.c.bf16 %v3992, %v3991
        %v4002 = vpack.c.bf16 %v3970, %v3969
        %v4003 = vpack.c.bf16 %v3946, %v3945
        %v4004 = vpack.c.bf16 %v3994, %v3993
        %v4005 = vpack.c.bf16 %v3972, %v3971
        %v4006 = vpack.c.bf16 %v3948, %v3947
        %v4007 = vpack.c.bf16 %v3996, %v3995
        %v4008 = vpack.c.bf16 %v3974, %v3973
        %v4009 = vpack.c.bf16 %v3950, %v3949
        %v4010 = vpack.c.bf16 %v3998, %v3997
        %s4011 = scalar_lea.vmem [#allocation3], 1728
        %v4012 = vld [vmem:[%s4011] sm:$0xf]
        %v4013 = vld [vmem:[%s4011 + $0x4] sm:$0xf]
        %v4014 = vld [vmem:[%s4011 + $0x8] sm:$0xf]
        %v4015 = vld [vmem:[%s4011 + $0xc] sm:$0xf]
        %v4016 = vld [vmem:[%s4011 + $0x10] sm:$0xf]
        %v4017 = vld [vmem:[%s4011 + $0x14] sm:$0xf]
        %v4018 = vld [vmem:[%s4011 + $0x18] sm:$0xf]
        %v4019 = vld [vmem:[%s4011 + $0x1c] sm:$0xf]
        %v4020 = vld [vmem:[%s4011 + $0x20] sm:$0xf]
        %v4021 = vld [vmem:[%s4011 + $0x24] sm:$0xf]
        %v4022 = vld [vmem:[%s4011 + $0x28] sm:$0xf]
        %v4023 = vld [vmem:[%s4011 + $0x2c] sm:$0xf]
        %v4024 = vld [vmem:[%s4011 + $0x30] sm:$0xf]
        %v4025 = vld [vmem:[%s4011 + $0x34] sm:$0xf]
        %v4026 = vld [vmem:[%s4011 + $0x38] sm:$0xf]
        %v4027 = vld [vmem:[%s4011 + $0x3c] sm:$0xf]
        %v4028 = vld [vmem:[%s4011 + $0x40] sm:$0xf]
        %v4029 = vld [vmem:[%s4011 + $0x44] sm:$0xf]
        %v4030 = vld [vmem:[%s4011 + $0x48] sm:$0xf]
        %v4031 = vld [vmem:[%s4011 + $0x4c] sm:$0xf]
        %v4032 = vld [vmem:[%s4011 + $0x50] sm:$0xf]
        %v4033 = vld [vmem:[%s4011 + $0x54] sm:$0xf]
        %v4034 = vld [vmem:[%s4011 + $0x58] sm:$0xf]
        %v4035 = vld [vmem:[%s4011 + $0x5c] sm:$0xf]
        %v4036 = vld [vmem:[%s4011 + $0x60] sm:$0xf]
        %v4037 = vld [vmem:[%s4011 + $0x64] sm:$0xf]
        %v4038 = vld [vmem:[%s4011 + $0x68] sm:$0xf]
        %v4039 = vld [vmem:[%s4011 + $0x6c] sm:$0xf]
        %v4040 = vld [vmem:[%s4011 + $0x70] sm:$0xf]
        %v4041 = vld [vmem:[%s4011 + $0x74] sm:$0xf]
        %v4042 = vld [vmem:[%s4011 + $0x78] sm:$0xf]
        %v4043 = vld [vmem:[%s4011 + $0x7c] sm:$0xf]
        %v4044 = vld [vmem:[%s4011 + $0x80] sm:$0xf]
        %v4045 = vld [vmem:[%s4011 + $0x84] sm:$0xf]
        %v4046 = vld [vmem:[%s4011 + $0x88] sm:$0xf]
        %v4047 = vld [vmem:[%s4011 + $0x8c] sm:$0xf]
        %v4048 = vld [vmem:[%s4011 + $0x90] sm:$0xf]
        %v4049 = vld [vmem:[%s4011 + $0x94] sm:$0xf]
        %v4050 = vld [vmem:[%s4011 + $0x98] sm:$0xf]
        %v4051 = vld [vmem:[%s4011 + $0x9c] sm:$0xf]
        %v4052 = vld [vmem:[%s4011 + $0xa0] sm:$0xf]
        %v4053 = vld [vmem:[%s4011 + $0xa4] sm:$0xf]
        %v4054 = vld [vmem:[%s4011 + $0xa8] sm:$0xf]
        %v4055 = vld [vmem:[%s4011 + $0xac] sm:$0xf]
        %v4056 = vld [vmem:[%s4011 + $0xb0] sm:$0xf]
        %v4057 = vld [vmem:[%s4011 + $0xb4] sm:$0xf]
        %v4058 = vld [vmem:[%s4011 + $0xb8] sm:$0xf]
        %v4059 = vld [vmem:[%s4011 + $0xbc] sm:$0xf]
        %v4108 = vunpack.c.l.b16 %v4012
        %v4109 = vunpack.c.l.b16 %v4013
        %v4110 = vunpack.c.l.b16 %v4014
        %v4111 = vunpack.c.l.b16 %v4015
        %v4112 = vunpack.c.l.b16 %v4016
        %v4113 = vunpack.c.l.b16 %v4017
        %v4114 = vunpack.c.l.b16 %v4018
        %v4115 = vunpack.c.l.b16 %v4019
        %v4116 = vunpack.c.l.b16 %v4020
        %v4117 = vunpack.c.l.b16 %v4021
        %v4118 = vunpack.c.l.b16 %v4022
        %v4119 = vunpack.c.l.b16 %v4023
        %v4120 = vunpack.c.l.b16 %v4024
        %v4121 = vunpack.c.l.b16 %v4025
        %v4122 = vunpack.c.l.b16 %v4026
        %v4123 = vunpack.c.l.b16 %v4027
        %v4124 = vunpack.c.l.b16 %v4028
        %v4125 = vunpack.c.l.b16 %v4029
        %v4126 = vunpack.c.l.b16 %v4030
        %v4127 = vunpack.c.l.b16 %v4031
        %v4128 = vunpack.c.l.b16 %v4032
        %v4129 = vunpack.c.l.b16 %v4033
        %v4130 = vunpack.c.l.b16 %v4034
        %v4131 = vunpack.c.l.b16 %v4035
        %v4132 = vunpack.c.l.b16 %v4036
        %v4133 = vunpack.c.l.b16 %v4037
        %v4134 = vunpack.c.l.b16 %v4038
        %v4135 = vunpack.c.l.b16 %v4039
        %v4136 = vunpack.c.l.b16 %v4040
        %v4137 = vunpack.c.l.b16 %v4041
        %v4138 = vunpack.c.l.b16 %v4042
        %v4139 = vunpack.c.l.b16 %v4043
        %v4140 = vunpack.c.l.b16 %v4044
        %v4141 = vunpack.c.l.b16 %v4045
        %v4142 = vunpack.c.l.b16 %v4046
        %v4143 = vunpack.c.l.b16 %v4047
        %v4144 = vunpack.c.l.b16 %v4048
        %v4145 = vunpack.c.l.b16 %v4049
        %v4146 = vunpack.c.l.b16 %v4050
        %v4147 = vunpack.c.l.b16 %v4051
        %v4148 = vunpack.c.l.b16 %v4052
        %v4149 = vunpack.c.l.b16 %v4053
        %v4150 = vunpack.c.l.b16 %v4054
        %v4151 = vunpack.c.l.b16 %v4055
        %v4152 = vunpack.c.l.b16 %v4056
        %v4153 = vunpack.c.l.b16 %v4057
        %v4154 = vunpack.c.l.b16 %v4058
        %v4155 = vunpack.c.l.b16 %v4059
        %v4156 = vpack.c.b16 %v4109, %v4108
        %v4157 = vpack.c.b16 %v4111, %v4110
        %v4158 = vpack.c.b16 %v4113, %v4112
        %v4159 = vpack.c.b16 %v4115, %v4114
        %v4160 = vpack.c.b16 %v4117, %v4116
        %v4161 = vpack.c.b16 %v4119, %v4118
        %v4162 = vpack.c.b16 %v4121, %v4120
        %v4163 = vpack.c.b16 %v4123, %v4122
        %v4164 = vpack.c.b16 %v4125, %v4124
        %v4165 = vpack.c.b16 %v4127, %v4126
        %v4166 = vpack.c.b16 %v4129, %v4128
        %v4167 = vpack.c.b16 %v4131, %v4130
        %v4168 = vpack.c.b16 %v4133, %v4132
        %v4169 = vpack.c.b16 %v4135, %v4134
        %v4170 = vpack.c.b16 %v4137, %v4136
        %v4171 = vpack.c.b16 %v4139, %v4138
        %v4172 = vpack.c.b16 %v4141, %v4140
        %v4173 = vpack.c.b16 %v4143, %v4142
        %v4174 = vpack.c.b16 %v4145, %v4144
        %v4175 = vpack.c.b16 %v4147, %v4146
        %v4176 = vpack.c.b16 %v4149, %v4148
        %v4177 = vpack.c.b16 %v4151, %v4150
        %v4178 = vpack.c.b16 %v4153, %v4152
        %v4179 = vpack.c.b16 %v4155, %v4154
        %4204 = vmatprep.subr.bf16.mxu0 0
        %4205 = vmatpush1.bf16.msra.mxu0 %v4156
        %4206 = vmatprep.subr.bf16.mxu0 0
        %4207 = vmatpush1.bf16.msra.mxu0 %v4157
        %4208 = vmatprep.subr.bf16.mxu0 0
        %4209 = vmatpush1.bf16.msra.mxu0 %v4158
        %4210 = vmatprep.subr.bf16.mxu0 0
        %4211 = vmatpush1.bf16.msra.mxu0 %v4159
        %4212 = vmatprep.subr.bf16.mxu0 0
        %4213 = vmatpush1.bf16.msra.mxu0 %v4160
        %4214 = vmatprep.subr.bf16.mxu0 0
        %4215 = vmatpush1.bf16.msra.mxu0 %v4161
        %4216 = vmatprep.subr.bf16.mxu0 0
        %4217 = vmatpush1.bf16.msra.mxu0 %v4162
        %4218 = vmatprep.subr.bf16.mxu0 0
        %4219 = vmatpush1.bf16.msra.mxu0 %v4163
        %4220 = vmatprep.subr.bf16.mxu0 0
        %4221 = vmatpush1.bf16.msra.mxu0 %v4164
        %4222 = vmatprep.subr.bf16.mxu0 0
        %4223 = vmatpush1.bf16.msra.mxu0 %v4165
        %4224 = vmatprep.subr.bf16.mxu0 0
        %4225 = vmatpush1.bf16.msra.mxu0 %v4166
        %4226 = vmatprep.subr.bf16.mxu0 0
        %4227 = vmatpush1.bf16.msra.mxu0 %v4167
        %4228 = vmatprep.subr.bf16.mxu0 0
        %4229 = vmatpush1.bf16.msra.mxu0 %v4168
        %4230 = vmatprep.subr.bf16.mxu0 0
        %4231 = vmatpush1.bf16.msra.mxu0 %v4169
        %4232 = vmatprep.subr.bf16.mxu0 0
        %4233 = vmatpush1.bf16.msra.mxu0 %v4170
        %4234 = vmatprep.subr.bf16.mxu0 0
        %4235 = vmatpush1.bf16.msra.mxu0 %v4171
        %4236 = vmatprep.mubr.bf16.mxu0 %v4000
        %4237 = vmatmul.mubr.bf16.gmra.mrb[0].mxu0 %v3999
        %v4238 = vpop.f32.mrb[0].mxu0
        %v4239 = vadd.f32 0.0, %v4238
        %v4240 = vpop.f32.mrb[0].mxu0
        %v4241 = vpop.f32.mrb[0].mxu0
        %v4242 = vadd.f32 0.0, %v4241
        %v4243 = vpop.f32.mrb[0].mxu0
        %4244 = vmatprep.mubr.bf16.mxu0 %v4003
        %4245 = vmatmul.mubr.bf16.gmra.mrb[0].mxu0 %v4002
        %v4246 = vpop.f32.mrb[0].mxu0
        %v4247 = vadd.f32 0.0, %v4246
        %v4248 = vpop.f32.mrb[0].mxu0
        %v4249 = vpop.f32.mrb[0].mxu0
        %v4250 = vadd.f32 0.0, %v4249
        %v4251 = vpop.f32.mrb[0].mxu0
        %4252 = vmatprep.mubr.bf16.mxu0 %v4006
        %4253 = vmatmul.mubr.bf16.gmra.mrb[0].mxu0 %v4005
        %v4254 = vpop.f32.mrb[0].mxu0
        %v4255 = vadd.f32 0.0, %v4254
        %v4256 = vpop.f32.mrb[0].mxu0
        %v4257 = vpop.f32.mrb[0].mxu0
        %v4258 = vadd.f32 0.0, %v4257
        %v4259 = vpop.f32.mrb[0].mxu0
        %4260 = vmatprep.mubr.bf16.mxu0 %v4009
        %4261 = vmatmul.mubr.bf16.gmra.mrb[0].mxu0 %v4008
        %v4262 = vpop.f32.mrb[0].mxu0
        %v4263 = vadd.f32 0.0, %v4262
        %v4264 = vpop.f32.mrb[0].mxu0
        %v4265 = vpop.f32.mrb[0].mxu0
        %v4266 = vadd.f32 0.0, %v4265
        %v4267 = vpop.f32.mrb[0].mxu0
        %4268 = vdwg.mxu0
        %4269 = vmatprep.subr.bf16.mxu0 0
        %4270 = vmatpush1.bf16.msra.mxu0 %v4172
        %4271 = vmatprep.subr.bf16.mxu0 0
        %4272 = vmatpush1.bf16.msra.mxu0 %v4173
        %4273 = vmatprep.subr.bf16.mxu0 0
        %4274 = vmatpush1.bf16.msra.mxu0 %v4174
        %4275 = vmatprep.subr.bf16.mxu0 0
        %4276 = vmatpush1.bf16.msra.mxu0 %v4175
        %4277 = vmatprep.subr.bf16.mxu0 0
        %4278 = vmatpush1.bf16.msra.mxu0 %v4176
        %4279 = vmatprep.subr.bf16.mxu0 0
        %4280 = vmatpush1.bf16.msra.mxu0 %v4177
        %4281 = vmatprep.subr.bf16.mxu0 0
        %4282 = vmatpush1.bf16.msra.mxu0 %v4178
        %4283 = vmatprep.subr.bf16.mxu0 0
        %4284 = vmatpush1.bf16.msra.mxu0 %v4179
        %4285 = vmatprep.subr.bf16.mxu0 0
        %4286 = vmatpush1.bf16.msra.mxu0 0
        %4287 = vmatprep.subr.bf16.mxu0 0
        %4288 = vmatpush1.bf16.msra.mxu0 0
        %4289 = vmatprep.subr.bf16.mxu0 0
        %4290 = vmatpush1.bf16.msra.mxu0 0
        %4291 = vmatprep.subr.bf16.mxu0 0
        %4292 = vmatpush1.bf16.msra.mxu0 0
        %4293 = vmatprep.subr.bf16.mxu0 0
        %4294 = vmatpush1.bf16.msra.mxu0 0
        %4295 = vmatprep.subr.bf16.mxu0 0
        %4296 = vmatpush1.bf16.msra.mxu0 0
        %4297 = vmatprep.subr.bf16.mxu0 0
        %4298 = vmatpush1.bf16.msra.mxu0 0
        %4299 = vmatprep.subr.bf16.mxu0 0
        %4300 = vmatpush1.bf16.msra.mxu0 0
        %4301 = vmatprep.mubr.bf16.mxu0 0
        %4302 = vmatmul.mubr.bf16.gmra.mrb[0].mxu0 %v4001
        %v4303 = vpop.f32.mrb[0].mxu0
        %v4304 = vadd.f32 %v4239, %v4303
        %v4305 = vpop.f32.mrb[0].mxu0
        %v4306 = vpop.f32.mrb[0].mxu0
        %v4307 = vadd.f32 %v4242, %v4306
        %v4308 = vpop.f32.mrb[0].mxu0
        %4309 = vmatprep.mubr.bf16.mxu0 0
        %4310 = vmatmul.mubr.bf16.gmra.mrb[0].mxu0 %v4004
        %v4311 = vpop.f32.mrb[0].mxu0
        %v4312 = vadd.f32 %v4247, %v4311
        %v4313 = vpop.f32.mrb[0].mxu0
        %v4314 = vpop.f32.mrb[0].mxu0
        %v4315 = vadd.f32 %v4250, %v4314
        %v4316 = vpop.f32.mrb[0].mxu0
        %4317 = vmatprep.mubr.bf16.mxu0 0
        %4318 = vmatmul.mubr.bf16.gmra.mrb[0].mxu0 %v4007
        %v4319 = vpop.f32.mrb[0].mxu0
        %v4320 = vadd.f32 %v4255, %v4319
        %v4321 = vpop.f32.mrb[0].mxu0
        %v4322 = vpop.f32.mrb[0].mxu0
        %v4323 = vadd.f32 %v4258, %v4322
        %v4324 = vpop.f32.mrb[0].mxu0
        %4325 = vmatprep.mubr.bf16.mxu0 0
        %4326 = vmatmul.mubr.bf16.gmra.mrb[0].mxu0 %v4010
        %v4327 = vpop.f32.mrb[0].mxu0
        %v4328 = vadd.f32 %v4263, %v4327
        %v4329 = vpop.f32.mrb[0].mxu0
        %v4330 = vpop.f32.mrb[0].mxu0
        %v4331 = vadd.f32 %v4266, %v4330
        %v4332 = vpop.f32.mrb[0].mxu0
        %4333 = vdwg.mxu0
        %v4334 = vpack.c.bf16 %v4304, %v4304
        %v4335 = vpack.c.bf16 %v4307, %v4307
        %v4336 = vpack.c.bf16 %v4312, %v4312
        %v4337 = vpack.c.bf16 %v4315, %v4315
        %v4338 = vpack.c.bf16 %v4320, %v4320
        %v4339 = vpack.c.bf16 %v4323, %v4323
        %v4340 = vpack.c.bf16 %v4328, %v4328
        %v4341 = vpack.c.bf16 %v4331, %v4331
        %v4342 = vld [vmem:[%s2] sm:$0xf]
        %v4343 = vld [vmem:[%s2 + $0x4] sm:$0xf]
        %v4344 = vld [vmem:[%s2 + $0x8] sm:$0xf]
        %v4345 = vld [vmem:[%s2 + $0xc] sm:$0xf]
        %v4346 = vld [vmem:[%s2 + $0x10] sm:$0xf]
        %v4347 = vld [vmem:[%s2 + $0x14] sm:$0xf]
        %v4348 = vld [vmem:[%s2 + $0x18] sm:$0xf]
        %v4349 = vld [vmem:[%s2 + $0x1c] sm:$0xf]
        %v4350 = vld [vmem:[%s2 + $0x20] sm:$0xf]
        %v4351 = vld [vmem:[%s2 + $0x24] sm:$0xf]
        %v4352 = vld [vmem:[%s2 + $0x28] sm:$0xf]
        %v4353 = vld [vmem:[%s2 + $0x2c] sm:$0xf]
        %v4354 = vld [vmem:[%s2 + $0x30] sm:$0xf]
        %v4355 = vld [vmem:[%s2 + $0x34] sm:$0xf]
        %v4356 = vld [vmem:[%s2 + $0x38] sm:$0xf]
        %v4357 = vld [vmem:[%s2 + $0x3c] sm:$0xf]
        %s4358 = scalar_lea.vmem %s2, 64
        %v4359 = vld [vmem:[%s4358] sm:$0xf]
        %v4360 = vld [vmem:[%s4358 + $0x4] sm:$0xf]
        %v4361 = vld [vmem:[%s4358 + $0x8] sm:$0xf]
        %v4362 = vld [vmem:[%s4358 + $0xc] sm:$0xf]
        %v4363 = vld [vmem:[%s4358 + $0x10] sm:$0xf]
        %v4364 = vld [vmem:[%s4358 + $0x14] sm:$0xf]
        %v4365 = vld [vmem:[%s4358 + $0x18] sm:$0xf]
        %v4366 = vld [vmem:[%s4358 + $0x1c] sm:$0xf]
        %v4367 = vld [vmem:[%s4358 + $0x20] sm:$0xf]
        %v4368 = vld [vmem:[%s4358 + $0x24] sm:$0xf]
        %v4369 = vld [vmem:[%s4358 + $0x28] sm:$0xf]
        %v4370 = vld [vmem:[%s4358 + $0x2c] sm:$0xf]
        %v4371 = vld [vmem:[%s4358 + $0x30] sm:$0xf]
        %v4372 = vld [vmem:[%s4358 + $0x34] sm:$0xf]
        %v4373 = vld [vmem:[%s4358 + $0x38] sm:$0xf]
        %v4374 = vld [vmem:[%s4358 + $0x3c] sm:$0xf]
        %v4383 = vunpack.c.l.b16 %v4334
        %v4384 = vunpack.c.l.b16 %v4335
        %v4385 = vunpack.c.l.b16 %v4336
        %v4386 = vunpack.c.l.b16 %v4337
        %v4387 = vunpack.c.l.b16 %v4338
        %v4388 = vunpack.c.l.b16 %v4339
        %v4389 = vunpack.c.l.b16 %v4340
        %v4390 = vunpack.c.l.b16 %v4341
        %v4391 = vrot.slane %v4383, 1
        %vm4392 = vcmask 1041409
        %v4393 = vsel %vm4392, %v4384, %v4391
        %v4394 = vrot.slane %v4385, 7
        %vm4395 = vcmask 1042434
        %v4396 = vsel %vm4395, %v4394, %v4393
        %v4397 = vrot.slane %v4386, 6
        %vm4398 = vcmask 1043459
        %v4399 = vsel %vm4398, %v4397, %v4396
        %v4400 = vrot.slane %v4387, 5
        %vm4401 = vcmask 1044484
        %v4402 = vsel %vm4401, %v4400, %v4399
        %v4403 = vrot.slane %v4388, 4
        %vm4404 = vcmask 1045509
        %v4405 = vsel %vm4404, %v4403, %v4402
        %v4406 = vrot.slane %v4389, 3
        %vm4407 = vcmask 1046534
        %v4408 = vsel %vm4407, %v4406, %v4405
        %v4409 = vrot.slane %v4390, 2
        %vm4410 = vcmask 1047559
        %v4411 = vsel %vm4410, %v4409, %v4408
        %v4412 = vpack.c.b16 %v4411, %v4411
        %v4430 = vunpack.c.l.b16 %v4359
        %v4431 = vunpack.c.l.b16 %v4360
        %v4432 = vunpack.c.l.b16 %v4361
        %v4433 = vunpack.c.l.b16 %v4362
        %v4434 = vunpack.c.l.b16 %v4363
        %v4435 = vunpack.c.l.b16 %v4364
        %v4436 = vunpack.c.l.b16 %v4365
        %v4437 = vunpack.c.l.b16 %v4366
        %v4438 = vunpack.c.l.b16 %v4367
        %v4439 = vunpack.c.l.b16 %v4368
        %v4440 = vunpack.c.l.b16 %v4369
        %v4441 = vunpack.c.l.b16 %v4370
        %v4442 = vunpack.c.l.b16 %v4371
        %v4443 = vunpack.c.l.b16 %v4372
        %v4444 = vunpack.c.l.b16 %v4373
        %v4445 = vunpack.c.l.b16 %v4374
        %v4446 = vpack.c.b16 %v4431, %v4430
        %v4447 = vpack.c.b16 %v4433, %v4432
        %v4448 = vpack.c.b16 %v4435, %v4434
        %v4449 = vpack.c.b16 %v4437, %v4436
        %v4450 = vpack.c.b16 %v4439, %v4438
        %v4451 = vpack.c.b16 %v4441, %v4440
        %v4452 = vpack.c.b16 %v4443, %v4442
        %v4453 = vpack.c.b16 %v4445, %v4444
        %4462 = vmatprep.subr.bf16.mxu0 0
        %4463 = vmatpush1.bf16.msra.mxu0 %v4446
        %4464 = vmatprep.subr.bf16.mxu0 0
        %4465 = vmatpush1.bf16.msra.mxu0 %v4447
        %4466 = vmatprep.subr.bf16.mxu0 0
        %4467 = vmatpush1.bf16.msra.mxu0 %v4448
        %4468 = vmatprep.subr.bf16.mxu0 0
        %4469 = vmatpush1.bf16.msra.mxu0 %v4449
        %4470 = vmatprep.subr.bf16.mxu0 0
        %4471 = vmatpush1.bf16.msra.mxu0 %v4450
        %4472 = vmatprep.subr.bf16.mxu0 0
        %4473 = vmatpush1.bf16.msra.mxu0 %v4451
        %4474 = vmatprep.subr.bf16.mxu0 0
        %4475 = vmatpush1.bf16.msra.mxu0 %v4452
        %4476 = vmatprep.subr.bf16.mxu0 0
        %4477 = vmatpush1.bf16.msra.mxu0 %v4453
        %4478 = vmatprep.subr.bf16.mxu0 0
        %4479 = vmatpush1.bf16.msra.mxu0 0
        %4480 = vmatprep.subr.bf16.mxu0 0
        %4481 = vmatpush1.bf16.msra.mxu0 0
        %4482 = vmatprep.subr.bf16.mxu0 0
        %4483 = vmatpush1.bf16.msra.mxu0 0
        %4484 = vmatprep.subr.bf16.mxu0 0
        %4485 = vmatpush1.bf16.msra.mxu0 0
        %4486 = vmatprep.subr.bf16.mxu0 0
        %4487 = vmatpush1.bf16.msra.mxu0 0
        %4488 = vmatprep.subr.bf16.mxu0 0
        %4489 = vmatpush1.bf16.msra.mxu0 0
        %4490 = vmatprep.subr.bf16.mxu0 0
        %4491 = vmatpush1.bf16.msra.mxu0 0
        %4492 = vmatprep.subr.bf16.mxu0 0
        %4493 = vmatpush1.bf16.msra.mxu0 0
        %4494 = vmatprep.mubr.bf16.mxu0 0
        %4495 = vmatmul.mubr.bf16.gmra.mrb[0].mxu0 %v4412
        %v4496 = vpop.f32.mrb[0].mxu0
        %v4497 = vadd.f32 0.0, %v4496
        %v4498 = vpop.f32.mrb[0].mxu0
        %v4499 = vpop.f32.mrb[0].mxu0
        %v4500 = vpop.f32.mrb[0].mxu0
        %4501 = vdwg.mxu0
        %v4502 = vrot.slane %v4384, 7
        %v4503 = vsel %vm4392, %v4502, %v4383
        %v4504 = vrot.slane %v4385, 6
        %v4505 = vsel %vm4395, %v4504, %v4503
        %v4506 = vrot.slane %v4386, 5
        %v4507 = vsel %vm4398, %v4506, %v4505
        %v4508 = vrot.slane %v4387, 4
        %v4509 = vsel %vm4401, %v4508, %v4507
        %v4510 = vrot.slane %v4388, 3
        %v4511 = vsel %vm4404, %v4510, %v4509
        %v4512 = vrot.slane %v4389, 2
        %v4513 = vsel %vm4407, %v4512, %v4511
        %v4514 = vrot.slane %v4390, 1
        %v4515 = vsel %vm4410, %v4514, %v4513
        %v4516 = vpack.c.b16 %v4515, %v4515
        %v4534 = vunpack.c.l.b16 %v4342
        %v4535 = vunpack.c.l.b16 %v4343
        %v4536 = vunpack.c.l.b16 %v4344
        %v4537 = vunpack.c.l.b16 %v4345
        %v4538 = vunpack.c.l.b16 %v4346
        %v4539 = vunpack.c.l.b16 %v4347
        %v4540 = vunpack.c.l.b16 %v4348
        %v4541 = vunpack.c.l.b16 %v4349
        %v4542 = vunpack.c.l.b16 %v4350
        %v4543 = vunpack.c.l.b16 %v4351
        %v4544 = vunpack.c.l.b16 %v4352
        %v4545 = vunpack.c.l.b16 %v4353
        %v4546 = vunpack.c.l.b16 %v4354
        %v4547 = vunpack.c.l.b16 %v4355
        %v4548 = vunpack.c.l.b16 %v4356
        %v4549 = vunpack.c.l.b16 %v4357
        %v4550 = vpack.c.b16 %v4535, %v4534
        %v4551 = vpack.c.b16 %v4537, %v4536
        %v4552 = vpack.c.b16 %v4539, %v4538
        %v4553 = vpack.c.b16 %v4541, %v4540
        %v4554 = vpack.c.b16 %v4543, %v4542
        %v4555 = vpack.c.b16 %v4545, %v4544
        %v4556 = vpack.c.b16 %v4547, %v4546
        %v4557 = vpack.c.b16 %v4549, %v4548
        %4566 = vmatprep.subr.bf16.mxu0 0
        %4567 = vmatpush1.bf16.msra.mxu0 %v4550
        %4568 = vmatprep.subr.bf16.mxu0 0
        %4569 = vmatpush1.bf16.msra.mxu0 %v4551
        %4570 = vmatprep.subr.bf16.mxu0 0
        %4571 = vmatpush1.bf16.msra.mxu0 %v4552
        %4572 = vmatprep.subr.bf16.mxu0 0
        %4573 = vmatpush1.bf16.msra.mxu0 %v4553
        %4574 = vmatprep.subr.bf16.mxu0 0
        %4575 = vmatpush1.bf16.msra.mxu0 %v4554
        %4576 = vmatprep.subr.bf16.mxu0 0
        %4577 = vmatpush1.bf16.msra.mxu0 %v4555
        %4578 = vmatprep.subr.bf16.mxu0 0
        %4579 = vmatpush1.bf16.msra.mxu0 %v4556
        %4580 = vmatprep.subr.bf16.mxu0 0
        %4581 = vmatpush1.bf16.msra.mxu0 %v4557
        %4582 = vmatprep.subr.bf16.mxu0 0
        %4583 = vmatpush1.bf16.msra.mxu0 0
        %4584 = vmatprep.subr.bf16.mxu0 0
        %4585 = vmatpush1.bf16.msra.mxu0 0
        %4586 = vmatprep.subr.bf16.mxu0 0
        %4587 = vmatpush1.bf16.msra.mxu0 0
        %4588 = vmatprep.subr.bf16.mxu0 0
        %4589 = vmatpush1.bf16.msra.mxu0 0
        %4590 = vmatprep.subr.bf16.mxu0 0
        %4591 = vmatpush1.bf16.msra.mxu0 0
        %4592 = vmatprep.subr.bf16.mxu0 0
        %4593 = vmatpush1.bf16.msra.mxu0 0
        %4594 = vmatprep.subr.bf16.mxu0 0
        %4595 = vmatpush1.bf16.msra.mxu0 0
        %4596 = vmatprep.subr.bf16.mxu0 0
        %4597 = vmatpush1.bf16.msra.mxu0 0
        %4598 = vmatprep.mubr.bf16.mxu0 0
        %4599 = vmatmul.mubr.bf16.gmra.mrb[0].mxu0 %v4516
        %v4600 = vpop.f32.mrb[0].mxu0
        %v4601 = vadd.f32 %v4497, %v4600
        %v4602 = vpop.f32.mrb[0].mxu0
        %v4603 = vpop.f32.mrb[0].mxu0
        %v4604 = vpop.f32.mrb[0].mxu0
        %4605 = vdwg.mxu0
        %s4606 = scalar_lea.vmem %s2, 128
        %v4607 = vld [vmem:[%s4606] sm:$0xf]
        %v4608 = vld [vmem:[%s4606 + $0x4] sm:$0xf]
        %v4609 = vld [vmem:[%s4606 + $0x8] sm:$0xf]
        %v4610 = vld [vmem:[%s4606 + $0xc] sm:$0xf]
        %v4611 = vld [vmem:[%s4606 + $0x10] sm:$0xf]
        %v4612 = vld [vmem:[%s4606 + $0x14] sm:$0xf]
        %v4613 = vld [vmem:[%s4606 + $0x18] sm:$0xf]
        %v4614 = vld [vmem:[%s4606 + $0x1c] sm:$0xf]
        %v4615 = vld [vmem:[%s4606 + $0x20] sm:$0xf]
        %v4616 = vld [vmem:[%s4606 + $0x24] sm:$0xf]
        %v4617 = vld [vmem:[%s4606 + $0x28] sm:$0xf]
        %v4618 = vld [vmem:[%s4606 + $0x2c] sm:$0xf]
        %v4619 = vld [vmem:[%s4606 + $0x30] sm:$0xf]
        %v4620 = vld [vmem:[%s4606 + $0x34] sm:$0xf]
        %v4621 = vld [vmem:[%s4606 + $0x38] sm:$0xf]
        %v4622 = vld [vmem:[%s4606 + $0x3c] sm:$0xf]
        %v4623 = vrot.slane %v4383, 2
        %v4624 = vrot.slane %v4384, 1
        %v4625 = vsel %vm4392, %v4624, %v4623
        %v4626 = vsel %vm4395, %v4385, %v4625
        %v4627 = vrot.slane %v4386, 7
        %v4628 = vsel %vm4398, %v4627, %v4626
        %v4629 = vrot.slane %v4387, 6
        %v4630 = vsel %vm4401, %v4629, %v4628
        %v4631 = vrot.slane %v4388, 5
        %v4632 = vsel %vm4404, %v4631, %v4630
        %v4633 = vrot.slane %v4389, 4
        %v4634 = vsel %vm4407, %v4633, %v4632
        %v4635 = vrot.slane %v4390, 3
        %v4636 = vsel %vm4410, %v4635, %v4634
        %v4637 = vpack.c.b16 %v4636, %v4636
        %v4655 = vunpack.c.l.b16 %v4607
        %v4656 = vunpack.c.l.b16 %v4608
        %v4657 = vunpack.c.l.b16 %v4609
        %v4658 = vunpack.c.l.b16 %v4610
        %v4659 = vunpack.c.l.b16 %v4611
        %v4660 = vunpack.c.l.b16 %v4612
        %v4661 = vunpack.c.l.b16 %v4613
        %v4662 = vunpack.c.l.b16 %v4614
        %v4663 = vunpack.c.l.b16 %v4615
        %v4664 = vunpack.c.l.b16 %v4616
        %v4665 = vunpack.c.l.b16 %v4617
        %v4666 = vunpack.c.l.b16 %v4618
        %v4667 = vunpack.c.l.b16 %v4619
        %v4668 = vunpack.c.l.b16 %v4620
        %v4669 = vunpack.c.l.b16 %v4621
        %v4670 = vunpack.c.l.b16 %v4622
        %v4671 = vpack.c.b16 %v4656, %v4655
        %v4672 = vpack.c.b16 %v4658, %v4657
        %v4673 = vpack.c.b16 %v4660, %v4659
        %v4674 = vpack.c.b16 %v4662, %v4661
        %v4675 = vpack.c.b16 %v4664, %v4663
        %v4676 = vpack.c.b16 %v4666, %v4665
        %v4677 = vpack.c.b16 %v4668, %v4667
        %v4678 = vpack.c.b16 %v4670, %v4669
        %4687 = vmatprep.subr.bf16.mxu0 0
        %4688 = vmatpush1.bf16.msra.mxu0 %v4671
        %4689 = vmatprep.subr.bf16.mxu0 0
        %4690 = vmatpush1.bf16.msra.mxu0 %v4672
        %4691 = vmatprep.subr.bf16.mxu0 0
        %4692 = vmatpush1.bf16.msra.mxu0 %v4673
        %4693 = vmatprep.subr.bf16.mxu0 0
        %4694 = vmatpush1.bf16.msra.mxu0 %v4674
        %4695 = vmatprep.subr.bf16.mxu0 0
        %4696 = vmatpush1.bf16.msra.mxu0 %v4675
        %4697 = vmatprep.subr.bf16.mxu0 0
        %4698 = vmatpush1.bf16.msra.mxu0 %v4676
        %4699 = vmatprep.subr.bf16.mxu0 0
        %4700 = vmatpush1.bf16.msra.mxu0 %v4677
        %4701 = vmatprep.subr.bf16.mxu0 0
        %4702 = vmatpush1.bf16.msra.mxu0 %v4678
        %4703 = vmatprep.subr.bf16.mxu0 0
        %4704 = vmatpush1.bf16.msra.mxu0 0
        %4705 = vmatprep.subr.bf16.mxu0 0
        %4706 = vmatpush1.bf16.msra.mxu0 0
        %4707 = vmatprep.subr.bf16.mxu0 0
        %4708 = vmatpush1.bf16.msra.mxu0 0
        %4709 = vmatprep.subr.bf16.mxu0 0
        %4710 = vmatpush1.bf16.msra.mxu0 0
        %4711 = vmatprep.subr.bf16.mxu0 0
        %4712 = vmatpush1.bf16.msra.mxu0 0
        %4713 = vmatprep.subr.bf16.mxu0 0
        %4714 = vmatpush1.bf16.msra.mxu0 0
        %4715 = vmatprep.subr.bf16.mxu0 0
        %4716 = vmatpush1.bf16.msra.mxu0 0
        %4717 = vmatprep.subr.bf16.mxu0 0
        %4718 = vmatpush1.bf16.msra.mxu0 0
        %4719 = vmatprep.mubr.bf16.mxu0 0
        %4720 = vmatmul.mubr.bf16.gmra.mrb[0].mxu0 %v4637
        %v4721 = vpop.f32.mrb[0].mxu0
        %v4722 = vadd.f32 0.0, %v4721
        %v4723 = vpop.f32.mrb[0].mxu0
        %v4724 = vpop.f32.mrb[0].mxu0
        %v4725 = vpop.f32.mrb[0].mxu0
        %4726 = vdwg.mxu0
        %v4727 = vadd.f32 %v4601, %v4722
        %s4728 = scalar_lea.vmem %s2, 192
        %v4729 = vld [vmem:[%s4728] sm:$0xf]
        %v4730 = vld [vmem:[%s4728 + $0x4] sm:$0xf]
        %v4731 = vld [vmem:[%s4728 + $0x8] sm:$0xf]
        %v4732 = vld [vmem:[%s4728 + $0xc] sm:$0xf]
        %v4733 = vld [vmem:[%s4728 + $0x10] sm:$0xf]
        %v4734 = vld [vmem:[%s4728 + $0x14] sm:$0xf]
        %v4735 = vld [vmem:[%s4728 + $0x18] sm:$0xf]
        %v4736 = vld [vmem:[%s4728 + $0x1c] sm:$0xf]
        %v4737 = vld [vmem:[%s4728 + $0x20] sm:$0xf]
        %v4738 = vld [vmem:[%s4728 + $0x24] sm:$0xf]
        %v4739 = vld [vmem:[%s4728 + $0x28] sm:$0xf]
        %v4740 = vld [vmem:[%s4728 + $0x2c] sm:$0xf]
        %v4741 = vld [vmem:[%s4728 + $0x30] sm:$0xf]
        %v4742 = vld [vmem:[%s4728 + $0x34] sm:$0xf]
        %v4743 = vld [vmem:[%s4728 + $0x38] sm:$0xf]
        %v4744 = vld [vmem:[%s4728 + $0x3c] sm:$0xf]
        %v4745 = vrot.slane %v4383, 3
        %v4746 = vrot.slane %v4384, 2
        %v4747 = vsel %vm4392, %v4746, %v4745
        %v4748 = vrot.slane %v4385, 1
        %v4749 = vsel %vm4395, %v4748, %v4747
        %v4750 = vsel %vm4398, %v4386, %v4749
        %v4751 = vrot.slane %v4387, 7
        %v4752 = vsel %vm4401, %v4751, %v4750
        %v4753 = vrot.slane %v4388, 6
        %v4754 = vsel %vm4404, %v4753, %v4752
        %v4755 = vrot.slane %v4389, 5
        %v4756 = vsel %vm4407, %v4755, %v4754
        %v4757 = vrot.slane %v4390, 4
        %v4758 = vsel %vm4410, %v4757, %v4756
        %v4759 = vpack.c.b16 %v4758, %v4758
        %v4777 = vunpack.c.l.b16 %v4729
        %v4778 = vunpack.c.l.b16 %v4730
        %v4779 = vunpack.c.l.b16 %v4731
        %v4780 = vunpack.c.l.b16 %v4732
        %v4781 = vunpack.c.l.b16 %v4733
        %v4782 = vunpack.c.l.b16 %v4734
        %v4783 = vunpack.c.l.b16 %v4735
        %v4784 = vunpack.c.l.b16 %v4736
        %v4785 = vunpack.c.l.b16 %v4737
        %v4786 = vunpack.c.l.b16 %v4738
        %v4787 = vunpack.c.l.b16 %v4739
        %v4788 = vunpack.c.l.b16 %v4740
        %v4789 = vunpack.c.l.b16 %v4741
        %v4790 = vunpack.c.l.b16 %v4742
        %v4791 = vunpack.c.l.b16 %v4743
        %v4792 = vunpack.c.l.b16 %v4744
        %v4793 = vpack.c.b16 %v4778, %v4777
        %v4794 = vpack.c.b16 %v4780, %v4779
        %v4795 = vpack.c.b16 %v4782, %v4781
        %v4796 = vpack.c.b16 %v4784, %v4783
        %v4797 = vpack.c.b16 %v4786, %v4785
        %v4798 = vpack.c.b16 %v4788, %v4787
        %v4799 = vpack.c.b16 %v4790, %v4789
        %v4800 = vpack.c.b16 %v4792, %v4791
        %4809 = vmatprep.subr.bf16.mxu0 0
        %4810 = vmatpush1.bf16.msra.mxu0 %v4793
        %4811 = vmatprep.subr.bf16.mxu0 0
        %4812 = vmatpush1.bf16.msra.mxu0 %v4794
        %4813 = vmatprep.subr.bf16.mxu0 0
        %4814 = vmatpush1.bf16.msra.mxu0 %v4795
        %4815 = vmatprep.subr.bf16.mxu0 0
        %4816 = vmatpush1.bf16.msra.mxu0 %v4796
        %4817 = vmatprep.subr.bf16.mxu0 0
        %4818 = vmatpush1.bf16.msra.mxu0 %v4797
        %4819 = vmatprep.subr.bf16.mxu0 0
        %4820 = vmatpush1.bf16.msra.mxu0 %v4798
        %4821 = vmatprep.subr.bf16.mxu0 0
        %4822 = vmatpush1.bf16.msra.mxu0 %v4799
        %4823 = vmatprep.subr.bf16.mxu0 0
        %4824 = vmatpush1.bf16.msra.mxu0 %v4800
        %4825 = vmatprep.subr.bf16.mxu0 0
        %4826 = vmatpush1.bf16.msra.mxu0 0
        %4827 = vmatprep.subr.bf16.mxu0 0
        %4828 = vmatpush1.bf16.msra.mxu0 0
        %4829 = vmatprep.subr.bf16.mxu0 0
        %4830 = vmatpush1.bf16.msra.mxu0 0
        %4831 = vmatprep.subr.bf16.mxu0 0
        %4832 = vmatpush1.bf16.msra.mxu0 0
        %4833 = vmatprep.subr.bf16.mxu0 0
        %4834 = vmatpush1.bf16.msra.mxu0 0
        %4835 = vmatprep.subr.bf16.mxu0 0
        %4836 = vmatpush1.bf16.msra.mxu0 0
        %4837 = vmatprep.subr.bf16.mxu0 0
        %4838 = vmatpush1.bf16.msra.mxu0 0
        %4839 = vmatprep.subr.bf16.mxu0 0
        %4840 = vmatpush1.bf16.msra.mxu0 0
        %4841 = vmatprep.mubr.bf16.mxu0 0
        %4842 = vmatmul.mubr.bf16.gmra.mrb[0].mxu0 %v4759
        %v4843 = vpop.f32.mrb[0].mxu0
        %v4844 = vadd.f32 0.0, %v4843
        %v4845 = vpop.f32.mrb[0].mxu0
        %v4846 = vpop.f32.mrb[0].mxu0
        %v4847 = vpop.f32.mrb[0].mxu0
        %4848 = vdwg.mxu0
        %v4849 = vadd.f32 %v4727, %v4844
        %s4850 = scalar_lea.vmem %s2, 256
        %v4851 = vld [vmem:[%s4850] sm:$0xf]
        %v4852 = vld [vmem:[%s4850 + $0x4] sm:$0xf]
        %v4853 = vld [vmem:[%s4850 + $0x8] sm:$0xf]
        %v4854 = vld [vmem:[%s4850 + $0xc] sm:$0xf]
        %v4855 = vld [vmem:[%s4850 + $0x10] sm:$0xf]
        %v4856 = vld [vmem:[%s4850 + $0x14] sm:$0xf]
        %v4857 = vld [vmem:[%s4850 + $0x18] sm:$0xf]
        %v4858 = vld [vmem:[%s4850 + $0x1c] sm:$0xf]
        %v4859 = vld [vmem:[%s4850 + $0x20] sm:$0xf]
        %v4860 = vld [vmem:[%s4850 + $0x24] sm:$0xf]
        %v4861 = vld [vmem:[%s4850 + $0x28] sm:$0xf]
        %v4862 = vld [vmem:[%s4850 + $0x2c] sm:$0xf]
        %v4863 = vld [vmem:[%s4850 + $0x30] sm:$0xf]
        %v4864 = vld [vmem:[%s4850 + $0x34] sm:$0xf]
        %v4865 = vld [vmem:[%s4850 + $0x38] sm:$0xf]
        %v4866 = vld [vmem:[%s4850 + $0x3c] sm:$0xf]
        %v4867 = vrot.slane %v4383, 4
        %v4868 = vrot.slane %v4384, 3
        %v4869 = vsel %vm4392, %v4868, %v4867
        %v4870 = vrot.slane %v4385, 2
        %v4871 = vsel %vm4395, %v4870, %v4869
        %v4872 = vrot.slane %v4386, 1
        %v4873 = vsel %vm4398, %v4872, %v4871
        %v4874 = vsel %vm4401, %v4387, %v4873
        %v4875 = vrot.slane %v4388, 7
        %v4876 = vsel %vm4404, %v4875, %v4874
        %v4877 = vrot.slane %v4389, 6
        %v4878 = vsel %vm4407, %v4877, %v4876
        %v4879 = vrot.slane %v4390, 5
        %v4880 = vsel %vm4410, %v4879, %v4878
        %v4881 = vpack.c.b16 %v4880, %v4880
        %v4899 = vunpack.c.l.b16 %v4851
        %v4900 = vunpack.c.l.b16 %v4852
        %v4901 = vunpack.c.l.b16 %v4853
        %v4902 = vunpack.c.l.b16 %v4854
        %v4903 = vunpack.c.l.b16 %v4855
        %v4904 = vunpack.c.l.b16 %v4856
        %v4905 = vunpack.c.l.b16 %v4857
        %v4906 = vunpack.c.l.b16 %v4858
        %v4907 = vunpack.c.l.b16 %v4859
        %v4908 = vunpack.c.l.b16 %v4860
        %v4909 = vunpack.c.l.b16 %v4861
        %v4910 = vunpack.c.l.b16 %v4862
        %v4911 = vunpack.c.l.b16 %v4863
        %v4912 = vunpack.c.l.b16 %v4864
        %v4913 = vunpack.c.l.b16 %v4865
        %v4914 = vunpack.c.l.b16 %v4866
        %v4915 = vpack.c.b16 %v4900, %v4899
        %v4916 = vpack.c.b16 %v4902, %v4901
        %v4917 = vpack.c.b16 %v4904, %v4903
        %v4918 = vpack.c.b16 %v4906, %v4905
        %v4919 = vpack.c.b16 %v4908, %v4907
        %v4920 = vpack.c.b16 %v4910, %v4909
        %v4921 = vpack.c.b16 %v4912, %v4911
        %v4922 = vpack.c.b16 %v4914, %v4913
        %4931 = vmatprep.subr.bf16.mxu0 0
        %4932 = vmatpush1.bf16.msra.mxu0 %v4915
        %4933 = vmatprep.subr.bf16.mxu0 0
        %4934 = vmatpush1.bf16.msra.mxu0 %v4916
        %4935 = vmatprep.subr.bf16.mxu0 0
        %4936 = vmatpush1.bf16.msra.mxu0 %v4917
        %4937 = vmatprep.subr.bf16.mxu0 0
        %4938 = vmatpush1.bf16.msra.mxu0 %v4918
        %4939 = vmatprep.subr.bf16.mxu0 0
        %4940 = vmatpush1.bf16.msra.mxu0 %v4919
        %4941 = vmatprep.subr.bf16.mxu0 0
        %4942 = vmatpush1.bf16.msra.mxu0 %v4920
        %4943 = vmatprep.subr.bf16.mxu0 0
        %4944 = vmatpush1.bf16.msra.mxu0 %v4921
        %4945 = vmatprep.subr.bf16.mxu0 0
        %4946 = vmatpush1.bf16.msra.mxu0 %v4922
        %4947 = vmatprep.subr.bf16.mxu0 0
        %4948 = vmatpush1.bf16.msra.mxu0 0
        %4949 = vmatprep.subr.bf16.mxu0 0
        %4950 = vmatpush1.bf16.msra.mxu0 0
        %4951 = vmatprep.subr.bf16.mxu0 0
        %4952 = vmatpush1.bf16.msra.mxu0 0
        %4953 = vmatprep.subr.bf16.mxu0 0
        %4954 = vmatpush1.bf16.msra.mxu0 0
        %4955 = vmatprep.subr.bf16.mxu0 0
        %4956 = vmatpush1.bf16.msra.mxu0 0
        %4957 = vmatprep.subr.bf16.mxu0 0
        %4958 = vmatpush1.bf16.msra.mxu0 0
        %4959 = vmatprep.subr.bf16.mxu0 0
        %4960 = vmatpush1.bf16.msra.mxu0 0
        %4961 = vmatprep.subr.bf16.mxu0 0
        %4962 = vmatpush1.bf16.msra.mxu0 0
        %4963 = vmatprep.mubr.bf16.mxu0 0
        %4964 = vmatmul.mubr.bf16.gmra.mrb[0].mxu0 %v4881
        %v4965 = vpop.f32.mrb[0].mxu0
        %v4966 = vadd.f32 0.0, %v4965
        %v4967 = vpop.f32.mrb[0].mxu0
        %v4968 = vpop.f32.mrb[0].mxu0
        %v4969 = vpop.f32.mrb[0].mxu0
        %4970 = vdwg.mxu0
        %v4971 = vadd.f32 %v4849, %v4966
        %s4972 = scalar_lea.vmem %s2, 320
        %v4973 = vld [vmem:[%s4972] sm:$0xf]
        %v4974 = vld [vmem:[%s4972 + $0x4] sm:$0xf]
        %v4975 = vld [vmem:[%s4972 + $0x8] sm:$0xf]
        %v4976 = vld [vmem:[%s4972 + $0xc] sm:$0xf]
        %v4977 = vld [vmem:[%s4972 + $0x10] sm:$0xf]
        %v4978 = vld [vmem:[%s4972 + $0x14] sm:$0xf]
        %v4979 = vld [vmem:[%s4972 + $0x18] sm:$0xf]
        %v4980 = vld [vmem:[%s4972 + $0x1c] sm:$0xf]
        %v4981 = vld [vmem:[%s4972 + $0x20] sm:$0xf]
        %v4982 = vld [vmem:[%s4972 + $0x24] sm:$0xf]
        %v4983 = vld [vmem:[%s4972 + $0x28] sm:$0xf]
        %v4984 = vld [vmem:[%s4972 + $0x2c] sm:$0xf]
        %v4985 = vld [vmem:[%s4972 + $0x30] sm:$0xf]
        %v4986 = vld [vmem:[%s4972 + $0x34] sm:$0xf]
        %v4987 = vld [vmem:[%s4972 + $0x38] sm:$0xf]
        %v4988 = vld [vmem:[%s4972 + $0x3c] sm:$0xf]
        %v4989 = vrot.slane %v4383, 5
        %v4990 = vrot.slane %v4384, 4
        %v4991 = vsel %vm4392, %v4990, %v4989
        %v4992 = vrot.slane %v4385, 3
        %v4993 = vsel %vm4395, %v4992, %v4991
        %v4994 = vrot.slane %v4386, 2
        %v4995 = vsel %vm4398, %v4994, %v4993
        %v4996 = vrot.slane %v4387, 1
        %v4997 = vsel %vm4401, %v4996, %v4995
        %v4998 = vsel %vm4404, %v4388, %v4997
        %v4999 = vrot.slane %v4389, 7
        %v5000 = vsel %vm4407, %v4999, %v4998
        %v5001 = vrot.slane %v4390, 6
        %v5002 = vsel %vm4410, %v5001, %v5000
        %v5003 = vpack.c.b16 %v5002, %v5002
        %v5021 = vunpack.c.l.b16 %v4973
        %v5022 = vunpack.c.l.b16 %v4974
        %v5023 = vunpack.c.l.b16 %v4975
        %v5024 = vunpack.c.l.b16 %v4976
        %v5025 = vunpack.c.l.b16 %v4977
        %v5026 = vunpack.c.l.b16 %v4978
        %v5027 = vunpack.c.l.b16 %v4979
        %v5028 = vunpack.c.l.b16 %v4980
        %v5029 = vunpack.c.l.b16 %v4981
        %v5030 = vunpack.c.l.b16 %v4982
        %v5031 = vunpack.c.l.b16 %v4983
        %v5032 = vunpack.c.l.b16 %v4984
        %v5033 = vunpack.c.l.b16 %v4985
        %v5034 = vunpack.c.l.b16 %v4986
        %v5035 = vunpack.c.l.b16 %v4987
        %v5036 = vunpack.c.l.b16 %v4988
        %v5037 = vpack.c.b16 %v5022, %v5021
        %v5038 = vpack.c.b16 %v5024, %v5023
        %v5039 = vpack.c.b16 %v5026, %v5025
        %v5040 = vpack.c.b16 %v5028, %v5027
        %v5041 = vpack.c.b16 %v5030, %v5029
        %v5042 = vpack.c.b16 %v5032, %v5031
        %v5043 = vpack.c.b16 %v5034, %v5033
        %v5044 = vpack.c.b16 %v5036, %v5035
        %5053 = vmatprep.subr.bf16.mxu0 0
        %5054 = vmatpush1.bf16.msra.mxu0 %v5037
        %5055 = vmatprep.subr.bf16.mxu0 0
        %5056 = vmatpush1.bf16.msra.mxu0 %v5038
        %5057 = vmatprep.subr.bf16.mxu0 0
        %5058 = vmatpush1.bf16.msra.mxu0 %v5039
        %5059 = vmatprep.subr.bf16.mxu0 0
        %5060 = vmatpush1.bf16.msra.mxu0 %v5040
        %5061 = vmatprep.subr.bf16.mxu0 0
        %5062 = vmatpush1.bf16.msra.mxu0 %v5041
        %5063 = vmatprep.subr.bf16.mxu0 0
        %5064 = vmatpush1.bf16.msra.mxu0 %v5042
        %5065 = vmatprep.subr.bf16.mxu0 0
        %5066 = vmatpush1.bf16.msra.mxu0 %v5043
        %5067 = vmatprep.subr.bf16.mxu0 0
        %5068 = vmatpush1.bf16.msra.mxu0 %v5044
        %5069 = vmatprep.subr.bf16.mxu0 0
        %5070 = vmatpush1.bf16.msra.mxu0 0
        %5071 = vmatprep.subr.bf16.mxu0 0
        %5072 = vmatpush1.bf16.msra.mxu0 0
        %5073 = vmatprep.subr.bf16.mxu0 0
        %5074 = vmatpush1.bf16.msra.mxu0 0
        %5075 = vmatprep.subr.bf16.mxu0 0
        %5076 = vmatpush1.bf16.msra.mxu0 0
        %5077 = vmatprep.subr.bf16.mxu0 0
        %5078 = vmatpush1.bf16.msra.mxu0 0
        %5079 = vmatprep.subr.bf16.mxu0 0
        %5080 = vmatpush1.bf16.msra.mxu0 0
        %5081 = vmatprep.subr.bf16.mxu0 0
        %5082 = vmatpush1.bf16.msra.mxu0 0
        %5083 = vmatprep.subr.bf16.mxu0 0
        %5084 = vmatpush1.bf16.msra.mxu0 0
        %5085 = vmatprep.mubr.bf16.mxu0 0
        %5086 = vmatmul.mubr.bf16.gmra.mrb[0].mxu0 %v5003
        %v5087 = vpop.f32.mrb[0].mxu0
        %v5088 = vadd.f32 0.0, %v5087
        %v5089 = vpop.f32.mrb[0].mxu0
        %v5090 = vpop.f32.mrb[0].mxu0
        %v5091 = vpop.f32.mrb[0].mxu0
        %5092 = vdwg.mxu0
        %v5093 = vadd.f32 %v4971, %v5088
        %s5094 = scalar_lea.vmem %s2, 384
        %v5095 = vld [vmem:[%s5094] sm:$0xf]
        %v5096 = vld [vmem:[%s5094 + $0x4] sm:$0xf]
        %v5097 = vld [vmem:[%s5094 + $0x8] sm:$0xf]
        %v5098 = vld [vmem:[%s5094 + $0xc] sm:$0xf]
        %v5099 = vld [vmem:[%s5094 + $0x10] sm:$0xf]
        %v5100 = vld [vmem:[%s5094 + $0x14] sm:$0xf]
        %v5101 = vld [vmem:[%s5094 + $0x18] sm:$0xf]
        %v5102 = vld [vmem:[%s5094 + $0x1c] sm:$0xf]
        %v5103 = vld [vmem:[%s5094 + $0x20] sm:$0xf]
        %v5104 = vld [vmem:[%s5094 + $0x24] sm:$0xf]
        %v5105 = vld [vmem:[%s5094 + $0x28] sm:$0xf]
        %v5106 = vld [vmem:[%s5094 + $0x2c] sm:$0xf]
        %v5107 = vld [vmem:[%s5094 + $0x30] sm:$0xf]
        %v5108 = vld [vmem:[%s5094 + $0x34] sm:$0xf]
        %v5109 = vld [vmem:[%s5094 + $0x38] sm:$0xf]
        %v5110 = vld [vmem:[%s5094 + $0x3c] sm:$0xf]
        %v5111 = vrot.slane %v4383, 6
        %v5112 = vrot.slane %v4384, 5
        %v5113 = vsel %vm4392, %v5112, %v5111
        %v5114 = vrot.slane %v4385, 4
        %v5115 = vsel %vm4395, %v5114, %v5113
        %v5116 = vrot.slane %v4386, 3
        %v5117 = vsel %vm4398, %v5116, %v5115
        %v5118 = vrot.slane %v4387, 2
        %v5119 = vsel %vm4401, %v5118, %v5117
        %v5120 = vrot.slane %v4388, 1
        %v5121 = vsel %vm4404, %v5120, %v5119
        %v5122 = vsel %vm4407, %v4389, %v5121
        %v5123 = vrot.slane %v4390, 7
        %v5124 = vsel %vm4410, %v5123, %v5122
        %v5125 = vpack.c.b16 %v5124, %v5124
        %v5143 = vunpack.c.l.b16 %v5095
        %v5144 = vunpack.c.l.b16 %v5096
        %v5145 = vunpack.c.l.b16 %v5097
        %v5146 = vunpack.c.l.b16 %v5098
        %v5147 = vunpack.c.l.b16 %v5099
        %v5148 = vunpack.c.l.b16 %v5100
        %v5149 = vunpack.c.l.b16 %v5101
        %v5150 = vunpack.c.l.b16 %v5102
        %v5151 = vunpack.c.l.b16 %v5103
        %v5152 = vunpack.c.l.b16 %v5104
        %v5153 = vunpack.c.l.b16 %v5105
        %v5154 = vunpack.c.l.b16 %v5106
        %v5155 = vunpack.c.l.b16 %v5107
        %v5156 = vunpack.c.l.b16 %v5108
        %v5157 = vunpack.c.l.b16 %v5109
        %v5158 = vunpack.c.l.b16 %v5110
        %v5159 = vpack.c.b16 %v5144, %v5143
        %v5160 = vpack.c.b16 %v5146, %v5145
        %v5161 = vpack.c.b16 %v5148, %v5147
        %v5162 = vpack.c.b16 %v5150, %v5149
        %v5163 = vpack.c.b16 %v5152, %v5151
        %v5164 = vpack.c.b16 %v5154, %v5153
        %v5165 = vpack.c.b16 %v5156, %v5155
        %v5166 = vpack.c.b16 %v5158, %v5157
        %5175 = vmatprep.subr.bf16.mxu0 0
        %5176 = vmatpush1.bf16.msra.mxu0 %v5159
        %5177 = vmatprep.subr.bf16.mxu0 0
        %5178 = vmatpush1.bf16.msra.mxu0 %v5160
        %5179 = vmatprep.subr.bf16.mxu0 0
        %5180 = vmatpush1.bf16.msra.mxu0 %v5161
        %5181 = vmatprep.subr.bf16.mxu0 0
        %5182 = vmatpush1.bf16.msra.mxu0 %v5162
        %5183 = vmatprep.subr.bf16.mxu0 0
        %5184 = vmatpush1.bf16.msra.mxu0 %v5163
        %5185 = vmatprep.subr.bf16.mxu0 0
        %5186 = vmatpush1.bf16.msra.mxu0 %v5164
        %5187 = vmatprep.subr.bf16.mxu0 0
        %5188 = vmatpush1.bf16.msra.mxu0 %v5165
        %5189 = vmatprep.subr.bf16.mxu0 0
        %5190 = vmatpush1.bf16.msra.mxu0 %v5166
        %5191 = vmatprep.subr.bf16.mxu0 0
        %5192 = vmatpush1.bf16.msra.mxu0 0
        %5193 = vmatprep.subr.bf16.mxu0 0
        %5194 = vmatpush1.bf16.msra.mxu0 0
        %5195 = vmatprep.subr.bf16.mxu0 0
        %5196 = vmatpush1.bf16.msra.mxu0 0
        %5197 = vmatprep.subr.bf16.mxu0 0
        %5198 = vmatpush1.bf16.msra.mxu0 0
        %5199 = vmatprep.subr.bf16.mxu0 0
        %5200 = vmatpush1.bf16.msra.mxu0 0
        %5201 = vmatprep.subr.bf16.mxu0 0
        %5202 = vmatpush1.bf16.msra.mxu0 0
        %5203 = vmatprep.subr.bf16.mxu0 0
        %5204 = vmatpush1.bf16.msra.mxu0 0
        %5205 = vmatprep.subr.bf16.mxu0 0
        %5206 = vmatpush1.bf16.msra.mxu0 0
        %5207 = vmatprep.mubr.bf16.mxu0 0
        %5208 = vmatmul.mubr.bf16.gmra.mrb[0].mxu0 %v5125
        %v5209 = vpop.f32.mrb[0].mxu0
        %v5210 = vadd.f32 0.0, %v5209
        %v5211 = vpop.f32.mrb[0].mxu0
        %v5212 = vpop.f32.mrb[0].mxu0
        %v5213 = vpop.f32.mrb[0].mxu0
        %5214 = vdwg.mxu0
        %v5215 = vadd.f32 %v5093, %v5210
        %s5216 = scalar_lea.vmem %s2, 448
        %v5217 = vld [vmem:[%s5216] sm:$0xf]
        %v5218 = vld [vmem:[%s5216 + $0x4] sm:$0xf]
        %v5219 = vld [vmem:[%s5216 + $0x8] sm:$0xf]
        %v5220 = vld [vmem:[%s5216 + $0xc] sm:$0xf]
        %v5221 = vld [vmem:[%s5216 + $0x10] sm:$0xf]
        %v5222 = vld [vmem:[%s5216 + $0x14] sm:$0xf]
        %v5223 = vld [vmem:[%s5216 + $0x18] sm:$0xf]
        %v5224 = vld [vmem:[%s5216 + $0x1c] sm:$0xf]
        %v5225 = vld [vmem:[%s5216 + $0x20] sm:$0xf]
        %v5226 = vld [vmem:[%s5216 + $0x24] sm:$0xf]
        %v5227 = vld [vmem:[%s5216 + $0x28] sm:$0xf]
        %v5228 = vld [vmem:[%s5216 + $0x2c] sm:$0xf]
        %v5229 = vld [vmem:[%s5216 + $0x30] sm:$0xf]
        %v5230 = vld [vmem:[%s5216 + $0x34] sm:$0xf]
        %v5231 = vld [vmem:[%s5216 + $0x38] sm:$0xf]
        %v5232 = vld [vmem:[%s5216 + $0x3c] sm:$0xf]
        %v5233 = vrot.slane %v4383, 7
        %v5234 = vrot.slane %v4384, 6
        %v5235 = vsel %vm4392, %v5234, %v5233
        %v5236 = vrot.slane %v4385, 5
        %v5237 = vsel %vm4395, %v5236, %v5235
        %v5238 = vrot.slane %v4386, 4
        %v5239 = vsel %vm4398, %v5238, %v5237
        %v5240 = vrot.slane %v4387, 3
        %v5241 = vsel %vm4401, %v5240, %v5239
        %v5242 = vrot.slane %v4388, 2
        %v5243 = vsel %vm4404, %v5242, %v5241
        %v5244 = vrot.slane %v4389, 1
        %v5245 = vsel %vm4407, %v5244, %v5243
        %v5246 = vsel %vm4410, %v4390, %v5245
        %v5247 = vpack.c.b16 %v5246, %v5246
        %v5265 = vunpack.c.l.b16 %v5217
        %v5266 = vunpack.c.l.b16 %v5218
        %v5267 = vunpack.c.l.b16 %v5219
        %v5268 = vunpack.c.l.b16 %v5220
        %v5269 = vunpack.c.l.b16 %v5221
        %v5270 = vunpack.c.l.b16 %v5222
        %v5271 = vunpack.c.l.b16 %v5223
        %v5272 = vunpack.c.l.b16 %v5224
        %v5273 = vunpack.c.l.b16 %v5225
        %v5274 = vunpack.c.l.b16 %v5226
        %v5275 = vunpack.c.l.b16 %v5227
        %v5276 = vunpack.c.l.b16 %v5228
        %v5277 = vunpack.c.l.b16 %v5229
        %v5278 = vunpack.c.l.b16 %v5230
        %v5279 = vunpack.c.l.b16 %v5231
        %v5280 = vunpack.c.l.b16 %v5232
        %v5281 = vpack.c.b16 %v5266, %v5265
        %v5282 = vpack.c.b16 %v5268, %v5267
        %v5283 = vpack.c.b16 %v5270, %v5269
        %v5284 = vpack.c.b16 %v5272, %v5271
        %v5285 = vpack.c.b16 %v5274, %v5273
        %v5286 = vpack.c.b16 %v5276, %v5275
        %v5287 = vpack.c.b16 %v5278, %v5277
        %v5288 = vpack.c.b16 %v5280, %v5279
        %5297 = vmatprep.subr.bf16.mxu0 0
        %5298 = vmatpush1.bf16.msra.mxu0 %v5281
        %5299 = vmatprep.subr.bf16.mxu0 0
        %5300 = vmatpush1.bf16.msra.mxu0 %v5282
        %5301 = vmatprep.subr.bf16.mxu0 0
        %5302 = vmatpush1.bf16.msra.mxu0 %v5283
        %5303 = vmatprep.subr.bf16.mxu0 0
        %5304 = vmatpush1.bf16.msra.mxu0 %v5284
        %5305 = vmatprep.subr.bf16.mxu0 0
        %5306 = vmatpush1.bf16.msra.mxu0 %v5285
        %5307 = vmatprep.subr.bf16.mxu0 0
        %5308 = vmatpush1.bf16.msra.mxu0 %v5286
        %5309 = vmatprep.subr.bf16.mxu0 0
        %5310 = vmatpush1.bf16.msra.mxu0 %v5287
        %5311 = vmatprep.subr.bf16.mxu0 0
        %5312 = vmatpush1.bf16.msra.mxu0 %v5288
        %5313 = vmatprep.subr.bf16.mxu0 0
        %5314 = vmatpush1.bf16.msra.mxu0 0
        %5315 = vmatprep.subr.bf16.mxu0 0
        %5316 = vmatpush1.bf16.msra.mxu0 0
        %5317 = vmatprep.subr.bf16.mxu0 0
        %5318 = vmatpush1.bf16.msra.mxu0 0
        %5319 = vmatprep.subr.bf16.mxu0 0
        %5320 = vmatpush1.bf16.msra.mxu0 0
        %5321 = vmatprep.subr.bf16.mxu0 0
        %5322 = vmatpush1.bf16.msra.mxu0 0
        %5323 = vmatprep.subr.bf16.mxu0 0
        %5324 = vmatpush1.bf16.msra.mxu0 0
        %5325 = vmatprep.subr.bf16.mxu0 0
        %5326 = vmatpush1.bf16.msra.mxu0 0
        %5327 = vmatprep.subr.bf16.mxu0 0
        %5328 = vmatpush1.bf16.msra.mxu0 0
        %5329 = vmatprep.mubr.bf16.mxu0 0
        %5330 = vmatmul.mubr.bf16.gmra.mrb[0].mxu0 %v5247
        %v5331 = vpop.f32.mrb[0].mxu0
        %v5332 = vadd.f32 0.0, %v5331
        %v5333 = vpop.f32.mrb[0].mxu0
        %v5334 = vpop.f32.mrb[0].mxu0
        %v5335 = vpop.f32.mrb[0].mxu0
        %5336 = vdwg.mxu0
        %v5337 = vadd.f32 %v5215, %v5332
        %v5338 = vld [vmem:[%s3] sm:$0x1]
        %v5340 = vlaneseq
        %v5341 = vshrl.u32 %v5340, 7
        %v5342 = vsub.s32 0, %v5341
        %v5343 = vrot.slane %v5338, %v5342
        %v5345 = vadd.f32 %v5337, %v5343
        %v5346 = vmax.f32 %v5345, 0.0
        %v5347 = vld [vmem:[%s4] sm:$0x1]
        %v5349 = vlaneseq
        %v5350 = vshrl.u32 %v5349, 7
        %v5351 = vsub.s32 0, %v5350
        %v5352 = vrot.slane %v5347, %v5351
        %v5354 = vmul.f32 %v5346, %v5352
        %vm5355 = vcmask 523264
        %v5356 = vsel %vm5355, %v5354, 0.0
        %5357 = vadd.xlane.f32.xlu0 %v5356
        %v5358 = vpop.xlane.xlu0 %5357
        %v5359 = vld [vmem:[#allocation2] sm:$0x1]
        %v5361 = vlaneseq
        %v5362 = vshrl.u32 %v5361, 7
        %v5363 = vsub.s32 0, %v5362
        %v5364 = vrot.slane %v5359, %v5363
        %v5366 = vadd.f32 %v5358, %v5364
        %vm5367 = vcmask 7168
        %5368 = vst.msk [vmem:[%s268] sm:$0xff] %vm5367, %v5366
        %p5369 = scmp.lt.s32.totalorder %s20, 1
        %s5370 = scalar_select %p5369, %s20, 1
        %s5371 = smul.addr %s5370, 8
        %s5372 = scalar_lea.vmem %s6, %s5371
        // Predicated region
        $region49: #{tpu_custom_call.1} parent=43 // pred_check
          %p5373 = pneg %p169
        $region50: #{tpu_custom_call.1} parent=43 // pred_check_branch
          %5375 = sbr.rel (%p5373) target = $region52
        $region51: #{tpu_custom_call.1} parent=43 // pred_region
          _
        $region52: #{tpu_custom_call.1} parent=43 // pred_fallthru
          _
      $region44: #{tpu_custom_call.1} parent=5 // pred_fallthru
        _
      %p5376 = scmp.le.s32.totalorder 2, %s15
      // Predicated region
      $region53: #{tpu_custom_call.1} parent=5 // pred_check
        %p5377 = pneg %p5376
      $region54: #{tpu_custom_call.1} parent=5 // pred_check_branch
        %5379 = sbr.rel (%p5377) target = $region56
      $region55: #{tpu_custom_call.1} parent=5 // pred_region
        %s5380 = ssub.s32 %s15, 2
        // Predicated region
        $region57: #{tpu_custom_call.1} parent=55 // pred_check
          %p5381 = pneg %p175
        $region58: #{tpu_custom_call.1} parent=55 // pred_check_branch
          %5383 = sbr.rel (%p5381) target = $region60
        $region59: #{tpu_custom_call.1} parent=55 // pred_region
          %p5384 = scmp.lt.s32.totalorder %s21, 1
          %s5385 = scalar_select %p5384, %s21, 1
          %s5386 = smul.addr %s5385, 8
          %s5387 = scalar_lea.vmem %s6, %s5386
        $region60: #{tpu_custom_call.1} parent=55 // pred_fallthru
          _
      $region56: #{tpu_custom_call.1} parent=5 // pred_fallthru
        _
    $region6: #{tpu_custom_call.1} parent=1 // loop_footer
      %s19 = sadd.s32 1, %s15
    $region7: #{tpu_custom_call.1} parent=1 // loop_footer_branch
      %14 = sbr.rel target = $region3
    $region8: #{tpu_custom_call.1} parent=1 // loop_exit
      _
    %5388 = vsyncpa [#allocation4], 1
    %s5389 = scalar_lea.sflag [#allocation4], 1
    %5390 = vsyncpa %s5389, 1

</llo_original>
